<compile_context>
chip_gen: v6e
topology: v6e:2x2x1
jax: 0.10.0
libtpu: 0.0.40
codegen_flags: <defaults>
</compile_context>

<pallas_src>
import functools

import jax
import jax.numpy as jnp
from jax import lax
from jax.experimental import pallas as pl
from jax.experimental.pallas import tpu as pltpu


def _round_up(x, m):
    return ((x + m - 1) // m) * m


# -----------------------------------------------------------------------------
# Fused depthwise + pointwise kernel (one batch element per grid step)
# -----------------------------------------------------------------------------
def _fused_dwconv3d_kernel(x_ref, mask_ref, wf_ref, beff_ref, o_ref,
                           xe_ref, xcol_ref, *, H, W, K, p, m_lo_pad):
    # x_ref:    (C, S)          flattened input planes, S = D*H*W on the lane axis
    # mask_ref: (K^3, S)        precomputed 0/1 edge masks, one row per tap
    # wf_ref:   (Co, CKpad)     fused dw*pw weights (zero-padded contraction dim)
    # beff_ref: (Co, 1)         folded bias (b_pw + W_pw @ b_dw)
    # o_ref:    (Co, S)         lane-dense output slab
    # xe_ref:   (C, xe_width)   zero-margined, lane-aligned staging scratch
    # xcol_ref: (CKpad, S)      im2col slab consumed by the MXU matmul
    C, S = x_ref.shape
    HW = H * W
    K3 = K * K * K
    CK = K3 * C
    CK_pad = xcol_ref.shape[0]
    xe_width = xe_ref.shape[1]

    # Zero only the two margins (<= a couple of vregs). Done every step (not under
    # pl.when(program_id==0)) so a megacore-sharded "parallel" grid with per-core
    # scratch still sees zeroed margins.
    if m_lo_pad > 0:
        xe_ref[:, :m_lo_pad] = jnp.zeros((C, m_lo_pad), jnp.float32)
    hi_width = xe_width - m_lo_pad - S
    if hi_width > 0:
        xe_ref[:, m_lo_pad + S:] = jnp.zeros((C, hi_width), jnp.float32)
    # Zero the contraction-dim padding rows of the im2col slab (guards against NaN
    # garbage in uninitialized VMEM on the first step).
    if CK_pad > CK:
        xcol_ref[CK:, :] = jnp.zeros((CK_pad - CK, S), jnp.float32)

    # Lane-aligned staging store (m_lo_pad is a multiple of 128): every depthwise tap
    # becomes a constant lane shift (static slice) of this dense slab.
    xe_ref[:, m_lo_pad:m_lo_pad + S] = x_ref[...].astype(jnp.float32)

    # im2col: K^3 masked constant-shift copies into the column slab. Only copies plus
    # one multiply by the precomputed 0/1 mask land on the VPU.
    # TODO(synk): audit how the lane-unaligned slices lower; switch to pltpu.roll if the
    # implied lane shifts land on a binding slot instead of the idle XLU.
    for kd in range(K):
        for kh in range(K):
            for kw in range(K):
                tap = (kd * K + kh) * K + kw
                off = (kd - p) * HW + (kh - p) * W + (kw - p)
                shifted = xe_ref[:, m_lo_pad + off:m_lo_pad + off + S]   # (C, S)
                xcol_ref[tap * C:(tap + 1) * C, :] = (
                    shifted * mask_ref[tap:tap + 1, :])

    # Fused depthwise + pointwise conv as ONE MXU matmul:
    # (Co, CKpad) @ (CKpad, S) -> (Co, S); both conv biases pre-folded into b_eff.
    out = jnp.dot(wf_ref[...], xcol_ref[...],
                  preferred_element_type=jnp.float32,
                  precision=lax.Precision.HIGHEST)
    o_ref[...] = (out + beff_ref[...]).astype(o_ref.dtype)


# -----------------------------------------------------------------------------
# Wrapper
# -----------------------------------------------------------------------------
def dwconv3d_pallas(x, w_dw, b_dw, w_pw, b_pw, *, stride=1, padding=0, dilation=1):
    """Forward pass of DWconv3D (depthwise conv + 1x1x1 conv), fused on TPU.

    x:    (N, C, D, H, W)   float32
    w_dw: (C, 1, K, K, K)   depthwise weight (PyTorch layout)
    b_dw: (C,)              depthwise bias
    w_pw: (Co, C, 1, 1, 1)  pointwise weight (PyTorch layout)
    b_pw: (Co,)             pointwise bias
    returns (N, Co, D, H, W)
    """
    assert stride == 1 and dilation == 1, "only stride=1, dilation=1 implemented"
    N, C, D, H, W = x.shape
    K = w_dw.shape[-1]
    Co = w_pw.shape[0]
    p = padding
    Do, Ho, Wo = D + 2 * p - K + 1, H + 2 * p - K + 1, W + 2 * p - K + 1
    assert (Do, Ho, Wo) == (D, H, W), \
        "only 'same'-shape convs (2*padding == kernel-1) implemented"

    S = D * H * W
    HW = H * W
    K3 = K * K * K
    CK = K3 * C
    CK_pad = _round_up(CK, 8)                 # sublane-multiple contraction dim
    m_lo = p * (HW + W + 1)                   # largest negative tap offset
    m_hi = (K - 1 - p) * (HW + W + 1)         # largest positive tap offset
    m_lo_pad = _round_up(m_lo, 128)           # lane-align staging / center-tap slices
    xe_width = _round_up(m_lo_pad + S + m_hi, 128)

    # ---- wrapper glue (tiny constant tables only; no activation-sized HBM temps) ----
    x_flat = x.reshape(N, C, S).astype(jnp.float32)           # contiguous reshape
    wdw_tbl = w_dw.reshape(C, K3).astype(jnp.float32)         # (C, K^3)
    wpw_2d = w_pw.reshape(Co, C).astype(jnp.float32)          # (Co, C)

    # Fused weight: Wf[co, tap*C + c] = w_pw[co, c] * w_dw[c, tap], zero-padded.
    w_fused = (wpw_2d[:, None, :] * wdw_tbl.T[None, :, :]).reshape(Co, CK)
    if CK_pad > CK:
        w_fused = jnp.pad(w_fused, ((0, 0), (0, CK_pad - CK)))
    # Fold biases: out = W_pw @ (dw + b_dw) + b_pw  ->  Wf-matmul + b_eff
    b_eff = (jnp.matmul(wpw_2d, b_dw.astype(jnp.float32))
             + b_pw.astype(jnp.float32)).reshape(Co, 1)

    # Precomputed 0/1 edge masks: one (1, S) row per tap; the masks (together with the
    # zeroed margins of the staging slab) realize the zero padding with no jnp.pad.
    fidx = jnp.arange(S, dtype=jnp.int32)
    d_idx = fidx // HW
    h_idx = (fidx // W) % H
    w_idx = fidx % W
    rows = []
    for kd in range(K):
        dm = (d_idx >= p - kd) & (d_idx < D + p - kd)
        for kh in range(K):
            hm = (h_idx >= p - kh) & (h_idx < H + p - kh)
            for kw in range(K):
                wm = (w_idx >= p - kw) & (w_idx < W + p - kw)
                rows.append(dm & hm & wm)
    mask_tbl = jnp.stack(rows, axis=0).astype(jnp.float32)    # (K^3, S)

    kernel = functools.partial(_fused_dwconv3d_kernel,
                               H=H, W=W, K=K, p=p, m_lo_pad=m_lo_pad)

    out_flat = pl.pallas_call(
        kernel,
        out_shape=jax.ShapeDtypeStruct((N, Co, S), jnp.float32),
        grid_spec=pltpu.PrefetchScalarGridSpec(
            num_scalar_prefetch=0,
            grid=(N,),
            in_specs=[
                pl.BlockSpec((None, C, S), lambda n: (n, 0, 0)),   # x (flattened)
                pl.BlockSpec((K3, S), lambda n: (0, 0)),           # edge-mask table
                pl.BlockSpec((Co, CK_pad), lambda n: (0, 0)),      # fused weights
                pl.BlockSpec((Co, 1), lambda n: (0, 0)),           # folded bias
            ],
            out_specs=pl.BlockSpec((None, Co, S), lambda n: (n, 0, 0)),
            scratch_shapes=[
                pltpu.VMEM((C, xe_width), jnp.float32),            # margined staging
                pltpu.VMEM((CK_pad, S), jnp.float32),              # im2col slab
            ],
        ),
        compiler_params=pltpu.CompilerParams(
            dimension_semantics=("parallel",),
            vmem_limit_bytes=32 * 1024 * 1024,
        ),
    )(x_flat, mask_tbl, w_fused, b_eff)

    return out_flat.reshape(N, Co, D, H, W)


# -----------------------------------------------------------------------------
# Pure-JAX reference (for verification)
# -----------------------------------------------------------------------------
def dwconv3d_ref(x, w_dw, b_dw, w_pw, b_pw, padding):
    C = x.shape[1]
    dn = ("NCDHW", "OIDHW", "NCDHW")
    y = lax.conv_general_dilated(
        x, w_dw, window_strides=(1, 1, 1),
        padding=[(padding, padding)] * 3,
        dimension_numbers=dn, feature_group_count=C,
        precision=lax.Precision.HIGHEST)
    y = y + b_dw.reshape(1, -1, 1, 1, 1)
    z = lax.conv_general_dilated(
        y, w_pw, window_strides=(1, 1, 1),
        padding=[(0, 0)] * 3, dimension_numbers=dn,
        precision=lax.Precision.HIGHEST)
    z = z + b_pw.reshape(1, -1, 1, 1, 1)
    return z


if __name__ == "__main__":
    # Small, deterministic setup consistent with the module usage in Conv3D_Block:
    # DWconv3D(in_channels=4, out_channels=8, kernel_size=3, padding=1, bias=True)
    N, Cin, Cout, K, pad = 2, 4, 8, 3, 1
    D = H = W = 8

    key = jax.random.PRNGKey(0)
    kx, kw1, kb1, kw2, kb2 = jax.random.split(key, 5)

    x = jax.random.normal(kx, (N, Cin, D, H, W), dtype=jnp.float32)
    w_dw = jax.random.normal(kw1, (Cin, 1, K, K, K), dtype=jnp.float32) * 0.1
    b_dw = jax.random.normal(kb1, (Cin,), dtype=jnp.float32) * 0.1
    w_pw = jax.random.normal(kw2, (Cout, Cin, 1, 1, 1), dtype=jnp.float32) * 0.1
    b_pw = jax.random.normal(kb2, (Cout,), dtype=jnp.float32) * 0.1

    out = dwconv3d_pallas(x, w_dw, b_dw, w_pw, b_pw, stride=1, padding=pad, dilation=1)
    out = jax.block_until_ready(out)

    ref = dwconv3d_ref(x, w_dw, b_dw, w_pw, b_pw, pad)
    assert out.shape == (N, Cout, D, H, W), out.shape
    err = float(jnp.max(jnp.abs(out - ref)))
    # Loose-ish tolerance to allow for MXU accumulation-order / pass-count differences;
    # still orders of magnitude below any offset/mask bug (which would give O(0.1) error).
    assert err < 2e-3, err

    print("KERNEL_OK")
</pallas_src>

<mosaic_0001>
module attributes {stable_mosaic.version = 11 : i64} {
  func.func @_fused_dwconv3d_kernel(%arg0: i32, %arg1: memref<1x4x512xf32, #tpu.memory_space<vmem>>, %arg2: memref<27x512xf32, #tpu.memory_space<vmem>>, %arg3: memref<8x112xf32, #tpu.memory_space<vmem>>, %arg4: memref<8x1xf32, #tpu.memory_space<vmem>>, %arg5: memref<1x8x512xf32, #tpu.memory_space<vmem>>, %arg6: memref<4x768xf32, #tpu.memory_space<vmem>>, %arg7: memref<112x512xf32, #tpu.memory_space<vmem>>) attributes {dimension_semantics = [#tpu.dimension_semantics<parallel>], iteration_bounds = array<i64: 2>, scalar_prefetch = 0 : i64, scratch_operands = 2 : i64, tpu.core_type = #tpu.core_type<tc>, window_params = [{transform_indices = @transform_0, window_bounds = array<i64: 1, 4, 512>}, {pipeline_mode = #tpu.pipeline_mode<synchronous>, transform_indices = @transform_1, window_bounds = array<i64: 27, 512>}, {pipeline_mode = #tpu.pipeline_mode<synchronous>, transform_indices = @transform_2, window_bounds = array<i64: 8, 112>}, {pipeline_mode = #tpu.pipeline_mode<synchronous>, transform_indices = @transform_3, window_bounds = array<i64: 8, 1>}, {transform_indices = @transform_4, window_bounds = array<i64: 1, 8, 512>}]} {
    %cst = arith.constant 0.000000e+00 : f32
    %0 = vector.broadcast %cst : f32 to vector<4x128xf32>
    %c0 = arith.constant 0 : index
    %c0_0 = arith.constant 0 : index
    %1 = vector.load %arg6[%c0, %c0_0] : memref<4x768xf32, #tpu.memory_space<vmem>>, vector<4x128xf32>
    tpu.vector_store %arg6[%c0, %c0_0], %0 {strides = array<i32>} : memref<4x768xf32, #tpu.memory_space<vmem>>, vector<4x128xf32>,
    %cst_1 = arith.constant 0.000000e+00 : f32
    %2 = vector.broadcast %cst_1 : f32 to vector<4x128xf32>
    %c0_2 = arith.constant 0 : index
    %c640 = arith.constant 640 : index
    %3 = vector.load %arg6[%c0_2, %c640] : memref<4x768xf32, #tpu.memory_space<vmem>>, vector<4x128xf32>
    tpu.vector_store %arg6[%c0_2, %c640], %2 {strides = array<i32>} : memref<4x768xf32, #tpu.memory_space<vmem>>, vector<4x128xf32>,
    %cst_3 = arith.constant 0.000000e+00 : f32
    %4 = vector.broadcast %cst_3 : f32 to vector<4x512xf32>
    %c108 = arith.constant 108 : index
    %c0_4 = arith.constant 0 : index
    %5 = vector.load %arg7[%c108, %c0_4] : memref<112x512xf32, #tpu.memory_space<vmem>>, vector<4x512xf32>
    tpu.vector_store %arg7[%c108, %c0_4], %4 {strides = array<i32>} : memref<112x512xf32, #tpu.memory_space<vmem>>, vector<4x512xf32>,
    %c0_5 = arith.constant 0 : index
    %c0_6 = arith.constant 0 : index
    %c0_7 = arith.constant 0 : index
    %6 = vector.load %arg1[%c0_5, %c0_6, %c0_7] : memref<1x4x512xf32, #tpu.memory_space<vmem>>, vector<1x4x512xf32>
    %7 = vector.shape_cast %6 : vector<1x4x512xf32> to vector<4x512xf32>
    %c0_8 = arith.constant 0 : index
    %c128 = arith.constant 128 : index
    %8 = vector.load %arg6[%c0_8, %c128] : memref<4x768xf32, #tpu.memory_space<vmem>>, vector<4x512xf32>
    tpu.vector_store %arg6[%c0_8, %c128], %7 {strides = array<i32>} : memref<4x768xf32, #tpu.memory_space<vmem>>, vector<4x512xf32>,
    %c0_9 = arith.constant 0 : index
    %c55 = arith.constant 55 : index
    %9 = vector.load %arg6[%c0_9, %c55] : memref<4x768xf32, #tpu.memory_space<vmem>>, vector<4x512xf32>
    %c0_10 = arith.constant 0 : index
    %c0_11 = arith.constant 0 : index
    %10 = vector.load %arg2[%c0_10, %c0_11] : memref<27x512xf32, #tpu.memory_space<vmem>>, vector<1x512xf32>
    %11 = vector.broadcast %10 : vector<1x512xf32> to vector<4x512xf32>
    %12 = arith.mulf %9, %11 : vector<4x512xf32>
    %c0_12 = arith.constant 0 : index
    %c0_13 = arith.constant 0 : index
    %13 = vector.load %arg7[%c0_12, %c0_13] : memref<112x512xf32, #tpu.memory_space<vmem>>, vector<4x512xf32>
    tpu.vector_store %arg7[%c0_12, %c0_13], %12 {strides = array<i32>} : memref<112x512xf32, #tpu.memory_space<vmem>>, vector<4x512xf32>,
    %c0_14 = arith.constant 0 : index
    %c56 = arith.constant 56 : index
    %14 = vector.load %arg6[%c0_14, %c56] : memref<4x768xf32, #tpu.memory_space<vmem>>, vector<4x512xf32>
    %c1 = arith.constant 1 : index
    %c0_15 = arith.constant 0 : index
    %15 = vector.load %arg2[%c1, %c0_15] : memref<27x512xf32, #tpu.memory_space<vmem>>, vector<1x512xf32>
    %16 = vector.broadcast %15 : vector<1x512xf32> to vector<4x512xf32>
    %17 = arith.mulf %14, %16 : vector<4x512xf32>
    %c4 = arith.constant 4 : index
    %c0_16 = arith.constant 0 : index
    %18 = vector.load %arg7[%c4, %c0_16] : memref<112x512xf32, #tpu.memory_space<vmem>>, vector<4x512xf32>
    tpu.vector_store %arg7[%c4, %c0_16], %17 {strides = array<i32>} : memref<112x512xf32, #tpu.memory_space<vmem>>, vector<4x512xf32>,
    %c0_17 = arith.constant 0 : index
    %c57 = arith.constant 57 : index
    %19 = vector.load %arg6[%c0_17, %c57] : memref<4x768xf32, #tpu.memory_space<vmem>>, vector<4x512xf32>
    %c2 = arith.constant 2 : index
    %c0_18 = arith.constant 0 : index
    %20 = vector.load %arg2[%c2, %c0_18] : memref<27x512xf32, #tpu.memory_space<vmem>>, vector<1x512xf32>
    %21 = vector.broadcast %20 : vector<1x512xf32> to vector<4x512xf32>
    %22 = arith.mulf %19, %21 : vector<4x512xf32>
    %c8 = arith.constant 8 : index
    %c0_19 = arith.constant 0 : index
    %23 = vector.load %arg7[%c8, %c0_19] : memref<112x512xf32, #tpu.memory_space<vmem>>, vector<4x512xf32>
    tpu.vector_store %arg7[%c8, %c0_19], %22 {strides = array<i32>} : memref<112x512xf32, #tpu.memory_space<vmem>>, vector<4x512xf32>,
    %c0_20 = arith.constant 0 : index
    %c63 = arith.constant 63 : index
    %24 = vector.load %arg6[%c0_20, %c63] : memref<4x768xf32, #tpu.memory_space<vmem>>, vector<4x512xf32>
    %c3 = arith.constant 3 : index
    %c0_21 = arith.constant 0 : index
    %25 = vector.load %arg2[%c3, %c0_21] : memref<27x512xf32, #tpu.memory_space<vmem>>, vector<1x512xf32>
    %26 = vector.broadcast %25 : vector<1x512xf32> to vector<4x512xf32>
    %27 = arith.mulf %24, %26 : vector<4x512xf32>
    %c12 = arith.constant 12 : index
    %c0_22 = arith.constant 0 : index
    %28 = vector.load %arg7[%c12, %c0_22] : memref<112x512xf32, #tpu.memory_space<vmem>>, vector<4x512xf32>
    tpu.vector_store %arg7[%c12, %c0_22], %27 {strides = array<i32>} : memref<112x512xf32, #tpu.memory_space<vmem>>, vector<4x512xf32>,
    %c0_23 = arith.constant 0 : index
    %c64 = arith.constant 64 : index
    %29 = vector.load %arg6[%c0_23, %c64] : memref<4x768xf32, #tpu.memory_space<vmem>>, vector<4x512xf32>
    %c4_24 = arith.constant 4 : index
    %c0_25 = arith.constant 0 : index
    %30 = vector.load %arg2[%c4_24, %c0_25] : memref<27x512xf32, #tpu.memory_space<vmem>>, vector<1x512xf32>
    %31 = vector.broadcast %30 : vector<1x512xf32> to vector<4x512xf32>
    %32 = arith.mulf %29, %31 : vector<4x512xf32>
    %c16 = arith.constant 16 : index
    %c0_26 = arith.constant 0 : index
    %33 = vector.load %arg7[%c16, %c0_26] : memref<112x512xf32, #tpu.memory_space<vmem>>, vector<4x512xf32>
    tpu.vector_store %arg7[%c16, %c0_26], %32 {strides = array<i32>} : memref<112x512xf32, #tpu.memory_space<vmem>>, vector<4x512xf32>,
    %c0_27 = arith.constant 0 : index
    %c65 = arith.constant 65 : index
    %34 = vector.load %arg6[%c0_27, %c65] : memref<4x768xf32, #tpu.memory_space<vmem>>, vector<4x512xf32>
    %c5 = arith.constant 5 : index
    %c0_28 = arith.constant 0 : index
    %35 = vector.load %arg2[%c5, %c0_28] : memref<27x512xf32, #tpu.memory_space<vmem>>, vector<1x512xf32>
    %36 = vector.broadcast %35 : vector<1x512xf32> to vector<4x512xf32>
    %37 = arith.mulf %34, %36 : vector<4x512xf32>
    %c20 = arith.constant 20 : index
    %c0_29 = arith.constant 0 : index
    %38 = vector.load %arg7[%c20, %c0_29] : memref<112x512xf32, #tpu.memory_space<vmem>>, vector<4x512xf32>
    tpu.vector_store %arg7[%c20, %c0_29], %37 {strides = array<i32>} : memref<112x512xf32, #tpu.memory_space<vmem>>, vector<4x512xf32>,
    %c0_30 = arith.constant 0 : index
    %c71 = arith.constant 71 : index
    %39 = vector.load %arg6[%c0_30, %c71] : memref<4x768xf32, #tpu.memory_space<vmem>>, vector<4x512xf32>
    %c6 = arith.constant 6 : index
    %c0_31 = arith.constant 0 : index
    %40 = vector.load %arg2[%c6, %c0_31] : memref<27x512xf32, #tpu.memory_space<vmem>>, vector<1x512xf32>
    %41 = vector.broadcast %40 : vector<1x512xf32> to vector<4x512xf32>
    %42 = arith.mulf %39, %41 : vector<4x512xf32>
    %c24 = arith.constant 24 : index
    %c0_32 = arith.constant 0 : index
    %43 = vector.load %arg7[%c24, %c0_32] : memref<112x512xf32, #tpu.memory_space<vmem>>, vector<4x512xf32>
    tpu.vector_store %arg7[%c24, %c0_32], %42 {strides = array<i32>} : memref<112x512xf32, #tpu.memory_space<vmem>>, vector<4x512xf32>,
    %c0_33 = arith.constant 0 : index
    %c72 = arith.constant 72 : index
    %44 = vector.load %arg6[%c0_33, %c72] : memref<4x768xf32, #tpu.memory_space<vmem>>, vector<4x512xf32>
    %c7 = arith.constant 7 : index
    %c0_34 = arith.constant 0 : index
    %45 = vector.load %arg2[%c7, %c0_34] : memref<27x512xf32, #tpu.memory_space<vmem>>, vector<1x512xf32>
    %46 = vector.broadcast %45 : vector<1x512xf32> to vector<4x512xf32>
    %47 = arith.mulf %44, %46 : vector<4x512xf32>
    %c28 = arith.constant 28 : index
    %c0_35 = arith.constant 0 : index
    %48 = vector.load %arg7[%c28, %c0_35] : memref<112x512xf32, #tpu.memory_space<vmem>>, vector<4x512xf32>
    tpu.vector_store %arg7[%c28, %c0_35], %47 {strides = array<i32>} : memref<112x512xf32, #tpu.memory_space<vmem>>, vector<4x512xf32>,
    %c0_36 = arith.constant 0 : index
    %c73 = arith.constant 73 : index
    %49 = vector.load %arg6[%c0_36, %c73] : memref<4x768xf32, #tpu.memory_space<vmem>>, vector<4x512xf32>
    %c8_37 = arith.constant 8 : index
    %c0_38 = arith.constant 0 : index
    %50 = vector.load %arg2[%c8_37, %c0_38] : memref<27x512xf32, #tpu.memory_space<vmem>>, vector<1x512xf32>
    %51 = vector.broadcast %50 : vector<1x512xf32> to vector<4x512xf32>
    %52 = arith.mulf %49, %51 : vector<4x512xf32>
    %c32 = arith.constant 32 : index
    %c0_39 = arith.constant 0 : index
    %53 = vector.load %arg7[%c32, %c0_39] : memref<112x512xf32, #tpu.memory_space<vmem>>, vector<4x512xf32>
    tpu.vector_store %arg7[%c32, %c0_39], %52 {strides = array<i32>} : memref<112x512xf32, #tpu.memory_space<vmem>>, vector<4x512xf32>,
    %c0_40 = arith.constant 0 : index
    %c119 = arith.constant 119 : index
    %54 = vector.load %arg6[%c0_40, %c119] : memref<4x768xf32, #tpu.memory_space<vmem>>, vector<4x512xf32>
    %c9 = arith.constant 9 : index
    %c0_41 = arith.constant 0 : index
    %55 = vector.load %arg2[%c9, %c0_41] : memref<27x512xf32, #tpu.memory_space<vmem>>, vector<1x512xf32>
    %56 = vector.broadcast %55 : vector<1x512xf32> to vector<4x512xf32>
    %57 = arith.mulf %54, %56 : vector<4x512xf32>
    %c36 = arith.constant 36 : index
    %c0_42 = arith.constant 0 : index
    %58 = vector.load %arg7[%c36, %c0_42] : memref<112x512xf32, #tpu.memory_space<vmem>>, vector<4x512xf32>
    tpu.vector_store %arg7[%c36, %c0_42], %57 {strides = array<i32>} : memref<112x512xf32, #tpu.memory_space<vmem>>, vector<4x512xf32>,
    %c0_43 = arith.constant 0 : index
    %c120 = arith.constant 120 : index
    %59 = vector.load %arg6[%c0_43, %c120] : memref<4x768xf32, #tpu.memory_space<vmem>>, vector<4x512xf32>
    %c10 = arith.constant 10 : index
    %c0_44 = arith.constant 0 : index
    %60 = vector.load %arg2[%c10, %c0_44] : memref<27x512xf32, #tpu.memory_space<vmem>>, vector<1x512xf32>
    %61 = vector.broadcast %60 : vector<1x512xf32> to vector<4x512xf32>
    %62 = arith.mulf %59, %61 : vector<4x512xf32>
    %c40 = arith.constant 40 : index
    %c0_45 = arith.constant 0 : index
    %63 = vector.load %arg7[%c40, %c0_45] : memref<112x512xf32, #tpu.memory_space<vmem>>, vector<4x512xf32>
    tpu.vector_store %arg7[%c40, %c0_45], %62 {strides = array<i32>} : memref<112x512xf32, #tpu.memory_space<vmem>>, vector<4x512xf32>,
    %c0_46 = arith.constant 0 : index
    %c121 = arith.constant 121 : index
    %64 = vector.load %arg6[%c0_46, %c121] : memref<4x768xf32, #tpu.memory_space<vmem>>, vector<4x512xf32>
    %c11 = arith.constant 11 : index
    %c0_47 = arith.constant 0 : index
    %65 = vector.load %arg2[%c11, %c0_47] : memref<27x512xf32, #tpu.memory_space<vmem>>, vector<1x512xf32>
    %66 = vector.broadcast %65 : vector<1x512xf32> to vector<4x512xf32>
    %67 = arith.mulf %64, %66 : vector<4x512xf32>
    %c44 = arith.constant 44 : index
    %c0_48 = arith.constant 0 : index
    %68 = vector.load %arg7[%c44, %c0_48] : memref<112x512xf32, #tpu.memory_space<vmem>>, vector<4x512xf32>
    tpu.vector_store %arg7[%c44, %c0_48], %67 {strides = array<i32>} : memref<112x512xf32, #tpu.memory_space<vmem>>, vector<4x512xf32>,
    %c0_49 = arith.constant 0 : index
    %c127 = arith.constant 127 : index
    %69 = vector.load %arg6[%c0_49, %c127] : memref<4x768xf32, #tpu.memory_space<vmem>>, vector<4x512xf32>
    %c12_50 = arith.constant 12 : index
    %c0_51 = arith.constant 0 : index
    %70 = vector.load %arg2[%c12_50, %c0_51] : memref<27x512xf32, #tpu.memory_space<vmem>>, vector<1x512xf32>
    %71 = vector.broadcast %70 : vector<1x512xf32> to vector<4x512xf32>
    %72 = arith.mulf %69, %71 : vector<4x512xf32>
    %c48 = arith.constant 48 : index
    %c0_52 = arith.constant 0 : index
    %73 = vector.load %arg7[%c48, %c0_52] : memref<112x512xf32, #tpu.memory_space<vmem>>, vector<4x512xf32>
    tpu.vector_store %arg7[%c48, %c0_52], %72 {strides = array<i32>} : memref<112x512xf32, #tpu.memory_space<vmem>>, vector<4x512xf32>,
    %c0_53 = arith.constant 0 : index
    %c128_54 = arith.constant 128 : index
    %74 = vector.load %arg6[%c0_53, %c128_54] : memref<4x768xf32, #tpu.memory_space<vmem>>, vector<4x512xf32>
    %c13 = arith.constant 13 : index
    %c0_55 = arith.constant 0 : index
    %75 = vector.load %arg2[%c13, %c0_55] : memref<27x512xf32, #tpu.memory_space<vmem>>, vector<1x512xf32>
    %76 = vector.broadcast %75 : vector<1x512xf32> to vector<4x512xf32>
    %77 = arith.mulf %74, %76 : vector<4x512xf32>
    %c52 = arith.constant 52 : index
    %c0_56 = arith.constant 0 : index
    %78 = vector.load %arg7[%c52, %c0_56] : memref<112x512xf32, #tpu.memory_space<vmem>>, vector<4x512xf32>
    tpu.vector_store %arg7[%c52, %c0_56], %77 {strides = array<i32>} : memref<112x512xf32, #tpu.memory_space<vmem>>, vector<4x512xf32>,
    %c0_57 = arith.constant 0 : index
    %c129 = arith.constant 129 : index
    %79 = vector.load %arg6[%c0_57, %c129] : memref<4x768xf32, #tpu.memory_space<vmem>>, vector<4x512xf32>
    %c14 = arith.constant 14 : index
    %c0_58 = arith.constant 0 : index
    %80 = vector.load %arg2[%c14, %c0_58] : memref<27x512xf32, #tpu.memory_space<vmem>>, vector<1x512xf32>
    %81 = vector.broadcast %80 : vector<1x512xf32> to vector<4x512xf32>
    %82 = arith.mulf %79, %81 : vector<4x512xf32>
    %c56_59 = arith.constant 56 : index
    %c0_60 = arith.constant 0 : index
    %83 = vector.load %arg7[%c56_59, %c0_60] : memref<112x512xf32, #tpu.memory_space<vmem>>, vector<4x512xf32>
    tpu.vector_store %arg7[%c56_59, %c0_60], %82 {strides = array<i32>} : memref<112x512xf32, #tpu.memory_space<vmem>>, vector<4x512xf32>,
    %c0_61 = arith.constant 0 : index
    %c135 = arith.constant 135 : index
    %84 = vector.load %arg6[%c0_61, %c135] : memref<4x768xf32, #tpu.memory_space<vmem>>, vector<4x512xf32>
    %c15 = arith.constant 15 : index
    %c0_62 = arith.constant 0 : index
    %85 = vector.load %arg2[%c15, %c0_62] : memref<27x512xf32, #tpu.memory_space<vmem>>, vector<1x512xf32>
    %86 = vector.broadcast %85 : vector<1x512xf32> to vector<4x512xf32>
    %87 = arith.mulf %84, %86 : vector<4x512xf32>
    %c60 = arith.constant 60 : index
    %c0_63 = arith.constant 0 : index
    %88 = vector.load %arg7[%c60, %c0_63] : memref<112x512xf32, #tpu.memory_space<vmem>>, vector<4x512xf32>
    tpu.vector_store %arg7[%c60, %c0_63], %87 {strides = array<i32>} : memref<112x512xf32, #tpu.memory_space<vmem>>, vector<4x512xf32>,
    %c0_64 = arith.constant 0 : index
    %c136 = arith.constant 136 : index
    %89 = vector.load %arg6[%c0_64, %c136] : memref<4x768xf32, #tpu.memory_space<vmem>>, vector<4x512xf32>
    %c16_65 = arith.constant 16 : index
    %c0_66 = arith.constant 0 : index
    %90 = vector.load %arg2[%c16_65, %c0_66] : memref<27x512xf32, #tpu.memory_space<vmem>>, vector<1x512xf32>
    %91 = vector.broadcast %90 : vector<1x512xf32> to vector<4x512xf32>
    %92 = arith.mulf %89, %91 : vector<4x512xf32>
    %c64_67 = arith.constant 64 : index
    %c0_68 = arith.constant 0 : index
    %93 = vector.load %arg7[%c64_67, %c0_68] : memref<112x512xf32, #tpu.memory_space<vmem>>, vector<4x512xf32>
    tpu.vector_store %arg7[%c64_67, %c0_68], %92 {strides = array<i32>} : memref<112x512xf32, #tpu.memory_space<vmem>>, vector<4x512xf32>,
    %c0_69 = arith.constant 0 : index
    %c137 = arith.constant 137 : index
    %94 = vector.load %arg6[%c0_69, %c137] : memref<4x768xf32, #tpu.memory_space<vmem>>, vector<4x512xf32>
    %c17 = arith.constant 17 : index
    %c0_70 = arith.constant 0 : index
    %95 = vector.load %arg2[%c17, %c0_70] : memref<27x512xf32, #tpu.memory_space<vmem>>, vector<1x512xf32>
    %96 = vector.broadcast %95 : vector<1x512xf32> to vector<4x512xf32>
    %97 = arith.mulf %94, %96 : vector<4x512xf32>
    %c68 = arith.constant 68 : index
    %c0_71 = arith.constant 0 : index
    %98 = vector.load %arg7[%c68, %c0_71] : memref<112x512xf32, #tpu.memory_space<vmem>>, vector<4x512xf32>
    tpu.vector_store %arg7[%c68, %c0_71], %97 {strides = array<i32>} : memref<112x512xf32, #tpu.memory_space<vmem>>, vector<4x512xf32>,
    %c0_72 = arith.constant 0 : index
    %c183 = arith.constant 183 : index
    %99 = vector.load %arg6[%c0_72, %c183] : memref<4x768xf32, #tpu.memory_space<vmem>>, vector<4x512xf32>
    %c18 = arith.constant 18 : index
    %c0_73 = arith.constant 0 : index
    %100 = vector.load %arg2[%c18, %c0_73] : memref<27x512xf32, #tpu.memory_space<vmem>>, vector<1x512xf32>
    %101 = vector.broadcast %100 : vector<1x512xf32> to vector<4x512xf32>
    %102 = arith.mulf %99, %101 : vector<4x512xf32>
    %c72_74 = arith.constant 72 : index
    %c0_75 = arith.constant 0 : index
    %103 = vector.load %arg7[%c72_74, %c0_75] : memref<112x512xf32, #tpu.memory_space<vmem>>, vector<4x512xf32>
    tpu.vector_store %arg7[%c72_74, %c0_75], %102 {strides = array<i32>} : memref<112x512xf32, #tpu.memory_space<vmem>>, vector<4x512xf32>,
    %c0_76 = arith.constant 0 : index
    %c184 = arith.constant 184 : index
    %104 = vector.load %arg6[%c0_76, %c184] : memref<4x768xf32, #tpu.memory_space<vmem>>, vector<4x512xf32>
    %c19 = arith.constant 19 : index
    %c0_77 = arith.constant 0 : index
    %105 = vector.load %arg2[%c19, %c0_77] : memref<27x512xf32, #tpu.memory_space<vmem>>, vector<1x512xf32>
    %106 = vector.broadcast %105 : vector<1x512xf32> to vector<4x512xf32>
    %107 = arith.mulf %104, %106 : vector<4x512xf32>
    %c76 = arith.constant 76 : index
    %c0_78 = arith.constant 0 : index
    %108 = vector.load %arg7[%c76, %c0_78] : memref<112x512xf32, #tpu.memory_space<vmem>>, vector<4x512xf32>
    tpu.vector_store %arg7[%c76, %c0_78], %107 {strides = array<i32>} : memref<112x512xf32, #tpu.memory_space<vmem>>, vector<4x512xf32>,
    %c0_79 = arith.constant 0 : index
    %c185 = arith.constant 185 : index
    %109 = vector.load %arg6[%c0_79, %c185] : memref<4x768xf32, #tpu.memory_space<vmem>>, vector<4x512xf32>
    %c20_80 = arith.constant 20 : index
    %c0_81 = arith.constant 0 : index
    %110 = vector.load %arg2[%c20_80, %c0_81] : memref<27x512xf32, #tpu.memory_space<vmem>>, vector<1x512xf32>
    %111 = vector.broadcast %110 : vector<1x512xf32> to vector<4x512xf32>
    %112 = arith.mulf %109, %111 : vector<4x512xf32>
    %c80 = arith.constant 80 : index
    %c0_82 = arith.constant 0 : index
    %113 = vector.load %arg7[%c80, %c0_82] : memref<112x512xf32, #tpu.memory_space<vmem>>, vector<4x512xf32>
    tpu.vector_store %arg7[%c80, %c0_82], %112 {strides = array<i32>} : memref<112x512xf32, #tpu.memory_space<vmem>>, vector<4x512xf32>,
    %c0_83 = arith.constant 0 : index
    %c191 = arith.constant 191 : index
    %114 = vector.load %arg6[%c0_83, %c191] : memref<4x768xf32, #tpu.memory_space<vmem>>, vector<4x512xf32>
    %c21 = arith.constant 21 : index
    %c0_84 = arith.constant 0 : index
    %115 = vector.load %arg2[%c21, %c0_84] : memref<27x512xf32, #tpu.memory_space<vmem>>, vector<1x512xf32>
    %116 = vector.broadcast %115 : vector<1x512xf32> to vector<4x512xf32>
    %117 = arith.mulf %114, %116 : vector<4x512xf32>
    %c84 = arith.constant 84 : index
    %c0_85 = arith.constant 0 : index
    %118 = vector.load %arg7[%c84, %c0_85] : memref<112x512xf32, #tpu.memory_space<vmem>>, vector<4x512xf32>
    tpu.vector_store %arg7[%c84, %c0_85], %117 {strides = array<i32>} : memref<112x512xf32, #tpu.memory_space<vmem>>, vector<4x512xf32>,
    %c0_86 = arith.constant 0 : index
    %c192 = arith.constant 192 : index
    %119 = vector.load %arg6[%c0_86, %c192] : memref<4x768xf32, #tpu.memory_space<vmem>>, vector<4x512xf32>
    %c22 = arith.constant 22 : index
    %c0_87 = arith.constant 0 : index
    %120 = vector.load %arg2[%c22, %c0_87] : memref<27x512xf32, #tpu.memory_space<vmem>>, vector<1x512xf32>
    %121 = vector.broadcast %120 : vector<1x512xf32> to vector<4x512xf32>
    %122 = arith.mulf %119, %121 : vector<4x512xf32>
    %c88 = arith.constant 88 : index
    %c0_88 = arith.constant 0 : index
    %123 = vector.load %arg7[%c88, %c0_88] : memref<112x512xf32, #tpu.memory_space<vmem>>, vector<4x512xf32>
    tpu.vector_store %arg7[%c88, %c0_88], %122 {strides = array<i32>} : memref<112x512xf32, #tpu.memory_space<vmem>>, vector<4x512xf32>,
    %c0_89 = arith.constant 0 : index
    %c193 = arith.constant 193 : index
    %124 = vector.load %arg6[%c0_89, %c193] : memref<4x768xf32, #tpu.memory_space<vmem>>, vector<4x512xf32>
    %c23 = arith.constant 23 : index
    %c0_90 = arith.constant 0 : index
    %125 = vector.load %arg2[%c23, %c0_90] : memref<27x512xf32, #tpu.memory_space<vmem>>, vector<1x512xf32>
    %126 = vector.broadcast %125 : vector<1x512xf32> to vector<4x512xf32>
    %127 = arith.mulf %124, %126 : vector<4x512xf32>
    %c92 = arith.constant 92 : index
    %c0_91 = arith.constant 0 : index
    %128 = vector.load %arg7[%c92, %c0_91] : memref<112x512xf32, #tpu.memory_space<vmem>>, vector<4x512xf32>
    tpu.vector_store %arg7[%c92, %c0_91], %127 {strides = array<i32>} : memref<112x512xf32, #tpu.memory_space<vmem>>, vector<4x512xf32>,
    %c0_92 = arith.constant 0 : index
    %c199 = arith.constant 199 : index
    %129 = vector.load %arg6[%c0_92, %c199] : memref<4x768xf32, #tpu.memory_space<vmem>>, vector<4x512xf32>
    %c24_93 = arith.constant 24 : index
    %c0_94 = arith.constant 0 : index
    %130 = vector.load %arg2[%c24_93, %c0_94] : memref<27x512xf32, #tpu.memory_space<vmem>>, vector<1x512xf32>
    %131 = vector.broadcast %130 : vector<1x512xf32> to vector<4x512xf32>
    %132 = arith.mulf %129, %131 : vector<4x512xf32>
    %c96 = arith.constant 96 : index
    %c0_95 = arith.constant 0 : index
    %133 = vector.load %arg7[%c96, %c0_95] : memref<112x512xf32, #tpu.memory_space<vmem>>, vector<4x512xf32>
    tpu.vector_store %arg7[%c96, %c0_95], %132 {strides = array<i32>} : memref<112x512xf32, #tpu.memory_space<vmem>>, vector<4x512xf32>,
    %c0_96 = arith.constant 0 : index
    %c200 = arith.constant 200 : index
    %134 = vector.load %arg6[%c0_96, %c200] : memref<4x768xf32, #tpu.memory_space<vmem>>, vector<4x512xf32>
    %c25 = arith.constant 25 : index
    %c0_97 = arith.constant 0 : index
    %135 = vector.load %arg2[%c25, %c0_97] : memref<27x512xf32, #tpu.memory_space<vmem>>, vector<1x512xf32>
    %136 = vector.broadcast %135 : vector<1x512xf32> to vector<4x512xf32>
    %137 = arith.mulf %134, %136 : vector<4x512xf32>
    %c100 = arith.constant 100 : index
    %c0_98 = arith.constant 0 : index
    %138 = vector.load %arg7[%c100, %c0_98] : memref<112x512xf32, #tpu.memory_space<vmem>>, vector<4x512xf32>
    tpu.vector_store %arg7[%c100, %c0_98], %137 {strides = array<i32>} : memref<112x512xf32, #tpu.memory_space<vmem>>, vector<4x512xf32>,
    %c0_99 = arith.constant 0 : index
    %c201 = arith.constant 201 : index
    %139 = vector.load %arg6[%c0_99, %c201] : memref<4x768xf32, #tpu.memory_space<vmem>>, vector<4x512xf32>
    %c26 = arith.constant 26 : index
    %c0_100 = arith.constant 0 : index
    %140 = vector.load %arg2[%c26, %c0_100] : memref<27x512xf32, #tpu.memory_space<vmem>>, vector<1x512xf32>
    %141 = vector.broadcast %140 : vector<1x512xf32> to vector<4x512xf32>
    %142 = arith.mulf %139, %141 : vector<4x512xf32>
    %c104 = arith.constant 104 : index
    %c0_101 = arith.constant 0 : index
    %143 = vector.load %arg7[%c104, %c0_101] : memref<112x512xf32, #tpu.memory_space<vmem>>, vector<4x512xf32>
    tpu.vector_store %arg7[%c104, %c0_101], %142 {strides = array<i32>} : memref<112x512xf32, #tpu.memory_space<vmem>>, vector<4x512xf32>,
    %c0_102 = arith.constant 0 : index
    %c0_103 = arith.constant 0 : index
    %144 = vector.load %arg3[%c0_102, %c0_103] : memref<8x112xf32, #tpu.memory_space<vmem>>, vector<8x112xf32>
    %c0_104 = arith.constant 0 : index
    %c0_105 = arith.constant 0 : index
    %145 = vector.load %arg7[%c0_104, %c0_105] : memref<112x512xf32, #tpu.memory_space<vmem>>, vector<112x512xf32>
    %cst_106 = arith.constant dense<0.000000e+00> : vector<8x512xf32>
    %146 = tpu.matmul %144, %145, %cst_106 {dimension_numbers = #tpu.dot_dimension_numbers<[1], [0], [0], [1], [0, 0, 1, 1], [], []>, precision = #tpu.contract_precision<fp32>} : vector<8x112xf32>, vector<112x512xf32>, vector<8x512xf32> -> vector<8x512xf32>
    %c0_107 = arith.constant 0 : index
    %c0_108 = arith.constant 0 : index
    %147 = vector.load %arg4[%c0_107, %c0_108] : memref<8x1xf32, #tpu.memory_space<vmem>>, vector<8x1xf32>
    %148 = vector.broadcast %147 : vector<8x1xf32> to vector<8x512xf32>
    %149 = arith.addf %146, %148 : vector<8x512xf32>
    %c0_109 = arith.constant 0 : index
    %c0_110 = arith.constant 0 : index
    %c0_111 = arith.constant 0 : index
    %150 = vector.load %arg5[%c0_109, %c0_110, %c0_111] : memref<1x8x512xf32, #tpu.memory_space<vmem>>, vector<1x8x512xf32>
    %151 = vector.shape_cast %150 : vector<1x8x512xf32> to vector<8x512xf32>
    %152 = vector.shape_cast %149 : vector<8x512xf32> to vector<1x8x512xf32>
    tpu.vector_store %arg5[%c0_109, %c0_110, %c0_111], %152 {strides = array<i32>} : memref<1x8x512xf32, #tpu.memory_space<vmem>>, vector<1x8x512xf32>,
    return
  }
  func.func @transform_0(%arg0: i32) -> (i32, i32, i32) {
    %c0_i32 = arith.constant 0 : i32
    %c0_i32_0 = arith.constant 0 : i32
    %c0_i32_1 = arith.constant 0 : i32
    return %arg0, %c0_i32, %c0_i32_0 : i32, i32, i32
  }
  func.func @transform_1(%arg0: i32) -> (i32, i32) {
    %c0_i32 = arith.constant 0 : i32
    %c0_i32_0 = arith.constant 0 : i32
    %c0_i32_1 = arith.constant 0 : i32
    return %c0_i32, %c0_i32_0 : i32, i32
  }
  func.func @transform_2(%arg0: i32) -> (i32, i32) {
    %c0_i32 = arith.constant 0 : i32
    %c0_i32_0 = arith.constant 0 : i32
    %c0_i32_1 = arith.constant 0 : i32
    return %c0_i32, %c0_i32_0 : i32, i32
  }
  func.func @transform_3(%arg0: i32) -> (i32, i32) {
    %c0_i32 = arith.constant 0 : i32
    %c0_i32_0 = arith.constant 0 : i32
    %c0_i32_1 = arith.constant 0 : i32
    return %c0_i32, %c0_i32_0 : i32, i32
  }
  func.func @transform_4(%arg0: i32) -> (i32, i32, i32) {
    %c0_i32 = arith.constant 0 : i32
    %c0_i32_0 = arith.constant 0 : i32
    %c0_i32_1 = arith.constant 0 : i32
    return %arg0, %c0_i32, %c0_i32_0 : i32, i32, i32
  }
}

</mosaic_0001>

<llo_original>
// kernel: tpu_custom_call.1
$region0: #{tpu_custom_call.1}
  #allocation0 [shape = 'u32[]', space=smem, size = 0x4, offset = 0x4, fixed_abs, tag = 'smem constant byte address 0x4 - core index']
  #allocation1 [shape = 'u32[144,128]{1,0:T(1,128)}', space=vmem, size = 0x12000, scoped, tag = 'internal scratch']
  #allocation2 [shape = 'f32[4,768]{1,0:T(4,128)}', space=vmem, size = 0x3000, scoped, tag = 'scratch operand']
  #allocation3 [shape = 'f32[112,512]{1,0:T(8,128)}', space=vmem, size = 0x38000, scoped, tag = 'scratch operand']
  %s0 = inlined_call_operand.hbm [shape: f32[2,4,512], index: 0, kind: input, shape index: {}]
  %s1 = inlined_call_operand.hbm [shape: f32[27,512], index: 1, kind: input, shape index: {}]
  %s2 = inlined_call_operand.vmem [shape: f32[8,112], index: 2, kind: input, shape index: {}]
  %s3 = inlined_call_operand.vmem [shape: f32[8,1], index: 3, kind: input, shape index: {}]
  %s4 = inlined_call_operand.hbm [shape: f32[2,8,512], index: 4, kind: output, shape index: {}]
  %s5 = sld [smem:[#allocation0]]
  $region57: #{tpu_custom_call.1} parent=0
    _
  %s7 = ssub.s32 1, %s5
  %s8 = scalar_select 0, %s7, %s5
  $region1: #{tpu_custom_call.1} parent=0
    #allocation4 [shape = 'u8[16384]{0}', space=vmem, size = 0x4000, scoped, tag = 'input window, operand 0']
    #allocation5 [shape = 's32[2]{0}', space=sflag, size = 0x8, scoped, tag = 'scoped memory for tpu_custom_call.1']
    #allocation6 [shape = 's32[2]{0}', space=sflag, size = 0x8, scoped, tag = 'scoped memory for tpu_custom_call.1']
    #allocation7 [shape = 'u8[65536]{0}', space=vmem, size = 0x10000, scoped, tag = 'input window, operand 1, single buffered']
    #allocation8 [shape = 's32[1]{0}', space=sflag, size = 0x4, scoped, tag = 'scoped memory for tpu_custom_call.1']
    #allocation9 [shape = 'u8[32768]{0}', space=vmem, size = 0x8000, scoped, tag = 'output window, operand 0']
    %9 = vsyncpa [#allocation5], 0
    %s10 = scalar_lea.sflag [#allocation5], 1
    %11 = vsyncpa %s10, 0
    %12 = vsyncpa [#allocation8], 0
    %13 = vsyncpa [#allocation6], 0
    %s14 = scalar_lea.sflag [#allocation6], 1
    %15 = vsyncpa %s14, 0
    loop: start=0, step=1, limit=4
    $region2: #{tpu_custom_call.1} parent=1 // loop_pre_header
      _
    $region3: #{tpu_custom_call.1} parent=1 // loop_header
      %s17 = sphi 0, %s21
      %p18 = scmp.ge.s32.totalorder %s17, 4
      %s27 = sphi 0, %s29
      %s30 = sphi 0, %s27
      %s31 = sphi 0, %s30
      %s47 = sphi 0, %s31
      %s51 = sphi 0, %s51
      %s53 = sphi 0, %s51
      %s54 = sphi 0, %s53
      %s68 = sphi 0, %s54
      %s72 = sphi 0, %s72
      %s74 = sphi 0, %s72
      %s75 = sphi 0, %s74
      %s89 = sphi 0, %s75
      %s93 = sphi 0, %s93
      %s95 = sphi 0, %s93
      %s96 = sphi 0, %s95
      %s110 = sphi 0, %s96
      %s116 = sphi 0, %s118
      %s119 = sphi 0, %s116
      %s120 = sphi 0, %s119
      %s136 = sphi 0, %s120
    $region4: #{tpu_custom_call.1} parent=1 // loop_header_branch
      %20 = sbr.rel (%p18) target = $region8
    $region5: #{tpu_custom_call.1} parent=1 // loop_body
      %s22 = ssub.s32 %s17, 1
      %s23 = ssub.s32 %s17, 2
      %s24 = sadd.s32 %s17, 1
      %s25 = ssub.s32 %s17, %s24
      %p26 = scmp.eq.s32.totalorder %s25, 0
      %s28 = sadd.s32 %s27, 1
      %s29 = scalar_select %p26, %s27, %s28
      %p32 = pneg %p26
      %p33 = scmp.eq.s32.totalorder %s17, 1
      %p34 = por %p32, %p33
      %p35 = scmp.ne.s32.totalorder %s27, %s30
      %p36 = scmp.eq.s32.totalorder %s17, 0
      %p37 = por %p35, %p36
      %p38 = scmp.ne.s32.totalorder %s27, %s30
      %p39 = scmp.eq.s32.totalorder %s22, 1
      %p40 = por %p38, %p39
      %p41 = scmp.ne.s32.totalorder %s30, %s31
      %p42 = scmp.eq.s32.totalorder %s22, 0
      %p43 = por %p41, %p42
      %p44 = scmp.ne.s32.totalorder %s30, %s31
      %p45 = scmp.eq.s32.totalorder %s23, 1
      %p46 = por %p44, %p45
      %p48 = scmp.ne.s32.totalorder %s31, %s47
      %p49 = scmp.eq.s32.totalorder %s23, 0
      %p50 = por %p48, %p49
      %s52 = sadd.s32 %s51, 1
      %p55 = scmp.eq.s32.totalorder %s17, 1
      %p56 = scmp.ne.s32.totalorder %s51, %s53
      %p57 = scmp.eq.s32.totalorder %s17, 0
      %p58 = por %p56, %p57
      %p59 = scmp.ne.s32.totalorder %s51, %s53
      %p60 = scmp.eq.s32.totalorder %s22, 1
      %p61 = por %p59, %p60
      %p62 = scmp.ne.s32.totalorder %s53, %s54
      %p63 = scmp.eq.s32.totalorder %s22, 0
      %p64 = por %p62, %p63
      %p65 = scmp.ne.s32.totalorder %s53, %s54
      %p66 = scmp.eq.s32.totalorder %s23, 1
      %p67 = por %p65, %p66
      %p69 = scmp.ne.s32.totalorder %s54, %s68
      %p70 = scmp.eq.s32.totalorder %s23, 0
      %p71 = por %p69, %p70
      %s73 = sadd.s32 %s72, 1
      %p76 = scmp.eq.s32.totalorder %s17, 1
      %p77 = scmp.ne.s32.totalorder %s72, %s74
      %p78 = scmp.eq.s32.totalorder %s17, 0
      %p79 = por %p77, %p78
      %p80 = scmp.ne.s32.totalorder %s72, %s74
      %p81 = scmp.eq.s32.totalorder %s22, 1
      %p82 = por %p80, %p81
      %p83 = scmp.ne.s32.totalorder %s74, %s75
      %p84 = scmp.eq.s32.totalorder %s22, 0
      %p85 = por %p83, %p84
      %p86 = scmp.ne.s32.totalorder %s74, %s75
      %p87 = scmp.eq.s32.totalorder %s23, 1
      %p88 = por %p86, %p87
      %p90 = scmp.ne.s32.totalorder %s75, %s89
      %p91 = scmp.eq.s32.totalorder %s23, 0
      %p92 = por %p90, %p91
      %s94 = sadd.s32 %s93, 1
      %p97 = scmp.eq.s32.totalorder %s17, 1
      %p98 = scmp.ne.s32.totalorder %s93, %s95
      %p99 = scmp.eq.s32.totalorder %s17, 0
      %p100 = por %p98, %p99
      %p101 = scmp.ne.s32.totalorder %s93, %s95
      %p102 = scmp.eq.s32.totalorder %s22, 1
      %p103 = por %p101, %p102
      %p104 = scmp.ne.s32.totalorder %s95, %s96
      %p105 = scmp.eq.s32.totalorder %s22, 0
      %p106 = por %p104, %p105
      %p107 = scmp.ne.s32.totalorder %s95, %s96
      %p108 = scmp.eq.s32.totalorder %s23, 1
      %p109 = por %p107, %p108
      %p111 = scmp.ne.s32.totalorder %s96, %s110
      %p112 = scmp.eq.s32.totalorder %s23, 0
      %p113 = por %p111, %p112
      %s114 = ssub.s32 %s17, %s24
      %p115 = scmp.eq.s32.totalorder %s114, 0
      %s117 = sadd.s32 %s116, 1
      %s118 = scalar_select %p115, %s116, %s117
      %p121 = pneg %p115
      %p122 = scmp.eq.s32.totalorder %s17, 1
      %p123 = por %p121, %p122
      %p124 = scmp.ne.s32.totalorder %s116, %s119
      %p125 = scmp.eq.s32.totalorder %s17, 0
      %p126 = por %p124, %p125
      %p127 = scmp.ne.s32.totalorder %s116, %s119
      %p128 = scmp.eq.s32.totalorder %s22, 1
      %p129 = por %p127, %p128
      %p130 = scmp.ne.s32.totalorder %s119, %s120
      %p131 = scmp.eq.s32.totalorder %s22, 0
      %p132 = por %p130, %p131
      %p133 = scmp.ne.s32.totalorder %s119, %s120
      %p134 = scmp.eq.s32.totalorder %s23, 1
      %p135 = por %p133, %p134
      %p137 = scmp.ne.s32.totalorder %s120, %s136
      %p138 = scmp.eq.s32.totalorder %s23, 0
      %p139 = por %p137, %p138
      %p140 = scmp.le.s32.totalorder 1, %s17
      %p141 = scmp.lt.s32.totalorder %s17, 3
      %p142 = pnand %p140, %p141
      %p143 = pneg %p142
      // Predicated region
      $region9: #{tpu_custom_call.1} parent=5 // pred_check
        _
      $region10: #{tpu_custom_call.1} parent=5 // pred_check_branch
        %145 = sbr.rel (%p142) target = $region12
      $region11: #{tpu_custom_call.1} parent=5 // pred_region
        %s146 = ssub.s32 %s17, 1
        // Predicated region
        $region13: #{tpu_custom_call.1} parent=11 // pred_check
          %p147 = pneg %p64
        $region14: #{tpu_custom_call.1} parent=11 // pred_check_branch
          %149 = sbr.rel (%p147) target = $region16
        $region15: #{tpu_custom_call.1} parent=11 // pred_region
          %s151 = ssub.s32 2048, 2048
          %152 = vsyncadd [#allocation8], %s151
          %s153 = sshll.u32 [#allocation7], 4
          %s154 = int_to_ptr.vmem [resolvable:$true] %s153
          %159 = dma.hbm_to_vmem [thread:$0]  %s1, 2048, %s154, [#allocation8], 512, 512, 32
        $region16: #{tpu_custom_call.1} parent=11 // pred_fallthru
          _
        // Predicated region
        $region17: #{tpu_custom_call.1} parent=11 // pred_check
          %p160 = pneg %p85
        $region18: #{tpu_custom_call.1} parent=11 // pred_check_branch
          %162 = sbr.rel (%p160) target = $region20
        $region19: #{tpu_custom_call.1} parent=11 // pred_region
          _
        $region20: #{tpu_custom_call.1} parent=11 // pred_fallthru
          _
        // Predicated region
        $region21: #{tpu_custom_call.1} parent=11 // pred_check
          %p163 = pneg %p106
        $region22: #{tpu_custom_call.1} parent=11 // pred_check_branch
          %165 = sbr.rel (%p163) target = $region24
        $region23: #{tpu_custom_call.1} parent=11 // pred_region
          _
        $region24: #{tpu_custom_call.1} parent=11 // pred_fallthru
          _
      $region12: #{tpu_custom_call.1} parent=5 // pred_fallthru
        _
      %p166 = scmp.lt.s32.totalorder %s17, 2
      // Predicated region
      $region25: #{tpu_custom_call.1} parent=5 // pred_check
        %p167 = pneg %p166
      $region26: #{tpu_custom_call.1} parent=5 // pred_check_branch
        %169 = sbr.rel (%p167) target = $region28
      $region27: #{tpu_custom_call.1} parent=5 // pred_region
        // Predicated region
        $region29: #{tpu_custom_call.1} parent=27 // pred_check
          %p170 = pneg %p37
        $region30: #{tpu_custom_call.1} parent=27 // pred_check_branch
          %172 = sbr.rel (%p170) target = $region32
        $region31: #{tpu_custom_call.1} parent=27 // pred_region
          %s173 = sand.u32 %s27, 1
          %s174 = scalar_lea.sflag [#allocation5], %s173
          %s175 = sand.u32 %s27, 1
          %s176 = smul.addr %s175, 16
          %s177 = scalar_lea.vmem [#allocation4], %s176
          %s179 = ssub.s32 256, 256
          %180 = vsyncadd %s174, %s179
          %s181 = smul.addr %s17, 4
          %s182 = smul.addr %s181, 64
          %s183 = scalar_lea.hbm %s0, %s182
          %s185 = sshll.u32 %s177, 4
          %s186 = int_to_ptr.vmem [resolvable:$true] %s185
          %188 = dma.hbm_to_vmem [thread:$0]  %s183, 256, %s186, %s174
        $region32: #{tpu_custom_call.1} parent=27 // pred_fallthru
          _
      $region28: #{tpu_custom_call.1} parent=5 // pred_fallthru
        _
      %p189 = scmp.le.s32.totalorder 1, %s17
      %p190 = scmp.lt.s32.totalorder %s17, 3
      %p191 = pnand %p189, %p190
      %p192 = pneg %p191
      // Predicated region
      $region33: #{tpu_custom_call.1} parent=5 // pred_check
        _
      $region34: #{tpu_custom_call.1} parent=5 // pred_check_branch
        %194 = sbr.rel (%p191) target = $region36
      $region35: #{tpu_custom_call.1} parent=5 // pred_region
        %s195 = ssub.s32 %s17, 1
        %s196 = sand.u32 %s30, 1
        %s197 = scalar_lea.sflag [#allocation5], %s196
        %s198 = sand.u32 %s30, 1
        %s199 = smul.addr %s198, 16
        %s200 = scalar_lea.vmem [#allocation4], %s199
        // Predicated region
        $region37: #{tpu_custom_call.1} parent=35 // pred_check
          %p201 = pneg %p43
        $region38: #{tpu_custom_call.1} parent=35 // pred_check_branch
          %203 = sbr.rel (%p201) target = $region40
        $region39: #{tpu_custom_call.1} parent=35 // pred_region
          %204 = dma.done %s197, 256
        $region40: #{tpu_custom_call.1} parent=35 // pred_fallthru
          _
        // Predicated region
        $region41: #{tpu_custom_call.1} parent=35 // pred_check
          %p205 = pneg %p64
        $region42: #{tpu_custom_call.1} parent=35 // pred_check_branch
          %207 = sbr.rel (%p205) target = $region44
        $region43: #{tpu_custom_call.1} parent=35 // pred_region
          %208 = dma.done [#allocation8], 2048
        $region44: #{tpu_custom_call.1} parent=35 // pred_fallthru
          _
        %s209 = sand.u32 %s30, 1
        %s210 = scalar_lea.sflag [#allocation5], %s209
        %s211 = sand.u32 %s30, 1
        %s212 = smul.addr %s211, 16
        %s213 = scalar_lea.vmem [#allocation4], %s212
        %p214 = pneg %p43
        %p215 = pneg %p40
        %p216 = pneg %p64
        %p217 = pneg %p61
        %p218 = pneg %p85
        %p219 = pneg %p82
        %p220 = pneg %p106
        %p221 = pneg %p103
        %p222 = pneg %p132
        %p223 = pneg %p129
        %s224 = sand.u32 %s119, 1
        %s225 = scalar_lea.sflag [#allocation6], %s224
        %s226 = sand.u32 %s119, 1
        %s227 = smul.addr %s226, 32
        %s228 = scalar_lea.vmem [#allocation9], %s227
        %229 = vst [vmem:[#allocation2] sm:$0xf] 0.0
        %230 = vst [vmem:[#allocation2 + $0x14] sm:$0xf] 0.0
        %231 = vst [vmem:[#allocation3 + $0x1a0] sm:$0xf0] 0.0
        %232 = vst [vmem:[#allocation3 + $0x1a8] sm:$0xf0] 0.0
        %233 = vst [vmem:[#allocation3 + $0x1b0] sm:$0xf0] 0.0
        %234 = vst [vmem:[#allocation3 + $0x1b8] sm:$0xf0] 0.0
        %v235 = vld [vmem:[%s200] sm:$0xff]
        %v236 = vld [vmem:[%s200 + $0x8] sm:$0xff]
        %237 = vst [vmem:[#allocation2 + $0x4] sm:$0xff] %v235
        %238 = vst [vmem:[#allocation2 + $0xc] sm:$0xff] %v236
        %v239 = vld [vmem:[#allocation2] sm:$0xff]
        %v240 = vld [vmem:[#allocation2 + $0x8] sm:$0xff]
        %v241 = vld [vmem:[#allocation2 + $0x10] sm:$0xf]
        %v242 = vld [vmem:[#allocation7] ss:$8 sm:$0xf]
        %v244 = vlaneseq
        %v245 = vshrl.u32 %v244, 7
        %v246 = vsub.s32 0, %v245
        %v247 = vrot.slane %v242, %v246
        %v248 = vlaneseq
        %v249 = vshrl.u32 %v248, 7
        %v250 = vsub.s32 1, %v249
        %v251 = vrot.slane %v242, %v250
        %v252 = vlaneseq
        %v253 = vshrl.u32 %v252, 7
        %v254 = vsub.s32 2, %v253
        %v255 = vrot.slane %v242, %v254
        %v256 = vlaneseq
        %v257 = vshrl.u32 %v256, 7
        %v258 = vsub.s32 3, %v257
        %v259 = vrot.slane %v242, %v258
        %v260 = vcombine.low %v247, %v251
        %v261 = vcombine.low %v255, %v259
        %262 = vrot.lane.b32.xlu0 %v260, 55
        %v263 = vpop.permute.xlu0 %262
        %264 = vrot.lane.b32.xlu0 %v261, 55
        %v265 = vpop.permute.xlu0 %264
        %v266 = vrot.slane %v263, 4
        %v267 = vrot.slane %v265, 4
        %vm268 = vcmask 449536
        %v269 = vsel %vm268, %v266, %v263
        %vm270 = vcmask 1043456
        %v271 = vsel %vm270, %v266, %v267
        %v272 = vsel %vm268, %v271, %v265
        %v276 = vmul.f32 %v239, %v269
        %v277 = vmul.f32 %v240, %v272
        %v278 = vmul.f32 %v241, %v267
        %v282 = vcombine.high %v276, %v276
        %v283 = vcombine.high %v277, %v277
        %284 = vrot.lane.b32.xlu0 %v276, 73
        %v285 = vpop.permute.xlu0 %284
        %286 = vrot.lane.b32.xlu0 %v282, 73
        %v287 = vpop.permute.xlu0 %286
        %288 = vrot.lane.b32.xlu0 %v277, 73
        %v289 = vpop.permute.xlu0 %288
        %290 = vrot.lane.b32.xlu0 %v283, 73
        %v291 = vpop.permute.xlu0 %290
        %292 = vrot.lane.b32.xlu0 %v278, 73
        %v293 = vpop.permute.xlu0 %292
        %vm294 = vcmask 596992
        %v295 = vsel %vm294, %v285, %v287
        %v296 = vsel %vm294, %v287, %v289
        %v297 = vsel %vm294, %v289, %v291
        %v298 = vsel %vm294, %v291, %v293
        %303 = vst [vmem:[#allocation3] sm:$0xf] %v295
        %304 = vst [vmem:[#allocation3 + $0x8] sm:$0xf] %v296
        %305 = vst [vmem:[#allocation3 + $0x10] sm:$0xf] %v297
        %306 = vst [vmem:[#allocation3 + $0x18] sm:$0xf] %v298
        %v307 = vld [vmem:[#allocation2] sm:$0xff]
        %v308 = vld [vmem:[#allocation2 + $0x8] sm:$0xff]
        %v309 = vld [vmem:[#allocation2 + $0x10] sm:$0xf]
        %s310 = scalar_lea.vmem [#allocation7], 1
        %v311 = vld [vmem:[%s310] ss:$8 sm:$0xf]
        %v313 = vlaneseq
        %v314 = vshrl.u32 %v313, 7
        %v315 = vsub.s32 0, %v314
        %v316 = vrot.slane %v311, %v315
        %v317 = vlaneseq
        %v318 = vshrl.u32 %v317, 7
        %v319 = vsub.s32 1, %v318
        %v320 = vrot.slane %v311, %v319
        %v321 = vlaneseq
        %v322 = vshrl.u32 %v321, 7
        %v323 = vsub.s32 2, %v322
        %v324 = vrot.slane %v311, %v323
        %v325 = vlaneseq
        %v326 = vshrl.u32 %v325, 7
        %v327 = vsub.s32 3, %v326
        %v328 = vrot.slane %v311, %v327
        %v329 = vcombine.low %v316, %v320
        %v330 = vcombine.low %v324, %v328
        %331 = vrot.lane.b32.xlu0 %v329, 56
        %v332 = vpop.permute.xlu0 %331
        %333 = vrot.lane.b32.xlu0 %v330, 56
        %v334 = vpop.permute.xlu0 %333
        %v335 = vrot.slane %v332, 4
        %v336 = vrot.slane %v334, 4
        %vm337 = vcmask 457728
        %v338 = vsel %vm337, %v335, %v332
        %v339 = vsel %vm270, %v335, %v336
        %v340 = vsel %vm337, %v339, %v334
        %v344 = vmul.f32 %v307, %v338
        %v345 = vmul.f32 %v308, %v340
        %v346 = vmul.f32 %v309, %v336
        %v350 = vcombine.low %v344, %v344
        %v351 = vcombine.low %v345, %v345
        %v352 = vcombine.low %v346, %v346
        %353 = vrot.lane.b32.xlu0 %v350, 72
        %v354 = vpop.permute.xlu0 %353
        %355 = vrot.lane.b32.xlu0 %v344, 72
        %v356 = vpop.permute.xlu0 %355
        %357 = vrot.lane.b32.xlu0 %v351, 72
        %v358 = vpop.permute.xlu0 %357
        %359 = vrot.lane.b32.xlu0 %v345, 72
        %v360 = vpop.permute.xlu0 %359
        %361 = vrot.lane.b32.xlu0 %v352, 72
        %v362 = vpop.permute.xlu0 %361
        %vm363 = vcmask 588800
        %v364 = vsel %vm363, %v354, %v356
        %v365 = vsel %vm363, %v356, %v358
        %v366 = vsel %vm363, %v358, %v360
        %v367 = vsel %vm363, %v360, %v362
        %372 = vst [vmem:[#allocation3] sm:$0xf0] %v364
        %373 = vst [vmem:[#allocation3 + $0x8] sm:$0xf0] %v365
        %374 = vst [vmem:[#allocation3 + $0x10] sm:$0xf0] %v366
        %375 = vst [vmem:[#allocation3 + $0x18] sm:$0xf0] %v367
        %v376 = vld [vmem:[#allocation2] sm:$0xff]
        %v377 = vld [vmem:[#allocation2 + $0x8] sm:$0xff]
        %v378 = vld [vmem:[#allocation2 + $0x10] sm:$0xf]
        %s379 = scalar_lea.vmem [#allocation7], 2
        %v380 = vld [vmem:[%s379] ss:$8 sm:$0xf]
        %v382 = vlaneseq
        %v383 = vshrl.u32 %v382, 7
        %v384 = vsub.s32 0, %v383
        %v385 = vrot.slane %v380, %v384
        %v386 = vlaneseq
        %v387 = vshrl.u32 %v386, 7
        %v388 = vsub.s32 1, %v387
        %v389 = vrot.slane %v380, %v388
        %v390 = vlaneseq
        %v391 = vshrl.u32 %v390, 7
        %v392 = vsub.s32 2, %v391
        %v393 = vrot.slane %v380, %v392
        %v394 = vlaneseq
        %v395 = vshrl.u32 %v394, 7
        %v396 = vsub.s32 3, %v395
        %v397 = vrot.slane %v380, %v396
        %v398 = vcombine.low %v385, %v389
        %v399 = vcombine.low %v393, %v397
        %400 = vrot.lane.b32.xlu0 %v398, 57
        %v401 = vpop.permute.xlu0 %400
        %402 = vrot.lane.b32.xlu0 %v399, 57
        %v403 = vpop.permute.xlu0 %402
        %v404 = vrot.slane %v401, 4
        %v405 = vrot.slane %v403, 4
        %vm406 = vcmask 465920
        %v407 = vsel %vm406, %v404, %v401
        %v408 = vsel %vm270, %v404, %v405
        %v409 = vsel %vm406, %v408, %v403
        %v413 = vmul.f32 %v376, %v407
        %v414 = vmul.f32 %v377, %v409
        %v415 = vmul.f32 %v378, %v405
        %v419 = vcombine.high %v413, %v413
        %v420 = vcombine.high %v414, %v414
        %421 = vrot.lane.b32.xlu0 %v413, 71
        %v422 = vpop.permute.xlu0 %421
        %423 = vrot.lane.b32.xlu0 %v419, 71
        %v424 = vpop.permute.xlu0 %423
        %425 = vrot.lane.b32.xlu0 %v414, 71
        %v426 = vpop.permute.xlu0 %425
        %427 = vrot.lane.b32.xlu0 %v420, 71
        %v428 = vpop.permute.xlu0 %427
        %429 = vrot.lane.b32.xlu0 %v415, 71
        %v430 = vpop.permute.xlu0 %429
        %vm431 = vcmask 580608
        %v432 = vsel %vm431, %v422, %v424
        %v433 = vsel %vm431, %v424, %v426
        %v434 = vsel %vm431, %v426, %v428
        %v435 = vsel %vm431, %v428, %v430
        %440 = vst [vmem:[#allocation3 + $0x20] sm:$0xf] %v432
        %441 = vst [vmem:[#allocation3 + $0x28] sm:$0xf] %v433
        %442 = vst [vmem:[#allocation3 + $0x30] sm:$0xf] %v434
        %443 = vst [vmem:[#allocation3 + $0x38] sm:$0xf] %v435
        %v444 = vld [vmem:[#allocation2] sm:$0xff]
        %v445 = vld [vmem:[#allocation2 + $0x8] sm:$0xff]
        %v446 = vld [vmem:[#allocation2 + $0x10] sm:$0xf]
        %s447 = scalar_lea.vmem [#allocation7], 3
        %v448 = vld [vmem:[%s447] ss:$8 sm:$0xf]
        %v450 = vlaneseq
        %v451 = vshrl.u32 %v450, 7
        %v452 = vsub.s32 0, %v451
        %v453 = vrot.slane %v448, %v452
        %v454 = vlaneseq
        %v455 = vshrl.u32 %v454, 7
        %v456 = vsub.s32 1, %v455
        %v457 = vrot.slane %v448, %v456
        %v458 = vlaneseq
        %v459 = vshrl.u32 %v458, 7
        %v460 = vsub.s32 2, %v459
        %v461 = vrot.slane %v448, %v460
        %v462 = vlaneseq
        %v463 = vshrl.u32 %v462, 7
        %v464 = vsub.s32 3, %v463
        %v465 = vrot.slane %v448, %v464
        %v466 = vcombine.low %v453, %v457
        %v467 = vcombine.low %v461, %v465
        %468 = vrot.lane.b32.xlu0 %v466, 63
        %v469 = vpop.permute.xlu0 %468
        %470 = vrot.lane.b32.xlu0 %v467, 63
        %v471 = vpop.permute.xlu0 %470
        %v472 = vrot.slane %v469, 4
        %v473 = vrot.slane %v471, 4
        %vm474 = vcmask 515072
        %v475 = vsel %vm474, %v472, %v469
        %v476 = vsel %vm270, %v472, %v473
        %v477 = vsel %vm474, %v476, %v471
        %v481 = vmul.f32 %v444, %v475
        %v482 = vmul.f32 %v445, %v477
        %v483 = vmul.f32 %v446, %v473
        %v487 = vcombine.low %v481, %v481
        %v488 = vcombine.low %v482, %v482
        %v489 = vcombine.low %v483, %v483
        %490 = vrot.lane.b32.xlu0 %v487, 65
        %v491 = vpop.permute.xlu0 %490
        %492 = vrot.lane.b32.xlu0 %v481, 65
        %v493 = vpop.permute.xlu0 %492
        %494 = vrot.lane.b32.xlu0 %v488, 65
        %v495 = vpop.permute.xlu0 %494
        %496 = vrot.lane.b32.xlu0 %v482, 65
        %v497 = vpop.permute.xlu0 %496
        %498 = vrot.lane.b32.xlu0 %v489, 65
        %v499 = vpop.permute.xlu0 %498
        %vm500 = vcmask 531456
        %v501 = vsel %vm500, %v491, %v493
        %v502 = vsel %vm500, %v493, %v495
        %v503 = vsel %vm500, %v495, %v497
        %v504 = vsel %vm500, %v497, %v499
        %509 = vst [vmem:[#allocation3 + $0x20] sm:$0xf0] %v501
        %510 = vst [vmem:[#allocation3 + $0x28] sm:$0xf0] %v502
        %511 = vst [vmem:[#allocation3 + $0x30] sm:$0xf0] %v503
        %512 = vst [vmem:[#allocation3 + $0x38] sm:$0xf0] %v504
        %v513 = vld [vmem:[#allocation2] sm:$0xff]
        %v514 = vld [vmem:[#allocation2 + $0x8] sm:$0xff]
        %v515 = vld [vmem:[#allocation2 + $0x10] sm:$0xf]
        %s516 = scalar_lea.vmem [#allocation7], 4
        %v517 = vld [vmem:[%s516] ss:$8 sm:$0xf]
        %v519 = vlaneseq
        %v520 = vshrl.u32 %v519, 7
        %v521 = vsub.s32 0, %v520
        %v522 = vrot.slane %v517, %v521
        %v523 = vlaneseq
        %v524 = vshrl.u32 %v523, 7
        %v525 = vsub.s32 1, %v524
        %v526 = vrot.slane %v517, %v525
        %v527 = vlaneseq
        %v528 = vshrl.u32 %v527, 7
        %v529 = vsub.s32 2, %v528
        %v530 = vrot.slane %v517, %v529
        %v531 = vlaneseq
        %v532 = vshrl.u32 %v531, 7
        %v533 = vsub.s32 3, %v532
        %v534 = vrot.slane %v517, %v533
        %v535 = vcombine.low %v522, %v526
        %v536 = vcombine.low %v530, %v534
        %537 = vrot.lane.b32.xlu0 %v535, 64
        %v538 = vpop.permute.xlu0 %537
        %539 = vrot.lane.b32.xlu0 %v536, 64
        %v540 = vpop.permute.xlu0 %539
        %v541 = vrot.slane %v538, 4
        %v542 = vrot.slane %v540, 4
        %vm543 = vcmask 523264
        %v544 = vsel %vm543, %v541, %v538
        %v545 = vsel %vm270, %v541, %v542
        %v546 = vsel %vm543, %v545, %v540
        %v550 = vmul.f32 %v513, %v544
        %v551 = vmul.f32 %v514, %v546
        %v552 = vmul.f32 %v515, %v542
        %v556 = vcombine.high %v550, %v550
        %v557 = vcombine.high %v551, %v551
        %558 = vrot.lane.b32.xlu0 %v550, 64
        %v559 = vpop.permute.xlu0 %558
        %560 = vrot.lane.b32.xlu0 %v556, 64
        %v561 = vpop.permute.xlu0 %560
        %562 = vrot.lane.b32.xlu0 %v551, 64
        %v563 = vpop.permute.xlu0 %562
        %564 = vrot.lane.b32.xlu0 %v557, 64
        %v565 = vpop.permute.xlu0 %564
        %566 = vrot.lane.b32.xlu0 %v552, 64
        %v567 = vpop.permute.xlu0 %566
        %v568 = vsel %vm543, %v559, %v561
        %v569 = vsel %vm543, %v561, %v563
        %v570 = vsel %vm543, %v563, %v565
        %v571 = vsel %vm543, %v565, %v567
        %576 = vst [vmem:[#allocation3 + $0x40] sm:$0xf] %v568
        %577 = vst [vmem:[#allocation3 + $0x48] sm:$0xf] %v569
        %578 = vst [vmem:[#allocation3 + $0x50] sm:$0xf] %v570
        %579 = vst [vmem:[#allocation3 + $0x58] sm:$0xf] %v571
        %v580 = vld [vmem:[#allocation2] sm:$0xff]
        %v581 = vld [vmem:[#allocation2 + $0x8] sm:$0xff]
        %v582 = vld [vmem:[#allocation2 + $0x10] sm:$0xf]
        %s583 = scalar_lea.vmem [#allocation7], 5
        %v584 = vld [vmem:[%s583] ss:$8 sm:$0xf]
        %v586 = vlaneseq
        %v587 = vshrl.u32 %v586, 7
        %v588 = vsub.s32 0, %v587
        %v589 = vrot.slane %v584, %v588
        %v590 = vlaneseq
        %v591 = vshrl.u32 %v590, 7
        %v592 = vsub.s32 1, %v591
        %v593 = vrot.slane %v584, %v592
        %v594 = vlaneseq
        %v595 = vshrl.u32 %v594, 7
        %v596 = vsub.s32 2, %v595
        %v597 = vrot.slane %v584, %v596
        %v598 = vlaneseq
        %v599 = vshrl.u32 %v598, 7
        %v600 = vsub.s32 3, %v599
        %v601 = vrot.slane %v584, %v600
        %v602 = vcombine.low %v589, %v593
        %v603 = vcombine.low %v597, %v601
        %604 = vrot.lane.b32.xlu0 %v602, 65
        %v605 = vpop.permute.xlu0 %604
        %606 = vrot.lane.b32.xlu0 %v603, 65
        %v607 = vpop.permute.xlu0 %606
        %v608 = vrot.slane %v605, 4
        %v609 = vrot.slane %v607, 4
        %v610 = vsel %vm500, %v608, %v605
        %v611 = vsel %vm270, %v608, %v609
        %v612 = vsel %vm500, %v611, %v607
        %v616 = vmul.f32 %v580, %v610
        %v617 = vmul.f32 %v581, %v612
        %v618 = vmul.f32 %v582, %v609
        %v622 = vcombine.low %v616, %v616
        %v623 = vcombine.low %v617, %v617
        %v624 = vcombine.low %v618, %v618
        %625 = vrot.lane.b32.xlu0 %v622, 63
        %v626 = vpop.permute.xlu0 %625
        %627 = vrot.lane.b32.xlu0 %v616, 63
        %v628 = vpop.permute.xlu0 %627
        %629 = vrot.lane.b32.xlu0 %v623, 63
        %v630 = vpop.permute.xlu0 %629
        %631 = vrot.lane.b32.xlu0 %v617, 63
        %v632 = vpop.permute.xlu0 %631
        %633 = vrot.lane.b32.xlu0 %v624, 63
        %v634 = vpop.permute.xlu0 %633
        %v635 = vsel %vm474, %v626, %v628
        %v636 = vsel %vm474, %v628, %v630
        %v637 = vsel %vm474, %v630, %v632
        %v638 = vsel %vm474, %v632, %v634
        %643 = vst [vmem:[#allocation3 + $0x40] sm:$0xf0] %v635
        %644 = vst [vmem:[#allocation3 + $0x48] sm:$0xf0] %v636
        %645 = vst [vmem:[#allocation3 + $0x50] sm:$0xf0] %v637
        %646 = vst [vmem:[#allocation3 + $0x58] sm:$0xf0] %v638
        %v647 = vld [vmem:[#allocation2] sm:$0xff]
        %v648 = vld [vmem:[#allocation2 + $0x8] sm:$0xff]
        %v649 = vld [vmem:[#allocation2 + $0x10] sm:$0xf]
        %s650 = scalar_lea.vmem [#allocation7], 6
        %v651 = vld [vmem:[%s650] ss:$8 sm:$0xf]
        %v653 = vlaneseq
        %v654 = vshrl.u32 %v653, 7
        %v655 = vsub.s32 0, %v654
        %v656 = vrot.slane %v651, %v655
        %v657 = vlaneseq
        %v658 = vshrl.u32 %v657, 7
        %v659 = vsub.s32 1, %v658
        %v660 = vrot.slane %v651, %v659
        %v661 = vlaneseq
        %v662 = vshrl.u32 %v661, 7
        %v663 = vsub.s32 2, %v662
        %v664 = vrot.slane %v651, %v663
        %v665 = vlaneseq
        %v666 = vshrl.u32 %v665, 7
        %v667 = vsub.s32 3, %v666
        %v668 = vrot.slane %v651, %v667
        %v669 = vcombine.low %v656, %v660
        %v670 = vcombine.low %v664, %v668
        %671 = vrot.lane.b32.xlu0 %v669, 71
        %v672 = vpop.permute.xlu0 %671
        %673 = vrot.lane.b32.xlu0 %v670, 71
        %v674 = vpop.permute.xlu0 %673
        %v675 = vrot.slane %v672, 4
        %v676 = vrot.slane %v674, 4
        %v677 = vsel %vm431, %v675, %v672
        %v678 = vsel %vm270, %v675, %v676
        %v679 = vsel %vm431, %v678, %v674
        %v683 = vmul.f32 %v647, %v677
        %v684 = vmul.f32 %v648, %v679
        %v685 = vmul.f32 %v649, %v676
        %v689 = vcombine.high %v683, %v683
        %v690 = vcombine.high %v684, %v684
        %691 = vrot.lane.b32.xlu0 %v683, 57
        %v692 = vpop.permute.xlu0 %691
        %693 = vrot.lane.b32.xlu0 %v689, 57
        %v694 = vpop.permute.xlu0 %693
        %695 = vrot.lane.b32.xlu0 %v684, 57
        %v696 = vpop.permute.xlu0 %695
        %697 = vrot.lane.b32.xlu0 %v690, 57
        %v698 = vpop.permute.xlu0 %697
        %699 = vrot.lane.b32.xlu0 %v685, 57
        %v700 = vpop.permute.xlu0 %699
        %v701 = vsel %vm406, %v692, %v694
        %v702 = vsel %vm406, %v694, %v696
        %v703 = vsel %vm406, %v696, %v698
        %v704 = vsel %vm406, %v698, %v700
        %709 = vst [vmem:[#allocation3 + $0x60] sm:$0xf] %v701
        %710 = vst [vmem:[#allocation3 + $0x68] sm:$0xf] %v702
        %711 = vst [vmem:[#allocation3 + $0x70] sm:$0xf] %v703
        %712 = vst [vmem:[#allocation3 + $0x78] sm:$0xf] %v704
        %v713 = vld [vmem:[#allocation2] sm:$0xff]
        %v714 = vld [vmem:[#allocation2 + $0x8] sm:$0xff]
        %v715 = vld [vmem:[#allocation2 + $0x10] sm:$0xf]
        %s716 = scalar_lea.vmem [#allocation7], 7
        %v717 = vld [vmem:[%s716] ss:$8 sm:$0xf]
        %v719 = vlaneseq
        %v720 = vshrl.u32 %v719, 7
        %v721 = vsub.s32 0, %v720
        %v722 = vrot.slane %v717, %v721
        %v723 = vlaneseq
        %v724 = vshrl.u32 %v723, 7
        %v725 = vsub.s32 1, %v724
        %v726 = vrot.slane %v717, %v725
        %v727 = vlaneseq
        %v728 = vshrl.u32 %v727, 7
        %v729 = vsub.s32 2, %v728
        %v730 = vrot.slane %v717, %v729
        %v731 = vlaneseq
        %v732 = vshrl.u32 %v731, 7
        %v733 = vsub.s32 3, %v732
        %v734 = vrot.slane %v717, %v733
        %v735 = vcombine.low %v722, %v726
        %v736 = vcombine.low %v730, %v734
        %737 = vrot.lane.b32.xlu0 %v735, 72
        %v738 = vpop.permute.xlu0 %737
        %739 = vrot.lane.b32.xlu0 %v736, 72
        %v740 = vpop.permute.xlu0 %739
        %v741 = vrot.slane %v738, 4
        %v742 = vrot.slane %v740, 4
        %v743 = vsel %vm363, %v741, %v738
        %v744 = vsel %vm270, %v741, %v742
        %v745 = vsel %vm363, %v744, %v740
        %v749 = vmul.f32 %v713, %v743
        %v750 = vmul.f32 %v714, %v745
        %v751 = vmul.f32 %v715, %v742
        %v755 = vcombine.low %v749, %v749
        %v756 = vcombine.low %v750, %v750
        %v757 = vcombine.low %v751, %v751
        %758 = vrot.lane.b32.xlu0 %v755, 56
        %v759 = vpop.permute.xlu0 %758
        %760 = vrot.lane.b32.xlu0 %v749, 56
        %v761 = vpop.permute.xlu0 %760
        %762 = vrot.lane.b32.xlu0 %v756, 56
        %v763 = vpop.permute.xlu0 %762
        %764 = vrot.lane.b32.xlu0 %v750, 56
        %v765 = vpop.permute.xlu0 %764
        %766 = vrot.lane.b32.xlu0 %v757, 56
        %v767 = vpop.permute.xlu0 %766
        %v768 = vsel %vm337, %v759, %v761
        %v769 = vsel %vm337, %v761, %v763
        %v770 = vsel %vm337, %v763, %v765
        %v771 = vsel %vm337, %v765, %v767
        %776 = vst [vmem:[#allocation3 + $0x60] sm:$0xf0] %v768
        %777 = vst [vmem:[#allocation3 + $0x68] sm:$0xf0] %v769
        %778 = vst [vmem:[#allocation3 + $0x70] sm:$0xf0] %v770
        %779 = vst [vmem:[#allocation3 + $0x78] sm:$0xf0] %v771
        %v780 = vld [vmem:[#allocation2] sm:$0xff]
        %v781 = vld [vmem:[#allocation2 + $0x8] sm:$0xff]
        %v782 = vld [vmem:[#allocation2 + $0x10] sm:$0xf]
        %s783 = scalar_lea.vmem [#allocation7], 32
        %v784 = vld [vmem:[%s783] ss:$8 sm:$0xf]
        %v786 = vlaneseq
        %v787 = vshrl.u32 %v786, 7
        %v788 = vsub.s32 0, %v787
        %v789 = vrot.slane %v784, %v788
        %v790 = vlaneseq
        %v791 = vshrl.u32 %v790, 7
        %v792 = vsub.s32 1, %v791
        %v793 = vrot.slane %v784, %v792
        %v794 = vlaneseq
        %v795 = vshrl.u32 %v794, 7
        %v796 = vsub.s32 2, %v795
        %v797 = vrot.slane %v784, %v796
        %v798 = vlaneseq
        %v799 = vshrl.u32 %v798, 7
        %v800 = vsub.s32 3, %v799
        %v801 = vrot.slane %v784, %v800
        %v802 = vcombine.low %v789, %v793
        %v803 = vcombine.low %v797, %v801
        %804 = vrot.lane.b32.xlu0 %v802, 73
        %v805 = vpop.permute.xlu0 %804
        %806 = vrot.lane.b32.xlu0 %v803, 73
        %v807 = vpop.permute.xlu0 %806
        %v808 = vrot.slane %v805, 4
        %v809 = vrot.slane %v807, 4
        %v810 = vsel %vm294, %v808, %v805
        %v811 = vsel %vm270, %v808, %v809
        %v812 = vsel %vm294, %v811, %v807
        %v816 = vmul.f32 %v780, %v810
        %v817 = vmul.f32 %v781, %v812
        %v818 = vmul.f32 %v782, %v809
        %v822 = vcombine.high %v816, %v816
        %v823 = vcombine.high %v817, %v817
        %824 = vrot.lane.b32.xlu0 %v816, 55
        %v825 = vpop.permute.xlu0 %824
        %826 = vrot.lane.b32.xlu0 %v822, 55
        %v827 = vpop.permute.xlu0 %826
        %828 = vrot.lane.b32.xlu0 %v817, 55
        %v829 = vpop.permute.xlu0 %828
        %830 = vrot.lane.b32.xlu0 %v823, 55
        %v831 = vpop.permute.xlu0 %830
        %832 = vrot.lane.b32.xlu0 %v818, 55
        %v833 = vpop.permute.xlu0 %832
        %v834 = vsel %vm268, %v825, %v827
        %v835 = vsel %vm268, %v827, %v829
        %v836 = vsel %vm268, %v829, %v831
        %v837 = vsel %vm268, %v831, %v833
        %842 = vst [vmem:[#allocation3 + $0x80] sm:$0xf] %v834
        %843 = vst [vmem:[#allocation3 + $0x88] sm:$0xf] %v835
        %844 = vst [vmem:[#allocation3 + $0x90] sm:$0xf] %v836
        %845 = vst [vmem:[#allocation3 + $0x98] sm:$0xf] %v837
        %v846 = vld [vmem:[#allocation2] sm:$0xff]
        %v847 = vld [vmem:[#allocation2 + $0x8] sm:$0xff]
        %v848 = vld [vmem:[#allocation2 + $0x10] sm:$0xf]
        %s849 = scalar_lea.vmem [#allocation7], 33
        %v850 = vld [vmem:[%s849] ss:$8 sm:$0xf]
        %v852 = vlaneseq
        %v853 = vshrl.u32 %v852, 7
        %v854 = vsub.s32 0, %v853
        %v855 = vrot.slane %v850, %v854
        %v856 = vlaneseq
        %v857 = vshrl.u32 %v856, 7
        %v858 = vsub.s32 1, %v857
        %v859 = vrot.slane %v850, %v858
        %v860 = vlaneseq
        %v861 = vshrl.u32 %v860, 7
        %v862 = vsub.s32 2, %v861
        %v863 = vrot.slane %v850, %v862
        %v864 = vlaneseq
        %v865 = vshrl.u32 %v864, 7
        %v866 = vsub.s32 3, %v865
        %v867 = vrot.slane %v850, %v866
        %v868 = vcombine.low %v855, %v859
        %v869 = vcombine.low %v863, %v867
        %870 = vrot.lane.b32.xlu0 %v868, 119
        %v871 = vpop.permute.xlu0 %870
        %872 = vrot.lane.b32.xlu0 %v869, 119
        %v873 = vpop.permute.xlu0 %872
        %v874 = vrot.slane %v871, 4
        %v875 = vrot.slane %v873, 4
        %vm876 = vcmask 973824
        %v877 = vsel %vm876, %v874, %v871
        %v878 = vsel %vm270, %v874, %v875
        %v879 = vsel %vm876, %v878, %v873
        %v883 = vmul.f32 %v846, %v877
        %v884 = vmul.f32 %v847, %v879
        %v885 = vmul.f32 %v848, %v875
        %v889 = vcombine.low %v883, %v883
        %v890 = vcombine.low %v884, %v884
        %v891 = vcombine.low %v885, %v885
        %892 = vrot.lane.b32.xlu0 %v889, 9
        %v893 = vpop.permute.xlu0 %892
        %894 = vrot.lane.b32.xlu0 %v883, 9
        %v895 = vpop.permute.xlu0 %894
        %896 = vrot.lane.b32.xlu0 %v890, 9
        %v897 = vpop.permute.xlu0 %896
        %898 = vrot.lane.b32.xlu0 %v884, 9
        %v899 = vpop.permute.xlu0 %898
        %900 = vrot.lane.b32.xlu0 %v891, 9
        %v901 = vpop.permute.xlu0 %900
        %vm902 = vcmask 72704
        %v903 = vsel %vm902, %v893, %v895
        %v904 = vsel %vm902, %v895, %v897
        %v905 = vsel %vm902, %v897, %v899
        %v906 = vsel %vm902, %v899, %v901
        %911 = vst [vmem:[#allocation3 + $0x80] sm:$0xf0] %v903
        %912 = vst [vmem:[#allocation3 + $0x88] sm:$0xf0] %v904
        %913 = vst [vmem:[#allocation3 + $0x90] sm:$0xf0] %v905
        %914 = vst [vmem:[#allocation3 + $0x98] sm:$0xf0] %v906
        %v915 = vld [vmem:[#allocation2] sm:$0xff]
        %v916 = vld [vmem:[#allocation2 + $0x8] sm:$0xff]
        %v917 = vld [vmem:[#allocation2 + $0x10] sm:$0xf]
        %s918 = scalar_lea.vmem [#allocation7], 34
        %v919 = vld [vmem:[%s918] ss:$8 sm:$0xf]
        %v921 = vlaneseq
        %v922 = vshrl.u32 %v921, 7
        %v923 = vsub.s32 0, %v922
        %v924 = vrot.slane %v919, %v923
        %v925 = vlaneseq
        %v926 = vshrl.u32 %v925, 7
        %v927 = vsub.s32 1, %v926
        %v928 = vrot.slane %v919, %v927
        %v929 = vlaneseq
        %v930 = vshrl.u32 %v929, 7
        %v931 = vsub.s32 2, %v930
        %v932 = vrot.slane %v919, %v931
        %v933 = vlaneseq
        %v934 = vshrl.u32 %v933, 7
        %v935 = vsub.s32 3, %v934
        %v936 = vrot.slane %v919, %v935
        %v937 = vcombine.low %v924, %v928
        %v938 = vcombine.low %v932, %v936
        %939 = vrot.lane.b32.xlu0 %v937, 120
        %v940 = vpop.permute.xlu0 %939
        %941 = vrot.lane.b32.xlu0 %v938, 120
        %v942 = vpop.permute.xlu0 %941
        %v943 = vrot.slane %v940, 4
        %v944 = vrot.slane %v942, 4
        %vm945 = vcmask 982016
        %v946 = vsel %vm945, %v943, %v940
        %v947 = vsel %vm270, %v943, %v944
        %v948 = vsel %vm945, %v947, %v942
        %v952 = vmul.f32 %v915, %v946
        %v953 = vmul.f32 %v916, %v948
        %v954 = vmul.f32 %v917, %v944
        %v958 = vcombine.high %v952, %v952
        %v959 = vcombine.high %v953, %v953
        %960 = vrot.lane.b32.xlu0 %v952, 8
        %v961 = vpop.permute.xlu0 %960
        %962 = vrot.lane.b32.xlu0 %v958, 8
        %v963 = vpop.permute.xlu0 %962
        %964 = vrot.lane.b32.xlu0 %v953, 8
        %v965 = vpop.permute.xlu0 %964
        %966 = vrot.lane.b32.xlu0 %v959, 8
        %v967 = vpop.permute.xlu0 %966
        %968 = vrot.lane.b32.xlu0 %v954, 8
        %v969 = vpop.permute.xlu0 %968
        %vm970 = vcmask 64512
        %v971 = vsel %vm970, %v961, %v963
        %v972 = vsel %vm970, %v963, %v965
        %v973 = vsel %vm970, %v965, %v967
        %v974 = vsel %vm970, %v967, %v969
        %979 = vst [vmem:[#allocation3 + $0xa0] sm:$0xf] %v971
        %980 = vst [vmem:[#allocation3 + $0xa8] sm:$0xf] %v972
        %981 = vst [vmem:[#allocation3 + $0xb0] sm:$0xf] %v973
        %982 = vst [vmem:[#allocation3 + $0xb8] sm:$0xf] %v974
        %v983 = vld [vmem:[#allocation2] sm:$0xff]
        %v984 = vld [vmem:[#allocation2 + $0x8] sm:$0xff]
        %v985 = vld [vmem:[#allocation2 + $0x10] sm:$0xf]
        %s986 = scalar_lea.vmem [#allocation7], 35
        %v987 = vld [vmem:[%s986] ss:$8 sm:$0xf]
        %v989 = vlaneseq
        %v990 = vshrl.u32 %v989, 7
        %v991 = vsub.s32 0, %v990
        %v992 = vrot.slane %v987, %v991
        %v993 = vlaneseq
        %v994 = vshrl.u32 %v993, 7
        %v995 = vsub.s32 1, %v994
        %v996 = vrot.slane %v987, %v995
        %v997 = vlaneseq
        %v998 = vshrl.u32 %v997, 7
        %v999 = vsub.s32 2, %v998
        %v1000 = vrot.slane %v987, %v999
        %v1001 = vlaneseq
        %v1002 = vshrl.u32 %v1001, 7
        %v1003 = vsub.s32 3, %v1002
        %v1004 = vrot.slane %v987, %v1003
        %v1005 = vcombine.low %v992, %v996
        %v1006 = vcombine.low %v1000, %v1004
        %1007 = vrot.lane.b32.xlu0 %v1005, 121
        %v1008 = vpop.permute.xlu0 %1007
        %1009 = vrot.lane.b32.xlu0 %v1006, 121
        %v1010 = vpop.permute.xlu0 %1009
        %v1011 = vrot.slane %v1008, 4
        %v1012 = vrot.slane %v1010, 4
        %vm1013 = vcmask 990208
        %v1014 = vsel %vm1013, %v1011, %v1008
        %v1015 = vsel %vm270, %v1011, %v1012
        %v1016 = vsel %vm1013, %v1015, %v1010
        %v1020 = vmul.f32 %v983, %v1014
        %v1021 = vmul.f32 %v984, %v1016
        %v1022 = vmul.f32 %v985, %v1012
        %v1026 = vcombine.low %v1020, %v1020
        %v1027 = vcombine.low %v1021, %v1021
        %v1028 = vcombine.low %v1022, %v1022
        %1029 = vrot.lane.b32.xlu0 %v1026, 7
        %v1030 = vpop.permute.xlu0 %1029
        %1031 = vrot.lane.b32.xlu0 %v1020, 7
        %v1032 = vpop.permute.xlu0 %1031
        %1033 = vrot.lane.b32.xlu0 %v1027, 7
        %v1034 = vpop.permute.xlu0 %1033
        %1035 = vrot.lane.b32.xlu0 %v1021, 7
        %v1036 = vpop.permute.xlu0 %1035
        %1037 = vrot.lane.b32.xlu0 %v1028, 7
        %v1038 = vpop.permute.xlu0 %1037
        %vm1039 = vcmask 56320
        %v1040 = vsel %vm1039, %v1030, %v1032
        %v1041 = vsel %vm1039, %v1032, %v1034
        %v1042 = vsel %vm1039, %v1034, %v1036
        %v1043 = vsel %vm1039, %v1036, %v1038
        %1048 = vst [vmem:[#allocation3 + $0xa0] sm:$0xf0] %v1040
        %1049 = vst [vmem:[#allocation3 + $0xa8] sm:$0xf0] %v1041
        %1050 = vst [vmem:[#allocation3 + $0xb0] sm:$0xf0] %v1042
        %1051 = vst [vmem:[#allocation3 + $0xb8] sm:$0xf0] %v1043
        %v1052 = vld [vmem:[#allocation2] sm:$0xff]
        %v1053 = vld [vmem:[#allocation2 + $0x8] sm:$0xff]
        %v1054 = vld [vmem:[#allocation2 + $0x10] sm:$0xf]
        %s1055 = scalar_lea.vmem [#allocation7], 36
        %v1056 = vld [vmem:[%s1055] ss:$8 sm:$0xf]
        %v1058 = vlaneseq
        %v1059 = vshrl.u32 %v1058, 7
        %v1060 = vsub.s32 0, %v1059
        %v1061 = vrot.slane %v1056, %v1060
        %v1062 = vlaneseq
        %v1063 = vshrl.u32 %v1062, 7
        %v1064 = vsub.s32 1, %v1063
        %v1065 = vrot.slane %v1056, %v1064
        %v1066 = vlaneseq
        %v1067 = vshrl.u32 %v1066, 7
        %v1068 = vsub.s32 2, %v1067
        %v1069 = vrot.slane %v1056, %v1068
        %v1070 = vlaneseq
        %v1071 = vshrl.u32 %v1070, 7
        %v1072 = vsub.s32 3, %v1071
        %v1073 = vrot.slane %v1056, %v1072
        %v1074 = vcombine.low %v1061, %v1065
        %v1075 = vcombine.low %v1069, %v1073
        %1076 = vrot.lane.b32.xlu0 %v1074, 127
        %v1077 = vpop.permute.xlu0 %1076
        %1078 = vrot.lane.b32.xlu0 %v1075, 127
        %v1079 = vpop.permute.xlu0 %1078
        %v1080 = vrot.slane %v1077, 4
        %v1081 = vrot.slane %v1079, 4
        %vm1082 = vcmask 1039360
        %v1083 = vsel %vm1082, %v1080, %v1077
        %v1084 = vsel %vm270, %v1080, %v1081
        %v1085 = vsel %vm1082, %v1084, %v1079
        %v1089 = vmul.f32 %v1052, %v1083
        %v1090 = vmul.f32 %v1053, %v1085
        %v1091 = vmul.f32 %v1054, %v1081
        %v1095 = vcombine.high %v1089, %v1089
        %v1096 = vcombine.high %v1090, %v1090
        %1097 = vrot.lane.b32.xlu0 %v1089, 1
        %v1098 = vpop.permute.xlu0 %1097
        %1099 = vrot.lane.b32.xlu0 %v1095, 1
        %v1100 = vpop.permute.xlu0 %1099
        %1101 = vrot.lane.b32.xlu0 %v1090, 1
        %v1102 = vpop.permute.xlu0 %1101
        %1103 = vrot.lane.b32.xlu0 %v1096, 1
        %v1104 = vpop.permute.xlu0 %1103
        %1105 = vrot.lane.b32.xlu0 %v1091, 1
        %v1106 = vpop.permute.xlu0 %1105
        %vm1107 = vcmask 7168
        %v1108 = vsel %vm1107, %v1098, %v1100
        %v1109 = vsel %vm1107, %v1100, %v1102
        %v1110 = vsel %vm1107, %v1102, %v1104
        %v1111 = vsel %vm1107, %v1104, %v1106
        %1116 = vst [vmem:[#allocation3 + $0xc0] sm:$0xf] %v1108
        %1117 = vst [vmem:[#allocation3 + $0xc8] sm:$0xf] %v1109
        %1118 = vst [vmem:[#allocation3 + $0xd0] sm:$0xf] %v1110
        %1119 = vst [vmem:[#allocation3 + $0xd8] sm:$0xf] %v1111
        %v1120 = vld [vmem:[#allocation2 + $0x4] sm:$0xff]
        %v1121 = vld [vmem:[#allocation2 + $0xc] sm:$0xff]
        %s1122 = scalar_lea.vmem [#allocation7], 37
        %v1123 = vld [vmem:[%s1122] ss:$8 sm:$0xf]
        %v1125 = vlaneseq
        %v1126 = vshrl.u32 %v1125, 7
        %v1127 = vsub.s32 0, %v1126
        %v1128 = vrot.slane %v1123, %v1127
        %v1129 = vlaneseq
        %v1130 = vshrl.u32 %v1129, 7
        %v1131 = vsub.s32 1, %v1130
        %v1132 = vrot.slane %v1123, %v1131
        %v1133 = vlaneseq
        %v1134 = vshrl.u32 %v1133, 7
        %v1135 = vsub.s32 2, %v1134
        %v1136 = vrot.slane %v1123, %v1135
        %v1137 = vlaneseq
        %v1138 = vshrl.u32 %v1137, 7
        %v1139 = vsub.s32 3, %v1138
        %v1140 = vrot.slane %v1123, %v1139
        %v1141 = vcombine.low %v1128, %v1132
        %v1142 = vcombine.low %v1136, %v1140
        %v1145 = vmul.f32 %v1120, %v1141
        %v1146 = vmul.f32 %v1121, %v1142
        %v1149 = vcombine.low %v1145, %v1145
        %v1150 = vcombine.low %v1146, %v1146
        %1153 = vst [vmem:[#allocation3 + $0xc0] sm:$0xf0] %v1149
        %1154 = vst [vmem:[#allocation3 + $0xc8] sm:$0xf0] %v1145
        %1155 = vst [vmem:[#allocation3 + $0xd0] sm:$0xf0] %v1150
        %1156 = vst [vmem:[#allocation3 + $0xd8] sm:$0xf0] %v1146
        %v1157 = vld [vmem:[#allocation2 + $0x4] sm:$0xff]
        %v1158 = vld [vmem:[#allocation2 + $0xc] sm:$0xff]
        %v1159 = vld [vmem:[#allocation2 + $0x14] sm:$0xf]
        %s1160 = scalar_lea.vmem [#allocation7], 38
        %v1161 = vld [vmem:[%s1160] ss:$8 sm:$0xf]
        %v1163 = vlaneseq
        %v1164 = vshrl.u32 %v1163, 7
        %v1165 = vsub.s32 0, %v1164
        %v1166 = vrot.slane %v1161, %v1165
        %v1167 = vlaneseq
        %v1168 = vshrl.u32 %v1167, 7
        %v1169 = vsub.s32 1, %v1168
        %v1170 = vrot.slane %v1161, %v1169
        %v1171 = vlaneseq
        %v1172 = vshrl.u32 %v1171, 7
        %v1173 = vsub.s32 2, %v1172
        %v1174 = vrot.slane %v1161, %v1173
        %v1175 = vlaneseq
        %v1176 = vshrl.u32 %v1175, 7
        %v1177 = vsub.s32 3, %v1176
        %v1178 = vrot.slane %v1161, %v1177
        %v1179 = vcombine.low %v1166, %v1170
        %v1180 = vcombine.low %v1174, %v1178
        %1181 = vrot.lane.b32.xlu0 %v1179, 1
        %v1182 = vpop.permute.xlu0 %1181
        %1183 = vrot.lane.b32.xlu0 %v1180, 1
        %v1184 = vpop.permute.xlu0 %1183
        %v1185 = vrot.slane %v1182, 4
        %v1186 = vrot.slane %v1184, 4
        %v1187 = vsel %vm1107, %v1185, %v1182
        %v1188 = vsel %vm270, %v1185, %v1186
        %v1189 = vsel %vm1107, %v1188, %v1184
        %v1193 = vmul.f32 %v1157, %v1187
        %v1194 = vmul.f32 %v1158, %v1189
        %v1195 = vmul.f32 %v1159, %v1186
        %v1199 = vcombine.high %v1193, %v1193
        %v1200 = vcombine.high %v1194, %v1194
        %1201 = vrot.lane.b32.xlu0 %v1193, 127
        %v1202 = vpop.permute.xlu0 %1201
        %1203 = vrot.lane.b32.xlu0 %v1199, 127
        %v1204 = vpop.permute.xlu0 %1203
        %1205 = vrot.lane.b32.xlu0 %v1194, 127
        %v1206 = vpop.permute.xlu0 %1205
        %1207 = vrot.lane.b32.xlu0 %v1200, 127
        %v1208 = vpop.permute.xlu0 %1207
        %1209 = vrot.lane.b32.xlu0 %v1195, 127
        %v1210 = vpop.permute.xlu0 %1209
        %v1211 = vsel %vm1082, %v1202, %v1204
        %v1212 = vsel %vm1082, %v1204, %v1206
        %v1213 = vsel %vm1082, %v1206, %v1208
        %v1214 = vsel %vm1082, %v1208, %v1210
        %1219 = vst [vmem:[#allocation3 + $0xe0] sm:$0xf] %v1211
        %1220 = vst [vmem:[#allocation3 + $0xe8] sm:$0xf] %v1212
        %1221 = vst [vmem:[#allocation3 + $0xf0] sm:$0xf] %v1213
        %1222 = vst [vmem:[#allocation3 + $0xf8] sm:$0xf] %v1214
        %v1223 = vld [vmem:[#allocation2 + $0x4] sm:$0xff]
        %v1224 = vld [vmem:[#allocation2 + $0xc] sm:$0xff]
        %v1225 = vld [vmem:[#allocation2 + $0x14] sm:$0xf]
        %s1226 = scalar_lea.vmem [#allocation7], 39
        %v1227 = vld [vmem:[%s1226] ss:$8 sm:$0xf]
        %v1229 = vlaneseq
        %v1230 = vshrl.u32 %v1229, 7
        %v1231 = vsub.s32 0, %v1230
        %v1232 = vrot.slane %v1227, %v1231
        %v1233 = vlaneseq
        %v1234 = vshrl.u32 %v1233, 7
        %v1235 = vsub.s32 1, %v1234
        %v1236 = vrot.slane %v1227, %v1235
        %v1237 = vlaneseq
        %v1238 = vshrl.u32 %v1237, 7
        %v1239 = vsub.s32 2, %v1238
        %v1240 = vrot.slane %v1227, %v1239
        %v1241 = vlaneseq
        %v1242 = vshrl.u32 %v1241, 7
        %v1243 = vsub.s32 3, %v1242
        %v1244 = vrot.slane %v1227, %v1243
        %v1245 = vcombine.low %v1232, %v1236
        %v1246 = vcombine.low %v1240, %v1244
        %1247 = vrot.lane.b32.xlu0 %v1245, 7
        %v1248 = vpop.permute.xlu0 %1247
        %1249 = vrot.lane.b32.xlu0 %v1246, 7
        %v1250 = vpop.permute.xlu0 %1249
        %v1251 = vrot.slane %v1248, 4
        %v1252 = vrot.slane %v1250, 4
        %v1253 = vsel %vm1039, %v1251, %v1248
        %v1254 = vsel %vm270, %v1251, %v1252
        %v1255 = vsel %vm1039, %v1254, %v1250
        %v1259 = vmul.f32 %v1223, %v1253
        %v1260 = vmul.f32 %v1224, %v1255
        %v1261 = vmul.f32 %v1225, %v1252
        %v1265 = vcombine.low %v1259, %v1259
        %v1266 = vcombine.low %v1260, %v1260
        %v1267 = vcombine.low %v1261, %v1261
        %1268 = vrot.lane.b32.xlu0 %v1265, 121
        %v1269 = vpop.permute.xlu0 %1268
        %1270 = vrot.lane.b32.xlu0 %v1259, 121
        %v1271 = vpop.permute.xlu0 %1270
        %1272 = vrot.lane.b32.xlu0 %v1266, 121
        %v1273 = vpop.permute.xlu0 %1272
        %1274 = vrot.lane.b32.xlu0 %v1260, 121
        %v1275 = vpop.permute.xlu0 %1274
        %1276 = vrot.lane.b32.xlu0 %v1267, 121
        %v1277 = vpop.permute.xlu0 %1276
        %v1278 = vsel %vm1013, %v1269, %v1271
        %v1279 = vsel %vm1013, %v1271, %v1273
        %v1280 = vsel %vm1013, %v1273, %v1275
        %v1281 = vsel %vm1013, %v1275, %v1277
        %1286 = vst [vmem:[#allocation3 + $0xe0] sm:$0xf0] %v1278
        %1287 = vst [vmem:[#allocation3 + $0xe8] sm:$0xf0] %v1279
        %1288 = vst [vmem:[#allocation3 + $0xf0] sm:$0xf0] %v1280
        %1289 = vst [vmem:[#allocation3 + $0xf8] sm:$0xf0] %v1281
        %v1290 = vld [vmem:[#allocation2 + $0x4] sm:$0xff]
        %v1291 = vld [vmem:[#allocation2 + $0xc] sm:$0xff]
        %v1292 = vld [vmem:[#allocation2 + $0x14] sm:$0xf]
        %s1293 = scalar_lea.vmem [#allocation7], 64
        %v1294 = vld [vmem:[%s1293] ss:$8 sm:$0xf]
        %v1296 = vlaneseq
        %v1297 = vshrl.u32 %v1296, 7
        %v1298 = vsub.s32 0, %v1297
        %v1299 = vrot.slane %v1294, %v1298
        %v1300 = vlaneseq
        %v1301 = vshrl.u32 %v1300, 7
        %v1302 = vsub.s32 1, %v1301
        %v1303 = vrot.slane %v1294, %v1302
        %v1304 = vlaneseq
        %v1305 = vshrl.u32 %v1304, 7
        %v1306 = vsub.s32 2, %v1305
        %v1307 = vrot.slane %v1294, %v1306
        %v1308 = vlaneseq
        %v1309 = vshrl.u32 %v1308, 7
        %v1310 = vsub.s32 3, %v1309
        %v1311 = vrot.slane %v1294, %v1310
        %v1312 = vcombine.low %v1299, %v1303
        %v1313 = vcombine.low %v1307, %v1311
        %1314 = vrot.lane.b32.xlu0 %v1312, 8
        %v1315 = vpop.permute.xlu0 %1314
        %1316 = vrot.lane.b32.xlu0 %v1313, 8
        %v1317 = vpop.permute.xlu0 %1316
        %v1318 = vrot.slane %v1315, 4
        %v1319 = vrot.slane %v1317, 4
        %v1320 = vsel %vm970, %v1318, %v1315
        %v1321 = vsel %vm270, %v1318, %v1319
        %v1322 = vsel %vm970, %v1321, %v1317
        %v1326 = vmul.f32 %v1290, %v1320
        %v1327 = vmul.f32 %v1291, %v1322
        %v1328 = vmul.f32 %v1292, %v1319
        %v1332 = vcombine.high %v1326, %v1326
        %v1333 = vcombine.high %v1327, %v1327
        %1334 = vrot.lane.b32.xlu0 %v1326, 120
        %v1335 = vpop.permute.xlu0 %1334
        %1336 = vrot.lane.b32.xlu0 %v1332, 120
        %v1337 = vpop.permute.xlu0 %1336
        %1338 = vrot.lane.b32.xlu0 %v1327, 120
        %v1339 = vpop.permute.xlu0 %1338
        %1340 = vrot.lane.b32.xlu0 %v1333, 120
        %v1341 = vpop.permute.xlu0 %1340
        %1342 = vrot.lane.b32.xlu0 %v1328, 120
        %v1343 = vpop.permute.xlu0 %1342
        %v1344 = vsel %vm945, %v1335, %v1337
        %v1345 = vsel %vm945, %v1337, %v1339
        %v1346 = vsel %vm945, %v1339, %v1341
        %v1347 = vsel %vm945, %v1341, %v1343
        %1352 = vst [vmem:[#allocation3 + $0x100] sm:$0xf] %v1344
        %1353 = vst [vmem:[#allocation3 + $0x108] sm:$0xf] %v1345
        %1354 = vst [vmem:[#allocation3 + $0x110] sm:$0xf] %v1346
        %1355 = vst [vmem:[#allocation3 + $0x118] sm:$0xf] %v1347
        %v1356 = vld [vmem:[#allocation2 + $0x4] sm:$0xff]
        %v1357 = vld [vmem:[#allocation2 + $0xc] sm:$0xff]
        %v1358 = vld [vmem:[#allocation2 + $0x14] sm:$0xf]
        %s1359 = scalar_lea.vmem [#allocation7], 65
        %v1360 = vld [vmem:[%s1359] ss:$8 sm:$0xf]
        %v1362 = vlaneseq
        %v1363 = vshrl.u32 %v1362, 7
        %v1364 = vsub.s32 0, %v1363
        %v1365 = vrot.slane %v1360, %v1364
        %v1366 = vlaneseq
        %v1367 = vshrl.u32 %v1366, 7
        %v1368 = vsub.s32 1, %v1367
        %v1369 = vrot.slane %v1360, %v1368
        %v1370 = vlaneseq
        %v1371 = vshrl.u32 %v1370, 7
        %v1372 = vsub.s32 2, %v1371
        %v1373 = vrot.slane %v1360, %v1372
        %v1374 = vlaneseq
        %v1375 = vshrl.u32 %v1374, 7
        %v1376 = vsub.s32 3, %v1375
        %v1377 = vrot.slane %v1360, %v1376
        %v1378 = vcombine.low %v1365, %v1369
        %v1379 = vcombine.low %v1373, %v1377
        %1380 = vrot.lane.b32.xlu0 %v1378, 9
        %v1381 = vpop.permute.xlu0 %1380
        %1382 = vrot.lane.b32.xlu0 %v1379, 9
        %v1383 = vpop.permute.xlu0 %1382
        %v1384 = vrot.slane %v1381, 4
        %v1385 = vrot.slane %v1383, 4
        %v1386 = vsel %vm902, %v1384, %v1381
        %v1387 = vsel %vm270, %v1384, %v1385
        %v1388 = vsel %vm902, %v1387, %v1383
        %v1392 = vmul.f32 %v1356, %v1386
        %v1393 = vmul.f32 %v1357, %v1388
        %v1394 = vmul.f32 %v1358, %v1385
        %v1398 = vcombine.low %v1392, %v1392
        %v1399 = vcombine.low %v1393, %v1393
        %v1400 = vcombine.low %v1394, %v1394
        %1401 = vrot.lane.b32.xlu0 %v1398, 119
        %v1402 = vpop.permute.xlu0 %1401
        %1403 = vrot.lane.b32.xlu0 %v1392, 119
        %v1404 = vpop.permute.xlu0 %1403
        %1405 = vrot.lane.b32.xlu0 %v1399, 119
        %v1406 = vpop.permute.xlu0 %1405
        %1407 = vrot.lane.b32.xlu0 %v1393, 119
        %v1408 = vpop.permute.xlu0 %1407
        %1409 = vrot.lane.b32.xlu0 %v1400, 119
        %v1410 = vpop.permute.xlu0 %1409
        %v1411 = vsel %vm876, %v1402, %v1404
        %v1412 = vsel %vm876, %v1404, %v1406
        %v1413 = vsel %vm876, %v1406, %v1408
        %v1414 = vsel %vm876, %v1408, %v1410
        %1419 = vst [vmem:[#allocation3 + $0x100] sm:$0xf0] %v1411
        %1420 = vst [vmem:[#allocation3 + $0x108] sm:$0xf0] %v1412
        %1421 = vst [vmem:[#allocation3 + $0x110] sm:$0xf0] %v1413
        %1422 = vst [vmem:[#allocation3 + $0x118] sm:$0xf0] %v1414
        %v1423 = vld [vmem:[#allocation2 + $0x4] sm:$0xff]
        %v1424 = vld [vmem:[#allocation2 + $0xc] sm:$0xff]
        %v1425 = vld [vmem:[#allocation2 + $0x14] sm:$0xf]
        %s1426 = scalar_lea.vmem [#allocation7], 66
        %v1427 = vld [vmem:[%s1426] ss:$8 sm:$0xf]
        %v1429 = vlaneseq
        %v1430 = vshrl.u32 %v1429, 7
        %v1431 = vsub.s32 0, %v1430
        %v1432 = vrot.slane %v1427, %v1431
        %v1433 = vlaneseq
        %v1434 = vshrl.u32 %v1433, 7
        %v1435 = vsub.s32 1, %v1434
        %v1436 = vrot.slane %v1427, %v1435
        %v1437 = vlaneseq
        %v1438 = vshrl.u32 %v1437, 7
        %v1439 = vsub.s32 2, %v1438
        %v1440 = vrot.slane %v1427, %v1439
        %v1441 = vlaneseq
        %v1442 = vshrl.u32 %v1441, 7
        %v1443 = vsub.s32 3, %v1442
        %v1444 = vrot.slane %v1427, %v1443
        %v1445 = vcombine.low %v1432, %v1436
        %v1446 = vcombine.low %v1440, %v1444
        %1447 = vrot.lane.b32.xlu0 %v1445, 55
        %v1448 = vpop.permute.xlu0 %1447
        %1449 = vrot.lane.b32.xlu0 %v1446, 55
        %v1450 = vpop.permute.xlu0 %1449
        %v1451 = vrot.slane %v1448, 4
        %v1452 = vrot.slane %v1450, 4
        %v1453 = vsel %vm268, %v1451, %v1448
        %v1454 = vsel %vm270, %v1451, %v1452
        %v1455 = vsel %vm268, %v1454, %v1450
        %v1459 = vmul.f32 %v1423, %v1453
        %v1460 = vmul.f32 %v1424, %v1455
        %v1461 = vmul.f32 %v1425, %v1452
        %v1465 = vcombine.high %v1459, %v1459
        %v1466 = vcombine.high %v1460, %v1460
        %1467 = vrot.lane.b32.xlu0 %v1459, 73
        %v1468 = vpop.permute.xlu0 %1467
        %1469 = vrot.lane.b32.xlu0 %v1465, 73
        %v1470 = vpop.permute.xlu0 %1469
        %1471 = vrot.lane.b32.xlu0 %v1460, 73
        %v1472 = vpop.permute.xlu0 %1471
        %1473 = vrot.lane.b32.xlu0 %v1466, 73
        %v1474 = vpop.permute.xlu0 %1473
        %1475 = vrot.lane.b32.xlu0 %v1461, 73
        %v1476 = vpop.permute.xlu0 %1475
        %v1477 = vsel %vm294, %v1468, %v1470
        %v1478 = vsel %vm294, %v1470, %v1472
        %v1479 = vsel %vm294, %v1472, %v1474
        %v1480 = vsel %vm294, %v1474, %v1476
        %1485 = vst [vmem:[#allocation3 + $0x120] sm:$0xf] %v1477
        %1486 = vst [vmem:[#allocation3 + $0x128] sm:$0xf] %v1478
        %1487 = vst [vmem:[#allocation3 + $0x130] sm:$0xf] %v1479
        %1488 = vst [vmem:[#allocation3 + $0x138] sm:$0xf] %v1480
        %v1489 = vld [vmem:[#allocation2 + $0x4] sm:$0xff]
        %v1490 = vld [vmem:[#allocation2 + $0xc] sm:$0xff]
        %v1491 = vld [vmem:[#allocation2 + $0x14] sm:$0xf]
        %s1492 = scalar_lea.vmem [#allocation7], 67
        %v1493 = vld [vmem:[%s1492] ss:$8 sm:$0xf]
        %v1495 = vlaneseq
        %v1496 = vshrl.u32 %v1495, 7
        %v1497 = vsub.s32 0, %v1496
        %v1498 = vrot.slane %v1493, %v1497
        %v1499 = vlaneseq
        %v1500 = vshrl.u32 %v1499, 7
        %v1501 = vsub.s32 1, %v1500
        %v1502 = vrot.slane %v1493, %v1501
        %v1503 = vlaneseq
        %v1504 = vshrl.u32 %v1503, 7
        %v1505 = vsub.s32 2, %v1504
        %v1506 = vrot.slane %v1493, %v1505
        %v1507 = vlaneseq
        %v1508 = vshrl.u32 %v1507, 7
        %v1509 = vsub.s32 3, %v1508
        %v1510 = vrot.slane %v1493, %v1509
        %v1511 = vcombine.low %v1498, %v1502
        %v1512 = vcombine.low %v1506, %v1510
        %1513 = vrot.lane.b32.xlu0 %v1511, 56
        %v1514 = vpop.permute.xlu0 %1513
        %1515 = vrot.lane.b32.xlu0 %v1512, 56
        %v1516 = vpop.permute.xlu0 %1515
        %v1517 = vrot.slane %v1514, 4
        %v1518 = vrot.slane %v1516, 4
        %v1519 = vsel %vm337, %v1517, %v1514
        %v1520 = vsel %vm270, %v1517, %v1518
        %v1521 = vsel %vm337, %v1520, %v1516
        %v1525 = vmul.f32 %v1489, %v1519
        %v1526 = vmul.f32 %v1490, %v1521
        %v1527 = vmul.f32 %v1491, %v1518
        %v1531 = vcombine.low %v1525, %v1525
        %v1532 = vcombine.low %v1526, %v1526
        %v1533 = vcombine.low %v1527, %v1527
        %1534 = vrot.lane.b32.xlu0 %v1531, 72
        %v1535 = vpop.permute.xlu0 %1534
        %1536 = vrot.lane.b32.xlu0 %v1525, 72
        %v1537 = vpop.permute.xlu0 %1536
        %1538 = vrot.lane.b32.xlu0 %v1532, 72
        %v1539 = vpop.permute.xlu0 %1538
        %1540 = vrot.lane.b32.xlu0 %v1526, 72
        %v1541 = vpop.permute.xlu0 %1540
        %1542 = vrot.lane.b32.xlu0 %v1533, 72
        %v1543 = vpop.permute.xlu0 %1542
        %v1544 = vsel %vm363, %v1535, %v1537
        %v1545 = vsel %vm363, %v1537, %v1539
        %v1546 = vsel %vm363, %v1539, %v1541
        %v1547 = vsel %vm363, %v1541, %v1543
        %1552 = vst [vmem:[#allocation3 + $0x120] sm:$0xf0] %v1544
        %1553 = vst [vmem:[#allocation3 + $0x128] sm:$0xf0] %v1545
        %1554 = vst [vmem:[#allocation3 + $0x130] sm:$0xf0] %v1546
        %1555 = vst [vmem:[#allocation3 + $0x138] sm:$0xf0] %v1547
        %v1556 = vld [vmem:[#allocation2 + $0x4] sm:$0xff]
        %v1557 = vld [vmem:[#allocation2 + $0xc] sm:$0xff]
        %v1558 = vld [vmem:[#allocation2 + $0x14] sm:$0xf]
        %s1559 = scalar_lea.vmem [#allocation7], 68
        %v1560 = vld [vmem:[%s1559] ss:$8 sm:$0xf]
        %v1562 = vlaneseq
        %v1563 = vshrl.u32 %v1562, 7
        %v1564 = vsub.s32 0, %v1563
        %v1565 = vrot.slane %v1560, %v1564
        %v1566 = vlaneseq
        %v1567 = vshrl.u32 %v1566, 7
        %v1568 = vsub.s32 1, %v1567
        %v1569 = vrot.slane %v1560, %v1568
        %v1570 = vlaneseq
        %v1571 = vshrl.u32 %v1570, 7
        %v1572 = vsub.s32 2, %v1571
        %v1573 = vrot.slane %v1560, %v1572
        %v1574 = vlaneseq
        %v1575 = vshrl.u32 %v1574, 7
        %v1576 = vsub.s32 3, %v1575
        %v1577 = vrot.slane %v1560, %v1576
        %v1578 = vcombine.low %v1565, %v1569
        %v1579 = vcombine.low %v1573, %v1577
        %1580 = vrot.lane.b32.xlu0 %v1578, 57
        %v1581 = vpop.permute.xlu0 %1580
        %1582 = vrot.lane.b32.xlu0 %v1579, 57
        %v1583 = vpop.permute.xlu0 %1582
        %v1584 = vrot.slane %v1581, 4
        %v1585 = vrot.slane %v1583, 4
        %v1586 = vsel %vm406, %v1584, %v1581
        %v1587 = vsel %vm270, %v1584, %v1585
        %v1588 = vsel %vm406, %v1587, %v1583
        %v1592 = vmul.f32 %v1556, %v1586
        %v1593 = vmul.f32 %v1557, %v1588
        %v1594 = vmul.f32 %v1558, %v1585
        %v1598 = vcombine.high %v1592, %v1592
        %v1599 = vcombine.high %v1593, %v1593
        %1600 = vrot.lane.b32.xlu0 %v1592, 71
        %v1601 = vpop.permute.xlu0 %1600
        %1602 = vrot.lane.b32.xlu0 %v1598, 71
        %v1603 = vpop.permute.xlu0 %1602
        %1604 = vrot.lane.b32.xlu0 %v1593, 71
        %v1605 = vpop.permute.xlu0 %1604
        %1606 = vrot.lane.b32.xlu0 %v1599, 71
        %v1607 = vpop.permute.xlu0 %1606
        %1608 = vrot.lane.b32.xlu0 %v1594, 71
        %v1609 = vpop.permute.xlu0 %1608
        %v1610 = vsel %vm431, %v1601, %v1603
        %v1611 = vsel %vm431, %v1603, %v1605
        %v1612 = vsel %vm431, %v1605, %v1607
        %v1613 = vsel %vm431, %v1607, %v1609
        %1618 = vst [vmem:[#allocation3 + $0x140] sm:$0xf] %v1610
        %1619 = vst [vmem:[#allocation3 + $0x148] sm:$0xf] %v1611
        %1620 = vst [vmem:[#allocation3 + $0x150] sm:$0xf] %v1612
        %1621 = vst [vmem:[#allocation3 + $0x158] sm:$0xf] %v1613
        %v1622 = vld [vmem:[#allocation2 + $0x4] sm:$0xff]
        %v1623 = vld [vmem:[#allocation2 + $0xc] sm:$0xff]
        %v1624 = vld [vmem:[#allocation2 + $0x14] sm:$0xf]
        %s1625 = scalar_lea.vmem [#allocation7], 69
        %v1626 = vld [vmem:[%s1625] ss:$8 sm:$0xf]
        %v1628 = vlaneseq
        %v1629 = vshrl.u32 %v1628, 7
        %v1630 = vsub.s32 0, %v1629
        %v1631 = vrot.slane %v1626, %v1630
        %v1632 = vlaneseq
        %v1633 = vshrl.u32 %v1632, 7
        %v1634 = vsub.s32 1, %v1633
        %v1635 = vrot.slane %v1626, %v1634
        %v1636 = vlaneseq
        %v1637 = vshrl.u32 %v1636, 7
        %v1638 = vsub.s32 2, %v1637
        %v1639 = vrot.slane %v1626, %v1638
        %v1640 = vlaneseq
        %v1641 = vshrl.u32 %v1640, 7
        %v1642 = vsub.s32 3, %v1641
        %v1643 = vrot.slane %v1626, %v1642
        %v1644 = vcombine.low %v1631, %v1635
        %v1645 = vcombine.low %v1639, %v1643
        %1646 = vrot.lane.b32.xlu0 %v1644, 63
        %v1647 = vpop.permute.xlu0 %1646
        %1648 = vrot.lane.b32.xlu0 %v1645, 63
        %v1649 = vpop.permute.xlu0 %1648
        %v1650 = vrot.slane %v1647, 4
        %v1651 = vrot.slane %v1649, 4
        %v1652 = vsel %vm474, %v1650, %v1647
        %v1653 = vsel %vm270, %v1650, %v1651
        %v1654 = vsel %vm474, %v1653, %v1649
        %v1658 = vmul.f32 %v1622, %v1652
        %v1659 = vmul.f32 %v1623, %v1654
        %v1660 = vmul.f32 %v1624, %v1651
        %v1664 = vcombine.low %v1658, %v1658
        %v1665 = vcombine.low %v1659, %v1659
        %v1666 = vcombine.low %v1660, %v1660
        %1667 = vrot.lane.b32.xlu0 %v1664, 65
        %v1668 = vpop.permute.xlu0 %1667
        %1669 = vrot.lane.b32.xlu0 %v1658, 65
        %v1670 = vpop.permute.xlu0 %1669
        %1671 = vrot.lane.b32.xlu0 %v1665, 65
        %v1672 = vpop.permute.xlu0 %1671
        %1673 = vrot.lane.b32.xlu0 %v1659, 65
        %v1674 = vpop.permute.xlu0 %1673
        %1675 = vrot.lane.b32.xlu0 %v1666, 65
        %v1676 = vpop.permute.xlu0 %1675
        %v1677 = vsel %vm500, %v1668, %v1670
        %v1678 = vsel %vm500, %v1670, %v1672
        %v1679 = vsel %vm500, %v1672, %v1674
        %v1680 = vsel %vm500, %v1674, %v1676
        %1685 = vst [vmem:[#allocation3 + $0x140] sm:$0xf0] %v1677
        %1686 = vst [vmem:[#allocation3 + $0x148] sm:$0xf0] %v1678
        %1687 = vst [vmem:[#allocation3 + $0x150] sm:$0xf0] %v1679
        %1688 = vst [vmem:[#allocation3 + $0x158] sm:$0xf0] %v1680
        %v1689 = vld [vmem:[#allocation2 + $0x4] sm:$0xff]
        %v1690 = vld [vmem:[#allocation2 + $0xc] sm:$0xff]
        %v1691 = vld [vmem:[#allocation2 + $0x14] sm:$0xf]
        %s1692 = scalar_lea.vmem [#allocation7], 70
        %v1693 = vld [vmem:[%s1692] ss:$8 sm:$0xf]
        %v1695 = vlaneseq
        %v1696 = vshrl.u32 %v1695, 7
        %v1697 = vsub.s32 0, %v1696
        %v1698 = vrot.slane %v1693, %v1697
        %v1699 = vlaneseq
        %v1700 = vshrl.u32 %v1699, 7
        %v1701 = vsub.s32 1, %v1700
        %v1702 = vrot.slane %v1693, %v1701
        %v1703 = vlaneseq
        %v1704 = vshrl.u32 %v1703, 7
        %v1705 = vsub.s32 2, %v1704
        %v1706 = vrot.slane %v1693, %v1705
        %v1707 = vlaneseq
        %v1708 = vshrl.u32 %v1707, 7
        %v1709 = vsub.s32 3, %v1708
        %v1710 = vrot.slane %v1693, %v1709
        %v1711 = vcombine.low %v1698, %v1702
        %v1712 = vcombine.low %v1706, %v1710
        %1713 = vrot.lane.b32.xlu0 %v1711, 64
        %v1714 = vpop.permute.xlu0 %1713
        %1715 = vrot.lane.b32.xlu0 %v1712, 64
        %v1716 = vpop.permute.xlu0 %1715
        %v1717 = vrot.slane %v1714, 4
        %v1718 = vrot.slane %v1716, 4
        %v1719 = vsel %vm543, %v1717, %v1714
        %v1720 = vsel %vm270, %v1717, %v1718
        %v1721 = vsel %vm543, %v1720, %v1716
        %v1725 = vmul.f32 %v1689, %v1719
        %v1726 = vmul.f32 %v1690, %v1721
        %v1727 = vmul.f32 %v1691, %v1718
        %v1731 = vcombine.high %v1725, %v1725
        %v1732 = vcombine.high %v1726, %v1726
        %1733 = vrot.lane.b32.xlu0 %v1725, 64
        %v1734 = vpop.permute.xlu0 %1733
        %1735 = vrot.lane.b32.xlu0 %v1731, 64
        %v1736 = vpop.permute.xlu0 %1735
        %1737 = vrot.lane.b32.xlu0 %v1726, 64
        %v1738 = vpop.permute.xlu0 %1737
        %1739 = vrot.lane.b32.xlu0 %v1732, 64
        %v1740 = vpop.permute.xlu0 %1739
        %1741 = vrot.lane.b32.xlu0 %v1727, 64
        %v1742 = vpop.permute.xlu0 %1741
        %v1743 = vsel %vm543, %v1734, %v1736
        %v1744 = vsel %vm543, %v1736, %v1738
        %v1745 = vsel %vm543, %v1738, %v1740
        %v1746 = vsel %vm543, %v1740, %v1742
        %1751 = vst [vmem:[#allocation3 + $0x160] sm:$0xf] %v1743
        %1752 = vst [vmem:[#allocation3 + $0x168] sm:$0xf] %v1744
        %1753 = vst [vmem:[#allocation3 + $0x170] sm:$0xf] %v1745
        %1754 = vst [vmem:[#allocation3 + $0x178] sm:$0xf] %v1746
        %v1755 = vld [vmem:[#allocation2 + $0x4] sm:$0xff]
        %v1756 = vld [vmem:[#allocation2 + $0xc] sm:$0xff]
        %v1757 = vld [vmem:[#allocation2 + $0x14] sm:$0xf]
        %s1758 = scalar_lea.vmem [#allocation7], 71
        %v1759 = vld [vmem:[%s1758] ss:$8 sm:$0xf]
        %v1761 = vlaneseq
        %v1762 = vshrl.u32 %v1761, 7
        %v1763 = vsub.s32 0, %v1762
        %v1764 = vrot.slane %v1759, %v1763
        %v1765 = vlaneseq
        %v1766 = vshrl.u32 %v1765, 7
        %v1767 = vsub.s32 1, %v1766
        %v1768 = vrot.slane %v1759, %v1767
        %v1769 = vlaneseq
        %v1770 = vshrl.u32 %v1769, 7
        %v1771 = vsub.s32 2, %v1770
        %v1772 = vrot.slane %v1759, %v1771
        %v1773 = vlaneseq
        %v1774 = vshrl.u32 %v1773, 7
        %v1775 = vsub.s32 3, %v1774
        %v1776 = vrot.slane %v1759, %v1775
        %v1777 = vcombine.low %v1764, %v1768
        %v1778 = vcombine.low %v1772, %v1776
        %1779 = vrot.lane.b32.xlu0 %v1777, 65
        %v1780 = vpop.permute.xlu0 %1779
        %1781 = vrot.lane.b32.xlu0 %v1778, 65
        %v1782 = vpop.permute.xlu0 %1781
        %v1783 = vrot.slane %v1780, 4
        %v1784 = vrot.slane %v1782, 4
        %v1785 = vsel %vm500, %v1783, %v1780
        %v1786 = vsel %vm270, %v1783, %v1784
        %v1787 = vsel %vm500, %v1786, %v1782
        %v1791 = vmul.f32 %v1755, %v1785
        %v1792 = vmul.f32 %v1756, %v1787
        %v1793 = vmul.f32 %v1757, %v1784
        %v1797 = vcombine.low %v1791, %v1791
        %v1798 = vcombine.low %v1792, %v1792
        %v1799 = vcombine.low %v1793, %v1793
        %1800 = vrot.lane.b32.xlu0 %v1797, 63
        %v1801 = vpop.permute.xlu0 %1800
        %1802 = vrot.lane.b32.xlu0 %v1791, 63
        %v1803 = vpop.permute.xlu0 %1802
        %1804 = vrot.lane.b32.xlu0 %v1798, 63
        %v1805 = vpop.permute.xlu0 %1804
        %1806 = vrot.lane.b32.xlu0 %v1792, 63
        %v1807 = vpop.permute.xlu0 %1806
        %1808 = vrot.lane.b32.xlu0 %v1799, 63
        %v1809 = vpop.permute.xlu0 %1808
        %v1810 = vsel %vm474, %v1801, %v1803
        %v1811 = vsel %vm474, %v1803, %v1805
        %v1812 = vsel %vm474, %v1805, %v1807
        %v1813 = vsel %vm474, %v1807, %v1809
        %1818 = vst [vmem:[#allocation3 + $0x160] sm:$0xf0] %v1810
        %1819 = vst [vmem:[#allocation3 + $0x168] sm:$0xf0] %v1811
        %1820 = vst [vmem:[#allocation3 + $0x170] sm:$0xf0] %v1812
        %1821 = vst [vmem:[#allocation3 + $0x178] sm:$0xf0] %v1813
        %v1822 = vld [vmem:[#allocation2 + $0x4] sm:$0xff]
        %v1823 = vld [vmem:[#allocation2 + $0xc] sm:$0xff]
        %v1824 = vld [vmem:[#allocation2 + $0x14] sm:$0xf]
        %s1825 = scalar_lea.vmem [#allocation7], 96
        %v1826 = vld [vmem:[%s1825] ss:$8 sm:$0xf]
        %v1828 = vlaneseq
        %v1829 = vshrl.u32 %v1828, 7
        %v1830 = vsub.s32 0, %v1829
        %v1831 = vrot.slane %v1826, %v1830
        %v1832 = vlaneseq
        %v1833 = vshrl.u32 %v1832, 7
        %v1834 = vsub.s32 1, %v1833
        %v1835 = vrot.slane %v1826, %v1834
        %v1836 = vlaneseq
        %v1837 = vshrl.u32 %v1836, 7
        %v1838 = vsub.s32 2, %v1837
        %v1839 = vrot.slane %v1826, %v1838
        %v1840 = vlaneseq
        %v1841 = vshrl.u32 %v1840, 7
        %v1842 = vsub.s32 3, %v1841
        %v1843 = vrot.slane %v1826, %v1842
        %v1844 = vcombine.low %v1831, %v1835
        %v1845 = vcombine.low %v1839, %v1843
        %1846 = vrot.lane.b32.xlu0 %v1844, 71
        %v1847 = vpop.permute.xlu0 %1846
        %1848 = vrot.lane.b32.xlu0 %v1845, 71
        %v1849 = vpop.permute.xlu0 %1848
        %v1850 = vrot.slane %v1847, 4
        %v1851 = vrot.slane %v1849, 4
        %v1852 = vsel %vm431, %v1850, %v1847
        %v1853 = vsel %vm270, %v1850, %v1851
        %v1854 = vsel %vm431, %v1853, %v1849
        %v1858 = vmul.f32 %v1822, %v1852
        %v1859 = vmul.f32 %v1823, %v1854
        %v1860 = vmul.f32 %v1824, %v1851
        %v1864 = vcombine.high %v1858, %v1858
        %v1865 = vcombine.high %v1859, %v1859
        %1866 = vrot.lane.b32.xlu0 %v1858, 57
        %v1867 = vpop.permute.xlu0 %1866
        %1868 = vrot.lane.b32.xlu0 %v1864, 57
        %v1869 = vpop.permute.xlu0 %1868
        %1870 = vrot.lane.b32.xlu0 %v1859, 57
        %v1871 = vpop.permute.xlu0 %1870
        %1872 = vrot.lane.b32.xlu0 %v1865, 57
        %v1873 = vpop.permute.xlu0 %1872
        %1874 = vrot.lane.b32.xlu0 %v1860, 57
        %v1875 = vpop.permute.xlu0 %1874
        %v1876 = vsel %vm406, %v1867, %v1869
        %v1877 = vsel %vm406, %v1869, %v1871
        %v1878 = vsel %vm406, %v1871, %v1873
        %v1879 = vsel %vm406, %v1873, %v1875
        %1884 = vst [vmem:[#allocation3 + $0x180] sm:$0xf] %v1876
        %1885 = vst [vmem:[#allocation3 + $0x188] sm:$0xf] %v1877
        %1886 = vst [vmem:[#allocation3 + $0x190] sm:$0xf] %v1878
        %1887 = vst [vmem:[#allocation3 + $0x198] sm:$0xf] %v1879
        %v1888 = vld [vmem:[#allocation2 + $0x4] sm:$0xff]
        %v1889 = vld [vmem:[#allocation2 + $0xc] sm:$0xff]
        %v1890 = vld [vmem:[#allocation2 + $0x14] sm:$0xf]
        %s1891 = scalar_lea.vmem [#allocation7], 97
        %v1892 = vld [vmem:[%s1891] ss:$8 sm:$0xf]
        %v1894 = vlaneseq
        %v1895 = vshrl.u32 %v1894, 7
        %v1896 = vsub.s32 0, %v1895
        %v1897 = vrot.slane %v1892, %v1896
        %v1898 = vlaneseq
        %v1899 = vshrl.u32 %v1898, 7
        %v1900 = vsub.s32 1, %v1899
        %v1901 = vrot.slane %v1892, %v1900
        %v1902 = vlaneseq
        %v1903 = vshrl.u32 %v1902, 7
        %v1904 = vsub.s32 2, %v1903
        %v1905 = vrot.slane %v1892, %v1904
        %v1906 = vlaneseq
        %v1907 = vshrl.u32 %v1906, 7
        %v1908 = vsub.s32 3, %v1907
        %v1909 = vrot.slane %v1892, %v1908
        %v1910 = vcombine.low %v1897, %v1901
        %v1911 = vcombine.low %v1905, %v1909
        %1912 = vrot.lane.b32.xlu0 %v1910, 72
        %v1913 = vpop.permute.xlu0 %1912
        %1914 = vrot.lane.b32.xlu0 %v1911, 72
        %v1915 = vpop.permute.xlu0 %1914
        %v1916 = vrot.slane %v1913, 4
        %v1917 = vrot.slane %v1915, 4
        %v1918 = vsel %vm363, %v1916, %v1913
        %v1919 = vsel %vm270, %v1916, %v1917
        %v1920 = vsel %vm363, %v1919, %v1915
        %v1924 = vmul.f32 %v1888, %v1918
        %v1925 = vmul.f32 %v1889, %v1920
        %v1926 = vmul.f32 %v1890, %v1917
        %v1930 = vcombine.low %v1924, %v1924
        %v1931 = vcombine.low %v1925, %v1925
        %v1932 = vcombine.low %v1926, %v1926
        %1933 = vrot.lane.b32.xlu0 %v1930, 56
        %v1934 = vpop.permute.xlu0 %1933
        %1935 = vrot.lane.b32.xlu0 %v1924, 56
        %v1936 = vpop.permute.xlu0 %1935
        %1937 = vrot.lane.b32.xlu0 %v1931, 56
        %v1938 = vpop.permute.xlu0 %1937
        %1939 = vrot.lane.b32.xlu0 %v1925, 56
        %v1940 = vpop.permute.xlu0 %1939
        %1941 = vrot.lane.b32.xlu0 %v1932, 56
        %v1942 = vpop.permute.xlu0 %1941
        %v1943 = vsel %vm337, %v1934, %v1936
        %v1944 = vsel %vm337, %v1936, %v1938
        %v1945 = vsel %vm337, %v1938, %v1940
        %v1946 = vsel %vm337, %v1940, %v1942
        %1951 = vst [vmem:[#allocation3 + $0x180] sm:$0xf0] %v1943
        %1952 = vst [vmem:[#allocation3 + $0x188] sm:$0xf0] %v1944
        %1953 = vst [vmem:[#allocation3 + $0x190] sm:$0xf0] %v1945
        %1954 = vst [vmem:[#allocation3 + $0x198] sm:$0xf0] %v1946
        %v1955 = vld [vmem:[#allocation2 + $0x4] sm:$0xff]
        %v1956 = vld [vmem:[#allocation2 + $0xc] sm:$0xff]
        %v1957 = vld [vmem:[#allocation2 + $0x14] sm:$0xf]
        %s1958 = scalar_lea.vmem [#allocation7], 98
        %v1959 = vld [vmem:[%s1958] ss:$8 sm:$0xf]
        %v1961 = vlaneseq
        %v1962 = vshrl.u32 %v1961, 7
        %v1963 = vsub.s32 0, %v1962
        %v1964 = vrot.slane %v1959, %v1963
        %v1965 = vlaneseq
        %v1966 = vshrl.u32 %v1965, 7
        %v1967 = vsub.s32 1, %v1966
        %v1968 = vrot.slane %v1959, %v1967
        %v1969 = vlaneseq
        %v1970 = vshrl.u32 %v1969, 7
        %v1971 = vsub.s32 2, %v1970
        %v1972 = vrot.slane %v1959, %v1971
        %v1973 = vlaneseq
        %v1974 = vshrl.u32 %v1973, 7
        %v1975 = vsub.s32 3, %v1974
        %v1976 = vrot.slane %v1959, %v1975
        %v1977 = vcombine.low %v1964, %v1968
        %v1978 = vcombine.low %v1972, %v1976
        %1979 = vrot.lane.b32.xlu0 %v1977, 73
        %v1980 = vpop.permute.xlu0 %1979
        %1981 = vrot.lane.b32.xlu0 %v1978, 73
        %v1982 = vpop.permute.xlu0 %1981
        %v1983 = vrot.slane %v1980, 4
        %v1984 = vrot.slane %v1982, 4
        %v1985 = vsel %vm294, %v1983, %v1980
        %v1986 = vsel %vm270, %v1983, %v1984
        %v1987 = vsel %vm294, %v1986, %v1982
        %v1991 = vmul.f32 %v1955, %v1985
        %v1992 = vmul.f32 %v1956, %v1987
        %v1993 = vmul.f32 %v1957, %v1984
        %v1997 = vcombine.high %v1991, %v1991
        %v1998 = vcombine.high %v1992, %v1992
        %1999 = vrot.lane.b32.xlu0 %v1991, 55
        %v2000 = vpop.permute.xlu0 %1999
        %2001 = vrot.lane.b32.xlu0 %v1997, 55
        %v2002 = vpop.permute.xlu0 %2001
        %2003 = vrot.lane.b32.xlu0 %v1992, 55
        %v2004 = vpop.permute.xlu0 %2003
        %2005 = vrot.lane.b32.xlu0 %v1998, 55
        %v2006 = vpop.permute.xlu0 %2005
        %2007 = vrot.lane.b32.xlu0 %v1993, 55
        %v2008 = vpop.permute.xlu0 %2007
        %v2009 = vsel %vm268, %v2000, %v2002
        %v2010 = vsel %vm268, %v2002, %v2004
        %v2011 = vsel %vm268, %v2004, %v2006
        %v2012 = vsel %vm268, %v2006, %v2008
        %2017 = vst [vmem:[#allocation3 + $0x1a0] sm:$0xf] %v2009
        %2018 = vst [vmem:[#allocation3 + $0x1a8] sm:$0xf] %v2010
        %2019 = vst [vmem:[#allocation3 + $0x1b0] sm:$0xf] %v2011
        %2020 = vst [vmem:[#allocation3 + $0x1b8] sm:$0xf] %v2012
        %v2021 = vld [vmem:[%s2] sm:$0xff]
        %v2022 = vld [vmem:[#allocation3] sm:$0xff]
        %v2023 = vld [vmem:[#allocation3 + $0x8] sm:$0xff]
        %v2024 = vld [vmem:[#allocation3 + $0x10] sm:$0xff]
        %v2025 = vld [vmem:[#allocation3 + $0x18] sm:$0xff]
        %v2026 = vld [vmem:[#allocation3 + $0x20] sm:$0xff]
        %v2027 = vld [vmem:[#allocation3 + $0x28] sm:$0xff]
        %v2028 = vld [vmem:[#allocation3 + $0x30] sm:$0xff]
        %v2029 = vld [vmem:[#allocation3 + $0x38] sm:$0xff]
        %v2030 = vld [vmem:[#allocation3 + $0x40] sm:$0xff]
        %v2031 = vld [vmem:[#allocation3 + $0x48] sm:$0xff]
        %v2032 = vld [vmem:[#allocation3 + $0x50] sm:$0xff]
        %v2033 = vld [vmem:[#allocation3 + $0x58] sm:$0xff]
        %v2034 = vld [vmem:[#allocation3 + $0x60] sm:$0xff]
        %v2035 = vld [vmem:[#allocation3 + $0x68] sm:$0xff]
        %v2036 = vld [vmem:[#allocation3 + $0x70] sm:$0xff]
        %v2037 = vld [vmem:[#allocation3 + $0x78] sm:$0xff]
        %v2038 = vld [vmem:[#allocation3 + $0x80] sm:$0xff]
        %v2039 = vld [vmem:[#allocation3 + $0x88] sm:$0xff]
        %v2040 = vld [vmem:[#allocation3 + $0x90] sm:$0xff]
        %v2041 = vld [vmem:[#allocation3 + $0x98] sm:$0xff]
        %v2042 = vld [vmem:[#allocation3 + $0xa0] sm:$0xff]
        %v2043 = vld [vmem:[#allocation3 + $0xa8] sm:$0xff]
        %v2044 = vld [vmem:[#allocation3 + $0xb0] sm:$0xff]
        %v2045 = vld [vmem:[#allocation3 + $0xb8] sm:$0xff]
        %v2046 = vld [vmem:[#allocation3 + $0xc0] sm:$0xff]
        %v2047 = vld [vmem:[#allocation3 + $0xc8] sm:$0xff]
        %v2048 = vld [vmem:[#allocation3 + $0xd0] sm:$0xff]
        %v2049 = vld [vmem:[#allocation3 + $0xd8] sm:$0xff]
        %v2050 = vld [vmem:[#allocation3 + $0xe0] sm:$0xff]
        %v2051 = vld [vmem:[#allocation3 + $0xe8] sm:$0xff]
        %v2052 = vld [vmem:[#allocation3 + $0xf0] sm:$0xff]
        %v2053 = vld [vmem:[#allocation3 + $0xf8] sm:$0xff]
        %v2054 = vld [vmem:[#allocation3 + $0x100] sm:$0xff]
        %v2055 = vld [vmem:[#allocation3 + $0x108] sm:$0xff]
        %v2056 = vld [vmem:[#allocation3 + $0x110] sm:$0xff]
        %v2057 = vld [vmem:[#allocation3 + $0x118] sm:$0xff]
        %v2058 = vld [vmem:[#allocation3 + $0x120] sm:$0xff]
        %v2059 = vld [vmem:[#allocation3 + $0x128] sm:$0xff]
        %v2060 = vld [vmem:[#allocation3 + $0x130] sm:$0xff]
        %v2061 = vld [vmem:[#allocation3 + $0x138] sm:$0xff]
        %v2062 = vld [vmem:[#allocation3 + $0x140] sm:$0xff]
        %v2063 = vld [vmem:[#allocation3 + $0x148] sm:$0xff]
        %v2064 = vld [vmem:[#allocation3 + $0x150] sm:$0xff]
        %v2065 = vld [vmem:[#allocation3 + $0x158] sm:$0xff]
        %v2066 = vld [vmem:[#allocation3 + $0x160] sm:$0xff]
        %v2067 = vld [vmem:[#allocation3 + $0x168] sm:$0xff]
        %v2068 = vld [vmem:[#allocation3 + $0x170] sm:$0xff]
        %v2069 = vld [vmem:[#allocation3 + $0x178] sm:$0xff]
        %v2070 = vld [vmem:[#allocation3 + $0x180] sm:$0xff]
        %v2071 = vld [vmem:[#allocation3 + $0x188] sm:$0xff]
        %v2072 = vld [vmem:[#allocation3 + $0x190] sm:$0xff]
        %v2073 = vld [vmem:[#allocation3 + $0x198] sm:$0xff]
        %v2074 = vld [vmem:[#allocation3 + $0x1a0] sm:$0xff]
        %v2075 = vld [vmem:[#allocation3 + $0x1a8] sm:$0xff]
        %v2076 = vld [vmem:[#allocation3 + $0x1b0] sm:$0xff]
        %v2077 = vld [vmem:[#allocation3 + $0x1b8] sm:$0xff]
        %v2078 = vld [vmem:[%s3] sm:$0xff]
        %2080 = vset.pattern.permute.xlu0 0
        %2081 = vperm.xlu0 %2080, %v2078
        %v2082 = vpop.permute.xlu0 %2081
        %vm2084 = vcmask 916480
        %v2086 = vsel %vm2084, %v2021, 0
        %2088 = vmatprep.subr.mxu0 0.0
        %2089 = vmatpush1.msra.mxu0 0.0
        %2090 = vmatprep.subr.mxu0 0.0
        %2091 = vmatpush1.msra.mxu0 0.0
        %v2092 = vand.u32 %v2075, 4294901760
        %2093 = vmatprep.subr.mxu0 %v2092
        %v2094 = vand.u32 %v2074, 4294901760
        %2095 = vmatpush1.msra.mxu0 %v2094
        %v2096 = vand.u32 %v2071, 4294901760
        %2097 = vmatprep.subr.mxu0 %v2096
        %v2098 = vand.u32 %v2070, 4294901760
        %2099 = vmatpush1.msra.mxu0 %v2098
        %v2100 = vand.u32 %v2067, 4294901760
        %2101 = vmatprep.subr.mxu0 %v2100
        %v2102 = vand.u32 %v2066, 4294901760
        %2103 = vmatpush1.msra.mxu0 %v2102
        %v2104 = vand.u32 %v2063, 4294901760
        %2105 = vmatprep.subr.mxu0 %v2104
        %v2106 = vand.u32 %v2062, 4294901760
        %2107 = vmatpush1.msra.mxu0 %v2106
        %v2108 = vand.u32 %v2059, 4294901760
        %2109 = vmatprep.subr.mxu0 %v2108
        %v2110 = vand.u32 %v2058, 4294901760
        %2111 = vmatpush1.msra.mxu0 %v2110
        %v2112 = vand.u32 %v2055, 4294901760
        %2113 = vmatprep.subr.mxu0 %v2112
        %v2114 = vand.u32 %v2054, 4294901760
        %2115 = vmatpush1.msra.mxu0 %v2114
        %v2116 = vand.u32 %v2051, 4294901760
        %2117 = vmatprep.subr.mxu0 %v2116
        %v2118 = vand.u32 %v2050, 4294901760
        %2119 = vmatpush1.msra.mxu0 %v2118
        %v2120 = vand.u32 %v2047, 4294901760
        %2121 = vmatprep.subr.mxu0 %v2120
        %v2122 = vand.u32 %v2046, 4294901760
        %2123 = vmatpush1.msra.mxu0 %v2122
        %v2124 = vand.u32 %v2043, 4294901760
        %2125 = vmatprep.subr.mxu0 %v2124
        %v2126 = vand.u32 %v2042, 4294901760
        %2127 = vmatpush1.msra.mxu0 %v2126
        %v2128 = vand.u32 %v2039, 4294901760
        %2129 = vmatprep.subr.mxu0 %v2128
        %v2130 = vand.u32 %v2038, 4294901760
        %2131 = vmatpush1.msra.mxu0 %v2130
        %v2132 = vand.u32 %v2035, 4294901760
        %2133 = vmatprep.subr.mxu0 %v2132
        %v2134 = vand.u32 %v2034, 4294901760
        %2135 = vmatpush1.msra.mxu0 %v2134
        %v2136 = vand.u32 %v2031, 4294901760
        %2137 = vmatprep.subr.mxu0 %v2136
        %v2138 = vand.u32 %v2030, 4294901760
        %2139 = vmatpush1.msra.mxu0 %v2138
        %v2140 = vand.u32 %v2027, 4294901760
        %2141 = vmatprep.subr.mxu0 %v2140
        %v2142 = vand.u32 %v2026, 4294901760
        %2143 = vmatpush1.msra.mxu0 %v2142
        %v2144 = vand.u32 %v2023, 4294901760
        %2145 = vmatprep.subr.mxu0 %v2144
        %v2146 = vand.u32 %v2022, 4294901760
        %2147 = vmatpush1.msra.mxu0 %v2146
        %2148 = vmatprep.subr.mxu0 0.0
        %2149 = vmatpush2.msra.mxu0 0.0
        %2150 = vmatprep.subr.mxu0 0.0
        %2151 = vmatpush2.msra.mxu0 0.0
        %2152 = vmatprep.subr.mxu0 0.0
        %2153 = vmatpush2.msra.mxu0 0.0
        %2154 = vmatprep.subr.mxu0 0.0
        %2155 = vmatpush2.msra.mxu0 0.0
        %2156 = vmatprep.subr.mxu0 0.0
        %2157 = vmatpush2.msra.mxu0 0.0
        %2158 = vmatprep.subr.mxu0 0.0
        %2159 = vmatpush2.msra.mxu0 0.0
        %2160 = vmatprep.subr.mxu0 0.0
        %2161 = vmatpush2.msra.mxu0 0.0
        %2162 = vmatprep.subr.mxu0 0.0
        %2163 = vmatpush2.msra.mxu0 0.0
        %2164 = vmatprep.subr.mxu0 0.0
        %2165 = vmatpush2.msra.mxu0 0.0
        %2166 = vmatprep.subr.mxu0 0.0
        %2167 = vmatpush2.msra.mxu0 0.0
        %2168 = vmatprep.subr.mxu0 0.0
        %2169 = vmatpush2.msra.mxu0 0.0
        %2170 = vmatprep.subr.mxu0 0.0
        %2171 = vmatpush2.msra.mxu0 0.0
        %2172 = vmatprep.subr.mxu0 0.0
        %2173 = vmatpush2.msra.mxu0 0.0
        %2174 = vmatprep.subr.mxu0 0.0
        %2175 = vmatpush2.msra.mxu0 0.0
        %2176 = vmatprep.subr.mxu0 0.0
        %2177 = vmatpush2.msra.mxu0 0.0
        %2178 = vmatprep.subr.mxu0 0.0
        %2179 = vmatpush2.msra.mxu0 0.0
        %2180 = vmatprep.mubr.f32.mxu0 0.0
        %v2181 = vand.u32 %v2086, 4294901760
        %v2182 = vsub.f32 %v2086, %v2181
        %v2183 = vand.u32 %v2182, 4294901760
        %v2184 = vsub.f32 %v2182, %v2183
        %v2185 = vand.u32 %v2184, 4294901760
        %2186 = vmatmul.mubr.f32.gmra.mxu0 %v2185
        %v2187 = vpop.f32.mrf.mxu0
        %v2188 = vadd.f32 %v2082, %v2187
        %v2189 = vpop.f32.mrf.mxu0
        %v2190 = vadd.f32 %v2082, %v2189
        %2191 = vdwg.mxu0
        %2192 = vmatprep.subr.mxu0 0.0
        %2193 = vmatpush1.msra.mxu0 0.0
        %2194 = vmatprep.subr.mxu0 0.0
        %2195 = vmatpush1.msra.mxu0 0.0
        %v2196 = vand.u32 %v2075, 4294901760
        %v2197 = vsub.f32 %v2075, %v2196
        %v2198 = vand.u32 %v2197, 4294901760
        %v2199 = vsub.f32 %v2197, %v2198
        %v2200 = vand.u32 %v2199, 4294901760
        %2201 = vmatprep.subr.mxu0 %v2200
        %v2202 = vand.u32 %v2074, 4294901760
        %v2203 = vsub.f32 %v2074, %v2202
        %v2204 = vand.u32 %v2203, 4294901760
        %v2205 = vsub.f32 %v2203, %v2204
        %v2206 = vand.u32 %v2205, 4294901760
        %2207 = vmatpush1.msra.mxu0 %v2206
        %v2208 = vand.u32 %v2071, 4294901760
        %v2209 = vsub.f32 %v2071, %v2208
        %v2210 = vand.u32 %v2209, 4294901760
        %v2211 = vsub.f32 %v2209, %v2210
        %v2212 = vand.u32 %v2211, 4294901760
        %2213 = vmatprep.subr.mxu0 %v2212
        %v2214 = vand.u32 %v2070, 4294901760
        %v2215 = vsub.f32 %v2070, %v2214
        %v2216 = vand.u32 %v2215, 4294901760
        %v2217 = vsub.f32 %v2215, %v2216
        %v2218 = vand.u32 %v2217, 4294901760
        %2219 = vmatpush1.msra.mxu0 %v2218
        %v2220 = vand.u32 %v2067, 4294901760
        %v2221 = vsub.f32 %v2067, %v2220
        %v2222 = vand.u32 %v2221, 4294901760
        %v2223 = vsub.f32 %v2221, %v2222
        %v2224 = vand.u32 %v2223, 4294901760
        %2225 = vmatprep.subr.mxu0 %v2224
        %v2226 = vand.u32 %v2066, 4294901760
        %v2227 = vsub.f32 %v2066, %v2226
        %v2228 = vand.u32 %v2227, 4294901760
        %v2229 = vsub.f32 %v2227, %v2228
        %v2230 = vand.u32 %v2229, 4294901760
        %2231 = vmatpush1.msra.mxu0 %v2230
        %v2232 = vand.u32 %v2063, 4294901760
        %v2233 = vsub.f32 %v2063, %v2232
        %v2234 = vand.u32 %v2233, 4294901760
        %v2235 = vsub.f32 %v2233, %v2234
        %v2236 = vand.u32 %v2235, 4294901760
        %2237 = vmatprep.subr.mxu0 %v2236
        %v2238 = vand.u32 %v2062, 4294901760
        %v2239 = vsub.f32 %v2062, %v2238
        %v2240 = vand.u32 %v2239, 4294901760
        %v2241 = vsub.f32 %v2239, %v2240
        %v2242 = vand.u32 %v2241, 4294901760
        %2243 = vmatpush1.msra.mxu0 %v2242
        %v2244 = vand.u32 %v2059, 4294901760
        %v2245 = vsub.f32 %v2059, %v2244
        %v2246 = vand.u32 %v2245, 4294901760
        %v2247 = vsub.f32 %v2245, %v2246
        %v2248 = vand.u32 %v2247, 4294901760
        %2249 = vmatprep.subr.mxu0 %v2248
        %v2250 = vand.u32 %v2058, 4294901760
        %v2251 = vsub.f32 %v2058, %v2250
        %v2252 = vand.u32 %v2251, 4294901760
        %v2253 = vsub.f32 %v2251, %v2252
        %v2254 = vand.u32 %v2253, 4294901760
        %2255 = vmatpush1.msra.mxu0 %v2254
        %v2256 = vand.u32 %v2055, 4294901760
        %v2257 = vsub.f32 %v2055, %v2256
        %v2258 = vand.u32 %v2257, 4294901760
        %v2259 = vsub.f32 %v2257, %v2258
        %v2260 = vand.u32 %v2259, 4294901760
        %2261 = vmatprep.subr.mxu0 %v2260
        %v2262 = vand.u32 %v2054, 4294901760
        %v2263 = vsub.f32 %v2054, %v2262
        %v2264 = vand.u32 %v2263, 4294901760
        %v2265 = vsub.f32 %v2263, %v2264
        %v2266 = vand.u32 %v2265, 4294901760
        %2267 = vmatpush1.msra.mxu0 %v2266
        %v2268 = vand.u32 %v2051, 4294901760
        %v2269 = vsub.f32 %v2051, %v2268
        %v2270 = vand.u32 %v2269, 4294901760
        %v2271 = vsub.f32 %v2269, %v2270
        %v2272 = vand.u32 %v2271, 4294901760
        %2273 = vmatprep.subr.mxu0 %v2272
        %v2274 = vand.u32 %v2050, 4294901760
        %v2275 = vsub.f32 %v2050, %v2274
        %v2276 = vand.u32 %v2275, 4294901760
        %v2277 = vsub.f32 %v2275, %v2276
        %v2278 = vand.u32 %v2277, 4294901760
        %2279 = vmatpush1.msra.mxu0 %v2278
        %v2280 = vand.u32 %v2047, 4294901760
        %v2281 = vsub.f32 %v2047, %v2280
        %v2282 = vand.u32 %v2281, 4294901760
        %v2283 = vsub.f32 %v2281, %v2282
        %v2284 = vand.u32 %v2283, 4294901760
        %2285 = vmatprep.subr.mxu0 %v2284
        %v2286 = vand.u32 %v2046, 4294901760
        %v2287 = vsub.f32 %v2046, %v2286
        %v2288 = vand.u32 %v2287, 4294901760
        %v2289 = vsub.f32 %v2287, %v2288
        %v2290 = vand.u32 %v2289, 4294901760
        %2291 = vmatpush1.msra.mxu0 %v2290
        %v2292 = vand.u32 %v2043, 4294901760
        %v2293 = vsub.f32 %v2043, %v2292
        %v2294 = vand.u32 %v2293, 4294901760
        %v2295 = vsub.f32 %v2293, %v2294
        %v2296 = vand.u32 %v2295, 4294901760
        %2297 = vmatprep.subr.mxu0 %v2296
        %v2298 = vand.u32 %v2042, 4294901760
        %v2299 = vsub.f32 %v2042, %v2298
        %v2300 = vand.u32 %v2299, 4294901760
        %v2301 = vsub.f32 %v2299, %v2300
        %v2302 = vand.u32 %v2301, 4294901760
        %2303 = vmatpush1.msra.mxu0 %v2302
        %v2304 = vand.u32 %v2039, 4294901760
        %v2305 = vsub.f32 %v2039, %v2304
        %v2306 = vand.u32 %v2305, 4294901760
        %v2307 = vsub.f32 %v2305, %v2306
        %v2308 = vand.u32 %v2307, 4294901760
        %2309 = vmatprep.subr.mxu0 %v2308
        %v2310 = vand.u32 %v2038, 4294901760
        %v2311 = vsub.f32 %v2038, %v2310
        %v2312 = vand.u32 %v2311, 4294901760
        %v2313 = vsub.f32 %v2311, %v2312
        %v2314 = vand.u32 %v2313, 4294901760
        %2315 = vmatpush1.msra.mxu0 %v2314
        %v2316 = vand.u32 %v2035, 4294901760
        %v2317 = vsub.f32 %v2035, %v2316
        %v2318 = vand.u32 %v2317, 4294901760
        %v2319 = vsub.f32 %v2317, %v2318
        %v2320 = vand.u32 %v2319, 4294901760
        %2321 = vmatprep.subr.mxu0 %v2320
        %v2322 = vand.u32 %v2034, 4294901760
        %v2323 = vsub.f32 %v2034, %v2322
        %v2324 = vand.u32 %v2323, 4294901760
        %v2325 = vsub.f32 %v2323, %v2324
        %v2326 = vand.u32 %v2325, 4294901760
        %2327 = vmatpush1.msra.mxu0 %v2326
        %v2328 = vand.u32 %v2031, 4294901760
        %v2329 = vsub.f32 %v2031, %v2328
        %v2330 = vand.u32 %v2329, 4294901760
        %v2331 = vsub.f32 %v2329, %v2330
        %v2332 = vand.u32 %v2331, 4294901760
        %2333 = vmatprep.subr.mxu0 %v2332
        %v2334 = vand.u32 %v2030, 4294901760
        %v2335 = vsub.f32 %v2030, %v2334
        %v2336 = vand.u32 %v2335, 4294901760
        %v2337 = vsub.f32 %v2335, %v2336
        %v2338 = vand.u32 %v2337, 4294901760
        %2339 = vmatpush1.msra.mxu0 %v2338
        %v2340 = vand.u32 %v2027, 4294901760
        %v2341 = vsub.f32 %v2027, %v2340
        %v2342 = vand.u32 %v2341, 4294901760
        %v2343 = vsub.f32 %v2341, %v2342
        %v2344 = vand.u32 %v2343, 4294901760
        %2345 = vmatprep.subr.mxu0 %v2344
        %v2346 = vand.u32 %v2026, 4294901760
        %v2347 = vsub.f32 %v2026, %v2346
        %v2348 = vand.u32 %v2347, 4294901760
        %v2349 = vsub.f32 %v2347, %v2348
        %v2350 = vand.u32 %v2349, 4294901760
        %2351 = vmatpush1.msra.mxu0 %v2350
        %v2352 = vand.u32 %v2023, 4294901760
        %v2353 = vsub.f32 %v2023, %v2352
        %v2354 = vand.u32 %v2353, 4294901760
        %v2355 = vsub.f32 %v2353, %v2354
        %v2356 = vand.u32 %v2355, 4294901760
        %2357 = vmatprep.subr.mxu0 %v2356
        %v2358 = vand.u32 %v2022, 4294901760
        %v2359 = vsub.f32 %v2022, %v2358
        %v2360 = vand.u32 %v2359, 4294901760
        %v2361 = vsub.f32 %v2359, %v2360
        %v2362 = vand.u32 %v2361, 4294901760
        %2363 = vmatpush1.msra.mxu0 %v2362
        %2364 = vmatprep.subr.mxu0 0.0
        %2365 = vmatpush2.msra.mxu0 0.0
        %2366 = vmatprep.subr.mxu0 0.0
        %2367 = vmatpush2.msra.mxu0 0.0
        %2368 = vmatprep.subr.mxu0 0.0
        %2369 = vmatpush2.msra.mxu0 0.0
        %2370 = vmatprep.subr.mxu0 0.0
        %2371 = vmatpush2.msra.mxu0 0.0
        %2372 = vmatprep.subr.mxu0 0.0
        %2373 = vmatpush2.msra.mxu0 0.0
        %2374 = vmatprep.subr.mxu0 0.0
        %2375 = vmatpush2.msra.mxu0 0.0
        %2376 = vmatprep.subr.mxu0 0.0
        %2377 = vmatpush2.msra.mxu0 0.0
        %2378 = vmatprep.subr.mxu0 0.0
        %2379 = vmatpush2.msra.mxu0 0.0
        %2380 = vmatprep.subr.mxu0 0.0
        %2381 = vmatpush2.msra.mxu0 0.0
        %2382 = vmatprep.subr.mxu0 0.0
        %2383 = vmatpush2.msra.mxu0 0.0
        %2384 = vmatprep.subr.mxu0 0.0
        %2385 = vmatpush2.msra.mxu0 0.0
        %2386 = vmatprep.subr.mxu0 0.0
        %2387 = vmatpush2.msra.mxu0 0.0
        %2388 = vmatprep.subr.mxu0 0.0
        %2389 = vmatpush2.msra.mxu0 0.0
        %2390 = vmatprep.subr.mxu0 0.0
        %2391 = vmatpush2.msra.mxu0 0.0
        %2392 = vmatprep.subr.mxu0 0.0
        %2393 = vmatpush2.msra.mxu0 0.0
        %2394 = vmatprep.subr.mxu0 0.0
        %2395 = vmatpush2.msra.mxu0 0.0
        %2396 = vmatprep.mubr.f32.mxu0 0.0
        %v2397 = vand.u32 %v2086, 4294901760
        %2398 = vmatmul.mubr.f32.gmra.mxu0 %v2397
        %v2399 = vpop.f32.mrf.mxu0
        %v2400 = vadd.f32 %v2188, %v2399
        %v2401 = vpop.f32.mrf.mxu0
        %v2402 = vadd.f32 %v2190, %v2401
        %2403 = vdwg.mxu0
        %2404 = vmatprep.subr.mxu0 0.0
        %2405 = vmatpush1.msra.mxu0 0.0
        %2406 = vmatprep.subr.mxu0 0.0
        %2407 = vmatpush1.msra.mxu0 0.0
        %v2408 = vand.u32 %v2075, 4294901760
        %v2409 = vsub.f32 %v2075, %v2408
        %2410 = vmatprep.subr.mxu0 %v2409
        %v2411 = vand.u32 %v2074, 4294901760
        %v2412 = vsub.f32 %v2074, %v2411
        %2413 = vmatpush1.msra.mxu0 %v2412
        %v2414 = vand.u32 %v2071, 4294901760
        %v2415 = vsub.f32 %v2071, %v2414
        %2416 = vmatprep.subr.mxu0 %v2415
        %v2417 = vand.u32 %v2070, 4294901760
        %v2418 = vsub.f32 %v2070, %v2417
        %2419 = vmatpush1.msra.mxu0 %v2418
        %v2420 = vand.u32 %v2067, 4294901760
        %v2421 = vsub.f32 %v2067, %v2420
        %2422 = vmatprep.subr.mxu0 %v2421
        %v2423 = vand.u32 %v2066, 4294901760
        %v2424 = vsub.f32 %v2066, %v2423
        %2425 = vmatpush1.msra.mxu0 %v2424
        %v2426 = vand.u32 %v2063, 4294901760
        %v2427 = vsub.f32 %v2063, %v2426
        %2428 = vmatprep.subr.mxu0 %v2427
        %v2429 = vand.u32 %v2062, 4294901760
        %v2430 = vsub.f32 %v2062, %v2429
        %2431 = vmatpush1.msra.mxu0 %v2430
        %v2432 = vand.u32 %v2059, 4294901760
        %v2433 = vsub.f32 %v2059, %v2432
        %2434 = vmatprep.subr.mxu0 %v2433
        %v2435 = vand.u32 %v2058, 4294901760
        %v2436 = vsub.f32 %v2058, %v2435
        %2437 = vmatpush1.msra.mxu0 %v2436
        %v2438 = vand.u32 %v2055, 4294901760
        %v2439 = vsub.f32 %v2055, %v2438
        %2440 = vmatprep.subr.mxu0 %v2439
        %v2441 = vand.u32 %v2054, 4294901760
        %v2442 = vsub.f32 %v2054, %v2441
        %2443 = vmatpush1.msra.mxu0 %v2442
        %v2444 = vand.u32 %v2051, 4294901760
        %v2445 = vsub.f32 %v2051, %v2444
        %2446 = vmatprep.subr.mxu0 %v2445
        %v2447 = vand.u32 %v2050, 4294901760
        %v2448 = vsub.f32 %v2050, %v2447
        %2449 = vmatpush1.msra.mxu0 %v2448
        %v2450 = vand.u32 %v2047, 4294901760
        %v2451 = vsub.f32 %v2047, %v2450
        %2452 = vmatprep.subr.mxu0 %v2451
        %v2453 = vand.u32 %v2046, 4294901760
        %v2454 = vsub.f32 %v2046, %v2453
        %2455 = vmatpush1.msra.mxu0 %v2454
        %v2456 = vand.u32 %v2043, 4294901760
        %v2457 = vsub.f32 %v2043, %v2456
        %2458 = vmatprep.subr.mxu0 %v2457
        %v2459 = vand.u32 %v2042, 4294901760
        %v2460 = vsub.f32 %v2042, %v2459
        %2461 = vmatpush1.msra.mxu0 %v2460
        %v2462 = vand.u32 %v2039, 4294901760
        %v2463 = vsub.f32 %v2039, %v2462
        %2464 = vmatprep.subr.mxu0 %v2463
        %v2465 = vand.u32 %v2038, 4294901760
        %v2466 = vsub.f32 %v2038, %v2465
        %2467 = vmatpush1.msra.mxu0 %v2466
        %v2468 = vand.u32 %v2035, 4294901760
        %v2469 = vsub.f32 %v2035, %v2468
        %2470 = vmatprep.subr.mxu0 %v2469
        %v2471 = vand.u32 %v2034, 4294901760
        %v2472 = vsub.f32 %v2034, %v2471
        %2473 = vmatpush1.msra.mxu0 %v2472
        %v2474 = vand.u32 %v2031, 4294901760
        %v2475 = vsub.f32 %v2031, %v2474
        %2476 = vmatprep.subr.mxu0 %v2475
        %v2477 = vand.u32 %v2030, 4294901760
        %v2478 = vsub.f32 %v2030, %v2477
        %2479 = vmatpush1.msra.mxu0 %v2478
        %v2480 = vand.u32 %v2027, 4294901760
        %v2481 = vsub.f32 %v2027, %v2480
        %2482 = vmatprep.subr.mxu0 %v2481
        %v2483 = vand.u32 %v2026, 4294901760
        %v2484 = vsub.f32 %v2026, %v2483
        %2485 = vmatpush1.msra.mxu0 %v2484
        %v2486 = vand.u32 %v2023, 4294901760
        %v2487 = vsub.f32 %v2023, %v2486
        %2488 = vmatprep.subr.mxu0 %v2487
        %v2489 = vand.u32 %v2022, 4294901760
        %v2490 = vsub.f32 %v2022, %v2489
        %2491 = vmatpush1.msra.mxu0 %v2490
        %2492 = vmatprep.subr.mxu0 0.0
        %2493 = vmatpush2.msra.mxu0 0.0
        %2494 = vmatprep.subr.mxu0 0.0
        %2495 = vmatpush2.msra.mxu0 0.0
        %2496 = vmatprep.subr.mxu0 0.0
        %2497 = vmatpush2.msra.mxu0 0.0
        %2498 = vmatprep.subr.mxu0 0.0
        %2499 = vmatpush2.msra.mxu0 0.0
        %2500 = vmatprep.subr.mxu0 0.0
        %2501 = vmatpush2.msra.mxu0 0.0
        %2502 = vmatprep.subr.mxu0 0.0
        %2503 = vmatpush2.msra.mxu0 0.0
        %2504 = vmatprep.subr.mxu0 0.0
        %2505 = vmatpush2.msra.mxu0 0.0
        %2506 = vmatprep.subr.mxu0 0.0
        %2507 = vmatpush2.msra.mxu0 0.0
        %2508 = vmatprep.subr.mxu0 0.0
        %2509 = vmatpush2.msra.mxu0 0.0
        %2510 = vmatprep.subr.mxu0 0.0
        %2511 = vmatpush2.msra.mxu0 0.0
        %2512 = vmatprep.subr.mxu0 0.0
        %2513 = vmatpush2.msra.mxu0 0.0
        %2514 = vmatprep.subr.mxu0 0.0
        %2515 = vmatpush2.msra.mxu0 0.0
        %2516 = vmatprep.subr.mxu0 0.0
        %2517 = vmatpush2.msra.mxu0 0.0
        %2518 = vmatprep.subr.mxu0 0.0
        %2519 = vmatpush2.msra.mxu0 0.0
        %2520 = vmatprep.subr.mxu0 0.0
        %2521 = vmatpush2.msra.mxu0 0.0
        %2522 = vmatprep.subr.mxu0 0.0
        %2523 = vmatpush2.msra.mxu0 0.0
        %2524 = vmatprep.mubr.f32.mxu0 0.0
        %v2525 = vand.u32 %v2086, 4294901760
        %v2526 = vsub.f32 %v2086, %v2525
        %2527 = vmatmul.mubr.f32.gmra.mxu0 %v2526
        %v2528 = vpop.f32.mrf.mxu0
        %v2529 = vadd.f32 %v2400, %v2528
        %v2530 = vpop.f32.mrf.mxu0
        %v2531 = vadd.f32 %v2402, %v2530
        %2532 = vdwg.mxu0
        %2533 = vmatprep.subr.mxu0 0.0
        %2534 = vmatpush1.msra.mxu0 0.0
        %2535 = vmatprep.subr.mxu0 0.0
        %2536 = vmatpush1.msra.mxu0 0.0
        %v2537 = vand.u32 %v2075, 4294901760
        %2538 = vmatprep.subr.mxu0 %v2537
        %v2539 = vand.u32 %v2074, 4294901760
        %2540 = vmatpush1.msra.mxu0 %v2539
        %v2541 = vand.u32 %v2071, 4294901760
        %2542 = vmatprep.subr.mxu0 %v2541
        %v2543 = vand.u32 %v2070, 4294901760
        %2544 = vmatpush1.msra.mxu0 %v2543
        %v2545 = vand.u32 %v2067, 4294901760
        %2546 = vmatprep.subr.mxu0 %v2545
        %v2547 = vand.u32 %v2066, 4294901760
        %2548 = vmatpush1.msra.mxu0 %v2547
        %v2549 = vand.u32 %v2063, 4294901760
        %2550 = vmatprep.subr.mxu0 %v2549
        %v2551 = vand.u32 %v2062, 4294901760
        %2552 = vmatpush1.msra.mxu0 %v2551
        %v2553 = vand.u32 %v2059, 4294901760
        %2554 = vmatprep.subr.mxu0 %v2553
        %v2555 = vand.u32 %v2058, 4294901760
        %2556 = vmatpush1.msra.mxu0 %v2555
        %v2557 = vand.u32 %v2055, 4294901760
        %2558 = vmatprep.subr.mxu0 %v2557
        %v2559 = vand.u32 %v2054, 4294901760
        %2560 = vmatpush1.msra.mxu0 %v2559
        %v2561 = vand.u32 %v2051, 4294901760
        %2562 = vmatprep.subr.mxu0 %v2561
        %v2563 = vand.u32 %v2050, 4294901760
        %2564 = vmatpush1.msra.mxu0 %v2563
        %v2565 = vand.u32 %v2047, 4294901760
        %2566 = vmatprep.subr.mxu0 %v2565
        %v2567 = vand.u32 %v2046, 4294901760
        %2568 = vmatpush1.msra.mxu0 %v2567
        %v2569 = vand.u32 %v2043, 4294901760
        %2570 = vmatprep.subr.mxu0 %v2569
        %v2571 = vand.u32 %v2042, 4294901760
        %2572 = vmatpush1.msra.mxu0 %v2571
        %v2573 = vand.u32 %v2039, 4294901760
        %2574 = vmatprep.subr.mxu0 %v2573
        %v2575 = vand.u32 %v2038, 4294901760
        %2576 = vmatpush1.msra.mxu0 %v2575
        %v2577 = vand.u32 %v2035, 4294901760
        %2578 = vmatprep.subr.mxu0 %v2577
        %v2579 = vand.u32 %v2034, 4294901760
        %2580 = vmatpush1.msra.mxu0 %v2579
        %v2581 = vand.u32 %v2031, 4294901760
        %2582 = vmatprep.subr.mxu0 %v2581
        %v2583 = vand.u32 %v2030, 4294901760
        %2584 = vmatpush1.msra.mxu0 %v2583
        %v2585 = vand.u32 %v2027, 4294901760
        %2586 = vmatprep.subr.mxu0 %v2585
        %v2587 = vand.u32 %v2026, 4294901760
        %2588 = vmatpush1.msra.mxu0 %v2587
        %v2589 = vand.u32 %v2023, 4294901760
        %2590 = vmatprep.subr.mxu0 %v2589
        %v2591 = vand.u32 %v2022, 4294901760
        %2592 = vmatpush1.msra.mxu0 %v2591
        %2593 = vmatprep.subr.mxu0 0.0
        %2594 = vmatpush2.msra.mxu0 0.0
        %2595 = vmatprep.subr.mxu0 0.0
        %2596 = vmatpush2.msra.mxu0 0.0
        %2597 = vmatprep.subr.mxu0 0.0
        %2598 = vmatpush2.msra.mxu0 0.0
        %2599 = vmatprep.subr.mxu0 0.0
        %2600 = vmatpush2.msra.mxu0 0.0
        %2601 = vmatprep.subr.mxu0 0.0
        %2602 = vmatpush2.msra.mxu0 0.0
        %2603 = vmatprep.subr.mxu0 0.0
        %2604 = vmatpush2.msra.mxu0 0.0
        %2605 = vmatprep.subr.mxu0 0.0
        %2606 = vmatpush2.msra.mxu0 0.0
        %2607 = vmatprep.subr.mxu0 0.0
        %2608 = vmatpush2.msra.mxu0 0.0
        %2609 = vmatprep.subr.mxu0 0.0
        %2610 = vmatpush2.msra.mxu0 0.0
        %2611 = vmatprep.subr.mxu0 0.0
        %2612 = vmatpush2.msra.mxu0 0.0
        %2613 = vmatprep.subr.mxu0 0.0
        %2614 = vmatpush2.msra.mxu0 0.0
        %2615 = vmatprep.subr.mxu0 0.0
        %2616 = vmatpush2.msra.mxu0 0.0
        %2617 = vmatprep.subr.mxu0 0.0
        %2618 = vmatpush2.msra.mxu0 0.0
        %2619 = vmatprep.subr.mxu0 0.0
        %2620 = vmatpush2.msra.mxu0 0.0
        %2621 = vmatprep.subr.mxu0 0.0
        %2622 = vmatpush2.msra.mxu0 0.0
        %2623 = vmatprep.subr.mxu0 0.0
        %2624 = vmatpush2.msra.mxu0 0.0
        %2625 = vmatprep.mubr.f32.mxu0 0.0
        %v2626 = vand.u32 %v2086, 4294901760
        %v2627 = vsub.f32 %v2086, %v2626
        %v2628 = vand.u32 %v2627, 4294901760
        %2629 = vmatmul.mubr.f32.gmra.mxu0 %v2628
        %v2630 = vpop.f32.mrf.mxu0
        %v2631 = vadd.f32 %v2529, %v2630
        %v2632 = vpop.f32.mrf.mxu0
        %v2633 = vadd.f32 %v2531, %v2632
        %2634 = vdwg.mxu0
        %2635 = vmatprep.subr.mxu0 0.0
        %2636 = vmatpush1.msra.mxu0 0.0
        %2637 = vmatprep.subr.mxu0 0.0
        %2638 = vmatpush1.msra.mxu0 0.0
        %v2639 = vand.u32 %v2075, 4294901760
        %v2640 = vsub.f32 %v2075, %v2639
        %v2641 = vand.u32 %v2640, 4294901760
        %2642 = vmatprep.subr.mxu0 %v2641
        %v2643 = vand.u32 %v2074, 4294901760
        %v2644 = vsub.f32 %v2074, %v2643
        %v2645 = vand.u32 %v2644, 4294901760
        %2646 = vmatpush1.msra.mxu0 %v2645
        %v2647 = vand.u32 %v2071, 4294901760
        %v2648 = vsub.f32 %v2071, %v2647
        %v2649 = vand.u32 %v2648, 4294901760
        %2650 = vmatprep.subr.mxu0 %v2649
        %v2651 = vand.u32 %v2070, 4294901760
        %v2652 = vsub.f32 %v2070, %v2651
        %v2653 = vand.u32 %v2652, 4294901760
        %2654 = vmatpush1.msra.mxu0 %v2653
        %v2655 = vand.u32 %v2067, 4294901760
        %v2656 = vsub.f32 %v2067, %v2655
        %v2657 = vand.u32 %v2656, 4294901760
        %2658 = vmatprep.subr.mxu0 %v2657
        %v2659 = vand.u32 %v2066, 4294901760
        %v2660 = vsub.f32 %v2066, %v2659
        %v2661 = vand.u32 %v2660, 4294901760
        %2662 = vmatpush1.msra.mxu0 %v2661
        %v2663 = vand.u32 %v2063, 4294901760
        %v2664 = vsub.f32 %v2063, %v2663
        %v2665 = vand.u32 %v2664, 4294901760
        %2666 = vmatprep.subr.mxu0 %v2665
        %v2667 = vand.u32 %v2062, 4294901760
        %v2668 = vsub.f32 %v2062, %v2667
        %v2669 = vand.u32 %v2668, 4294901760
        %2670 = vmatpush1.msra.mxu0 %v2669
        %v2671 = vand.u32 %v2059, 4294901760
        %v2672 = vsub.f32 %v2059, %v2671
        %v2673 = vand.u32 %v2672, 4294901760
        %2674 = vmatprep.subr.mxu0 %v2673
        %v2675 = vand.u32 %v2058, 4294901760
        %v2676 = vsub.f32 %v2058, %v2675
        %v2677 = vand.u32 %v2676, 4294901760
        %2678 = vmatpush1.msra.mxu0 %v2677
        %v2679 = vand.u32 %v2055, 4294901760
        %v2680 = vsub.f32 %v2055, %v2679
        %v2681 = vand.u32 %v2680, 4294901760
        %2682 = vmatprep.subr.mxu0 %v2681
        %v2683 = vand.u32 %v2054, 4294901760
        %v2684 = vsub.f32 %v2054, %v2683
        %v2685 = vand.u32 %v2684, 4294901760
        %2686 = vmatpush1.msra.mxu0 %v2685
        %v2687 = vand.u32 %v2051, 4294901760
        %v2688 = vsub.f32 %v2051, %v2687
        %v2689 = vand.u32 %v2688, 4294901760
        %2690 = vmatprep.subr.mxu0 %v2689
        %v2691 = vand.u32 %v2050, 4294901760
        %v2692 = vsub.f32 %v2050, %v2691
        %v2693 = vand.u32 %v2692, 4294901760
        %2694 = vmatpush1.msra.mxu0 %v2693
        %v2695 = vand.u32 %v2047, 4294901760
        %v2696 = vsub.f32 %v2047, %v2695
        %v2697 = vand.u32 %v2696, 4294901760
        %2698 = vmatprep.subr.mxu0 %v2697
        %v2699 = vand.u32 %v2046, 4294901760
        %v2700 = vsub.f32 %v2046, %v2699
        %v2701 = vand.u32 %v2700, 4294901760
        %2702 = vmatpush1.msra.mxu0 %v2701
        %v2703 = vand.u32 %v2043, 4294901760
        %v2704 = vsub.f32 %v2043, %v2703
        %v2705 = vand.u32 %v2704, 4294901760
        %2706 = vmatprep.subr.mxu0 %v2705
        %v2707 = vand.u32 %v2042, 4294901760
        %v2708 = vsub.f32 %v2042, %v2707
        %v2709 = vand.u32 %v2708, 4294901760
        %2710 = vmatpush1.msra.mxu0 %v2709
        %v2711 = vand.u32 %v2039, 4294901760
        %v2712 = vsub.f32 %v2039, %v2711
        %v2713 = vand.u32 %v2712, 4294901760
        %2714 = vmatprep.subr.mxu0 %v2713
        %v2715 = vand.u32 %v2038, 4294901760
        %v2716 = vsub.f32 %v2038, %v2715
        %v2717 = vand.u32 %v2716, 4294901760
        %2718 = vmatpush1.msra.mxu0 %v2717
        %v2719 = vand.u32 %v2035, 4294901760
        %v2720 = vsub.f32 %v2035, %v2719
        %v2721 = vand.u32 %v2720, 4294901760
        %2722 = vmatprep.subr.mxu0 %v2721
        %v2723 = vand.u32 %v2034, 4294901760
        %v2724 = vsub.f32 %v2034, %v2723
        %v2725 = vand.u32 %v2724, 4294901760
        %2726 = vmatpush1.msra.mxu0 %v2725
        %v2727 = vand.u32 %v2031, 4294901760
        %v2728 = vsub.f32 %v2031, %v2727
        %v2729 = vand.u32 %v2728, 4294901760
        %2730 = vmatprep.subr.mxu0 %v2729
        %v2731 = vand.u32 %v2030, 4294901760
        %v2732 = vsub.f32 %v2030, %v2731
        %v2733 = vand.u32 %v2732, 4294901760
        %2734 = vmatpush1.msra.mxu0 %v2733
        %v2735 = vand.u32 %v2027, 4294901760
        %v2736 = vsub.f32 %v2027, %v2735
        %v2737 = vand.u32 %v2736, 4294901760
        %2738 = vmatprep.subr.mxu0 %v2737
        %v2739 = vand.u32 %v2026, 4294901760
        %v2740 = vsub.f32 %v2026, %v2739
        %v2741 = vand.u32 %v2740, 4294901760
        %2742 = vmatpush1.msra.mxu0 %v2741
        %v2743 = vand.u32 %v2023, 4294901760
        %v2744 = vsub.f32 %v2023, %v2743
        %v2745 = vand.u32 %v2744, 4294901760
        %2746 = vmatprep.subr.mxu0 %v2745
        %v2747 = vand.u32 %v2022, 4294901760
        %v2748 = vsub.f32 %v2022, %v2747
        %v2749 = vand.u32 %v2748, 4294901760
        %2750 = vmatpush1.msra.mxu0 %v2749
        %2751 = vmatprep.subr.mxu0 0.0
        %2752 = vmatpush2.msra.mxu0 0.0
        %2753 = vmatprep.subr.mxu0 0.0
        %2754 = vmatpush2.msra.mxu0 0.0
        %2755 = vmatprep.subr.mxu0 0.0
        %2756 = vmatpush2.msra.mxu0 0.0
        %2757 = vmatprep.subr.mxu0 0.0
        %2758 = vmatpush2.msra.mxu0 0.0
        %2759 = vmatprep.subr.mxu0 0.0
        %2760 = vmatpush2.msra.mxu0 0.0
        %2761 = vmatprep.subr.mxu0 0.0
        %2762 = vmatpush2.msra.mxu0 0.0
        %2763 = vmatprep.subr.mxu0 0.0
        %2764 = vmatpush2.msra.mxu0 0.0
        %2765 = vmatprep.subr.mxu0 0.0
        %2766 = vmatpush2.msra.mxu0 0.0
        %2767 = vmatprep.subr.mxu0 0.0
        %2768 = vmatpush2.msra.mxu0 0.0
        %2769 = vmatprep.subr.mxu0 0.0
        %2770 = vmatpush2.msra.mxu0 0.0
        %2771 = vmatprep.subr.mxu0 0.0
        %2772 = vmatpush2.msra.mxu0 0.0
        %2773 = vmatprep.subr.mxu0 0.0
        %2774 = vmatpush2.msra.mxu0 0.0
        %2775 = vmatprep.subr.mxu0 0.0
        %2776 = vmatpush2.msra.mxu0 0.0
        %2777 = vmatprep.subr.mxu0 0.0
        %2778 = vmatpush2.msra.mxu0 0.0
        %2779 = vmatprep.subr.mxu0 0.0
        %2780 = vmatpush2.msra.mxu0 0.0
        %2781 = vmatprep.subr.mxu0 0.0
        %2782 = vmatpush2.msra.mxu0 0.0
        %2783 = vmatprep.mubr.f32.mxu0 0.0
        %v2784 = vand.u32 %v2086, 4294901760
        %2785 = vmatmul.mubr.f32.gmra.mxu0 %v2784
        %v2786 = vpop.f32.mrf.mxu0
        %v2787 = vadd.f32 %v2631, %v2786
        %v2788 = vpop.f32.mrf.mxu0
        %v2789 = vadd.f32 %v2633, %v2788
        %2790 = vdwg.mxu0
        %2791 = vmatprep.subr.mxu0 0.0
        %2792 = vmatpush1.msra.mxu0 0.0
        %2793 = vmatprep.subr.mxu0 0.0
        %2794 = vmatpush1.msra.mxu0 0.0
        %v2795 = vand.u32 %v2075, 4294901760
        %2796 = vmatprep.subr.mxu0 %v2795
        %v2797 = vand.u32 %v2074, 4294901760
        %2798 = vmatpush1.msra.mxu0 %v2797
        %v2799 = vand.u32 %v2071, 4294901760
        %2800 = vmatprep.subr.mxu0 %v2799
        %v2801 = vand.u32 %v2070, 4294901760
        %2802 = vmatpush1.msra.mxu0 %v2801
        %v2803 = vand.u32 %v2067, 4294901760
        %2804 = vmatprep.subr.mxu0 %v2803
        %v2805 = vand.u32 %v2066, 4294901760
        %2806 = vmatpush1.msra.mxu0 %v2805
        %v2807 = vand.u32 %v2063, 4294901760
        %2808 = vmatprep.subr.mxu0 %v2807
        %v2809 = vand.u32 %v2062, 4294901760
        %2810 = vmatpush1.msra.mxu0 %v2809
        %v2811 = vand.u32 %v2059, 4294901760
        %2812 = vmatprep.subr.mxu0 %v2811
        %v2813 = vand.u32 %v2058, 4294901760
        %2814 = vmatpush1.msra.mxu0 %v2813
        %v2815 = vand.u32 %v2055, 4294901760
        %2816 = vmatprep.subr.mxu0 %v2815
        %v2817 = vand.u32 %v2054, 4294901760
        %2818 = vmatpush1.msra.mxu0 %v2817
        %v2819 = vand.u32 %v2051, 4294901760
        %2820 = vmatprep.subr.mxu0 %v2819
        %v2821 = vand.u32 %v2050, 4294901760
        %2822 = vmatpush1.msra.mxu0 %v2821
        %v2823 = vand.u32 %v2047, 4294901760
        %2824 = vmatprep.subr.mxu0 %v2823
        %v2825 = vand.u32 %v2046, 4294901760
        %2826 = vmatpush1.msra.mxu0 %v2825
        %v2827 = vand.u32 %v2043, 4294901760
        %2828 = vmatprep.subr.mxu0 %v2827
        %v2829 = vand.u32 %v2042, 4294901760
        %2830 = vmatpush1.msra.mxu0 %v2829
        %v2831 = vand.u32 %v2039, 4294901760
        %2832 = vmatprep.subr.mxu0 %v2831
        %v2833 = vand.u32 %v2038, 4294901760
        %2834 = vmatpush1.msra.mxu0 %v2833
        %v2835 = vand.u32 %v2035, 4294901760
        %2836 = vmatprep.subr.mxu0 %v2835
        %v2837 = vand.u32 %v2034, 4294901760
        %2838 = vmatpush1.msra.mxu0 %v2837
        %v2839 = vand.u32 %v2031, 4294901760
        %2840 = vmatprep.subr.mxu0 %v2839
        %v2841 = vand.u32 %v2030, 4294901760
        %2842 = vmatpush1.msra.mxu0 %v2841
        %v2843 = vand.u32 %v2027, 4294901760
        %2844 = vmatprep.subr.mxu0 %v2843
        %v2845 = vand.u32 %v2026, 4294901760
        %2846 = vmatpush1.msra.mxu0 %v2845
        %v2847 = vand.u32 %v2023, 4294901760
        %2848 = vmatprep.subr.mxu0 %v2847
        %v2849 = vand.u32 %v2022, 4294901760
        %2850 = vmatpush1.msra.mxu0 %v2849
        %2851 = vmatprep.subr.mxu0 0.0
        %2852 = vmatpush2.msra.mxu0 0.0
        %2853 = vmatprep.subr.mxu0 0.0
        %2854 = vmatpush2.msra.mxu0 0.0
        %2855 = vmatprep.subr.mxu0 0.0
        %2856 = vmatpush2.msra.mxu0 0.0
        %2857 = vmatprep.subr.mxu0 0.0
        %2858 = vmatpush2.msra.mxu0 0.0
        %2859 = vmatprep.subr.mxu0 0.0
        %2860 = vmatpush2.msra.mxu0 0.0
        %2861 = vmatprep.subr.mxu0 0.0
        %2862 = vmatpush2.msra.mxu0 0.0
        %2863 = vmatprep.subr.mxu0 0.0
        %2864 = vmatpush2.msra.mxu0 0.0
        %2865 = vmatprep.subr.mxu0 0.0
        %2866 = vmatpush2.msra.mxu0 0.0
        %2867 = vmatprep.subr.mxu0 0.0
        %2868 = vmatpush2.msra.mxu0 0.0
        %2869 = vmatprep.subr.mxu0 0.0
        %2870 = vmatpush2.msra.mxu0 0.0
        %2871 = vmatprep.subr.mxu0 0.0
        %2872 = vmatpush2.msra.mxu0 0.0
        %2873 = vmatprep.subr.mxu0 0.0
        %2874 = vmatpush2.msra.mxu0 0.0
        %2875 = vmatprep.subr.mxu0 0.0
        %2876 = vmatpush2.msra.mxu0 0.0
        %2877 = vmatprep.subr.mxu0 0.0
        %2878 = vmatpush2.msra.mxu0 0.0
        %2879 = vmatprep.subr.mxu0 0.0
        %2880 = vmatpush2.msra.mxu0 0.0
        %2881 = vmatprep.subr.mxu0 0.0
        %2882 = vmatpush2.msra.mxu0 0.0
        %2883 = vmatprep.mubr.f32.mxu0 0.0
        %v2884 = vand.u32 %v2086, 4294901760
        %2885 = vmatmul.mubr.f32.gmra.mxu0 %v2884
        %v2886 = vpop.f32.mrf.mxu0
        %v2887 = vadd.f32 %v2787, %v2886
        %v2888 = vpop.f32.mrf.mxu0
        %v2889 = vadd.f32 %v2789, %v2888
        %2890 = vdwg.mxu0
        %2891 = vmatprep.subr.mxu0 0.0
        %2892 = vmatpush1.msra.mxu0 0.0
        %2893 = vmatprep.subr.mxu0 0.0
        %2894 = vmatpush1.msra.mxu0 0.0
        %v2895 = vand.u32 %v2077, 4294901760
        %2896 = vmatprep.subr.mxu0 %v2895
        %v2897 = vand.u32 %v2076, 4294901760
        %2898 = vmatpush1.msra.mxu0 %v2897
        %v2899 = vand.u32 %v2073, 4294901760
        %2900 = vmatprep.subr.mxu0 %v2899
        %v2901 = vand.u32 %v2072, 4294901760
        %2902 = vmatpush1.msra.mxu0 %v2901
        %v2903 = vand.u32 %v2069, 4294901760
        %2904 = vmatprep.subr.mxu0 %v2903
        %v2905 = vand.u32 %v2068, 4294901760
        %2906 = vmatpush1.msra.mxu0 %v2905
        %v2907 = vand.u32 %v2065, 4294901760
        %2908 = vmatprep.subr.mxu0 %v2907
        %v2909 = vand.u32 %v2064, 4294901760
        %2910 = vmatpush1.msra.mxu0 %v2909
        %v2911 = vand.u32 %v2061, 4294901760
        %2912 = vmatprep.subr.mxu0 %v2911
        %v2913 = vand.u32 %v2060, 4294901760
        %2914 = vmatpush1.msra.mxu0 %v2913
        %v2915 = vand.u32 %v2057, 4294901760
        %2916 = vmatprep.subr.mxu0 %v2915
        %v2917 = vand.u32 %v2056, 4294901760
        %2918 = vmatpush1.msra.mxu0 %v2917
        %v2919 = vand.u32 %v2053, 4294901760
        %2920 = vmatprep.subr.mxu0 %v2919
        %v2921 = vand.u32 %v2052, 4294901760
        %2922 = vmatpush1.msra.mxu0 %v2921
        %v2923 = vand.u32 %v2049, 4294901760
        %2924 = vmatprep.subr.mxu0 %v2923
        %v2925 = vand.u32 %v2048, 4294901760
        %2926 = vmatpush1.msra.mxu0 %v2925
        %v2927 = vand.u32 %v2045, 4294901760
        %2928 = vmatprep.subr.mxu0 %v2927
        %v2929 = vand.u32 %v2044, 4294901760
        %2930 = vmatpush1.msra.mxu0 %v2929
        %v2931 = vand.u32 %v2041, 4294901760
        %2932 = vmatprep.subr.mxu0 %v2931
        %v2933 = vand.u32 %v2040, 4294901760
        %2934 = vmatpush1.msra.mxu0 %v2933
        %v2935 = vand.u32 %v2037, 4294901760
        %2936 = vmatprep.subr.mxu0 %v2935
        %v2937 = vand.u32 %v2036, 4294901760
        %2938 = vmatpush1.msra.mxu0 %v2937
        %v2939 = vand.u32 %v2033, 4294901760
        %2940 = vmatprep.subr.mxu0 %v2939
        %v2941 = vand.u32 %v2032, 4294901760
        %2942 = vmatpush1.msra.mxu0 %v2941
        %v2943 = vand.u32 %v2029, 4294901760
        %2944 = vmatprep.subr.mxu0 %v2943
        %v2945 = vand.u32 %v2028, 4294901760
        %2946 = vmatpush1.msra.mxu0 %v2945
        %v2947 = vand.u32 %v2025, 4294901760
        %2948 = vmatprep.subr.mxu0 %v2947
        %v2949 = vand.u32 %v2024, 4294901760
        %2950 = vmatpush1.msra.mxu0 %v2949
        %2951 = vmatprep.subr.mxu0 0.0
        %2952 = vmatpush2.msra.mxu0 0.0
        %2953 = vmatprep.subr.mxu0 0.0
        %2954 = vmatpush2.msra.mxu0 0.0
        %2955 = vmatprep.subr.mxu0 0.0
        %2956 = vmatpush2.msra.mxu0 0.0
        %2957 = vmatprep.subr.mxu0 0.0
        %2958 = vmatpush2.msra.mxu0 0.0
        %2959 = vmatprep.subr.mxu0 0.0
        %2960 = vmatpush2.msra.mxu0 0.0
        %2961 = vmatprep.subr.mxu0 0.0
        %2962 = vmatpush2.msra.mxu0 0.0
        %2963 = vmatprep.subr.mxu0 0.0
        %2964 = vmatpush2.msra.mxu0 0.0
        %2965 = vmatprep.subr.mxu0 0.0
        %2966 = vmatpush2.msra.mxu0 0.0
        %2967 = vmatprep.subr.mxu0 0.0
        %2968 = vmatpush2.msra.mxu0 0.0
        %2969 = vmatprep.subr.mxu0 0.0
        %2970 = vmatpush2.msra.mxu0 0.0
        %2971 = vmatprep.subr.mxu0 0.0
        %2972 = vmatpush2.msra.mxu0 0.0
        %2973 = vmatprep.subr.mxu0 0.0
        %2974 = vmatpush2.msra.mxu0 0.0
        %2975 = vmatprep.subr.mxu0 0.0
        %2976 = vmatpush2.msra.mxu0 0.0
        %2977 = vmatprep.subr.mxu0 0.0
        %2978 = vmatpush2.msra.mxu0 0.0
        %2979 = vmatprep.subr.mxu0 0.0
        %2980 = vmatpush2.msra.mxu0 0.0
        %2981 = vmatprep.subr.mxu0 0.0
        %2982 = vmatpush2.msra.mxu0 0.0
        %2983 = vmatprep.mubr.f32.mxu0 0.0
        %v2984 = vand.u32 %v2086, 4294901760
        %v2985 = vsub.f32 %v2086, %v2984
        %v2986 = vand.u32 %v2985, 4294901760
        %v2987 = vsub.f32 %v2985, %v2986
        %v2988 = vand.u32 %v2987, 4294901760
        %2989 = vmatmul.mubr.f32.gmra.mxu0 %v2988
        %v2990 = vpop.f32.mrf.mxu0
        %v2991 = vadd.f32 %v2082, %v2990
        %v2992 = vpop.f32.mrf.mxu0
        %v2993 = vadd.f32 %v2082, %v2992
        %2994 = vdwg.mxu0
        %2995 = vmatprep.subr.mxu0 0.0
        %2996 = vmatpush1.msra.mxu0 0.0
        %2997 = vmatprep.subr.mxu0 0.0
        %2998 = vmatpush1.msra.mxu0 0.0
        %v2999 = vand.u32 %v2077, 4294901760
        %v3000 = vsub.f32 %v2077, %v2999
        %v3001 = vand.u32 %v3000, 4294901760
        %v3002 = vsub.f32 %v3000, %v3001
        %v3003 = vand.u32 %v3002, 4294901760
        %3004 = vmatprep.subr.mxu0 %v3003
        %v3005 = vand.u32 %v2076, 4294901760
        %v3006 = vsub.f32 %v2076, %v3005
        %v3007 = vand.u32 %v3006, 4294901760
        %v3008 = vsub.f32 %v3006, %v3007
        %v3009 = vand.u32 %v3008, 4294901760
        %3010 = vmatpush1.msra.mxu0 %v3009
        %v3011 = vand.u32 %v2073, 4294901760
        %v3012 = vsub.f32 %v2073, %v3011
        %v3013 = vand.u32 %v3012, 4294901760
        %v3014 = vsub.f32 %v3012, %v3013
        %v3015 = vand.u32 %v3014, 4294901760
        %3016 = vmatprep.subr.mxu0 %v3015
        %v3017 = vand.u32 %v2072, 4294901760
        %v3018 = vsub.f32 %v2072, %v3017
        %v3019 = vand.u32 %v3018, 4294901760
        %v3020 = vsub.f32 %v3018, %v3019
        %v3021 = vand.u32 %v3020, 4294901760
        %3022 = vmatpush1.msra.mxu0 %v3021
        %v3023 = vand.u32 %v2069, 4294901760
        %v3024 = vsub.f32 %v2069, %v3023
        %v3025 = vand.u32 %v3024, 4294901760
        %v3026 = vsub.f32 %v3024, %v3025
        %v3027 = vand.u32 %v3026, 4294901760
        %3028 = vmatprep.subr.mxu0 %v3027
        %v3029 = vand.u32 %v2068, 4294901760
        %v3030 = vsub.f32 %v2068, %v3029
        %v3031 = vand.u32 %v3030, 4294901760
        %v3032 = vsub.f32 %v3030, %v3031
        %v3033 = vand.u32 %v3032, 4294901760
        %3034 = vmatpush1.msra.mxu0 %v3033
        %v3035 = vand.u32 %v2065, 4294901760
        %v3036 = vsub.f32 %v2065, %v3035
        %v3037 = vand.u32 %v3036, 4294901760
        %v3038 = vsub.f32 %v3036, %v3037
        %v3039 = vand.u32 %v3038, 4294901760
        %3040 = vmatprep.subr.mxu0 %v3039
        %v3041 = vand.u32 %v2064, 4294901760
        %v3042 = vsub.f32 %v2064, %v3041
        %v3043 = vand.u32 %v3042, 4294901760
        %v3044 = vsub.f32 %v3042, %v3043
        %v3045 = vand.u32 %v3044, 4294901760
        %3046 = vmatpush1.msra.mxu0 %v3045
        %v3047 = vand.u32 %v2061, 4294901760
        %v3048 = vsub.f32 %v2061, %v3047
        %v3049 = vand.u32 %v3048, 4294901760
        %v3050 = vsub.f32 %v3048, %v3049
        %v3051 = vand.u32 %v3050, 4294901760
        %3052 = vmatprep.subr.mxu0 %v3051
        %v3053 = vand.u32 %v2060, 4294901760
        %v3054 = vsub.f32 %v2060, %v3053
        %v3055 = vand.u32 %v3054, 4294901760
        %v3056 = vsub.f32 %v3054, %v3055
        %v3057 = vand.u32 %v3056, 4294901760
        %3058 = vmatpush1.msra.mxu0 %v3057
        %v3059 = vand.u32 %v2057, 4294901760
        %v3060 = vsub.f32 %v2057, %v3059
        %v3061 = vand.u32 %v3060, 4294901760
        %v3062 = vsub.f32 %v3060, %v3061
        %v3063 = vand.u32 %v3062, 4294901760
        %3064 = vmatprep.subr.mxu0 %v3063
        %v3065 = vand.u32 %v2056, 4294901760
        %v3066 = vsub.f32 %v2056, %v3065
        %v3067 = vand.u32 %v3066, 4294901760
        %v3068 = vsub.f32 %v3066, %v3067
        %v3069 = vand.u32 %v3068, 4294901760
        %3070 = vmatpush1.msra.mxu0 %v3069
        %v3071 = vand.u32 %v2053, 4294901760
        %v3072 = vsub.f32 %v2053, %v3071
        %v3073 = vand.u32 %v3072, 4294901760
        %v3074 = vsub.f32 %v3072, %v3073
        %v3075 = vand.u32 %v3074, 4294901760
        %3076 = vmatprep.subr.mxu0 %v3075
        %v3077 = vand.u32 %v2052, 4294901760
        %v3078 = vsub.f32 %v2052, %v3077
        %v3079 = vand.u32 %v3078, 4294901760
        %v3080 = vsub.f32 %v3078, %v3079
        %v3081 = vand.u32 %v3080, 4294901760
        %3082 = vmatpush1.msra.mxu0 %v3081
        %v3083 = vand.u32 %v2049, 4294901760
        %v3084 = vsub.f32 %v2049, %v3083
        %v3085 = vand.u32 %v3084, 4294901760
        %v3086 = vsub.f32 %v3084, %v3085
        %v3087 = vand.u32 %v3086, 4294901760
        %3088 = vmatprep.subr.mxu0 %v3087
        %v3089 = vand.u32 %v2048, 4294901760
        %v3090 = vsub.f32 %v2048, %v3089
        %v3091 = vand.u32 %v3090, 4294901760
        %v3092 = vsub.f32 %v3090, %v3091
        %v3093 = vand.u32 %v3092, 4294901760
        %3094 = vmatpush1.msra.mxu0 %v3093
        %v3095 = vand.u32 %v2045, 4294901760
        %v3096 = vsub.f32 %v2045, %v3095
        %v3097 = vand.u32 %v3096, 4294901760
        %v3098 = vsub.f32 %v3096, %v3097
        %v3099 = vand.u32 %v3098, 4294901760
        %3100 = vmatprep.subr.mxu0 %v3099
        %v3101 = vand.u32 %v2044, 4294901760
        %v3102 = vsub.f32 %v2044, %v3101
        %v3103 = vand.u32 %v3102, 4294901760
        %v3104 = vsub.f32 %v3102, %v3103
        %v3105 = vand.u32 %v3104, 4294901760
        %3106 = vmatpush1.msra.mxu0 %v3105
        %v3107 = vand.u32 %v2041, 4294901760
        %v3108 = vsub.f32 %v2041, %v3107
        %v3109 = vand.u32 %v3108, 4294901760
        %v3110 = vsub.f32 %v3108, %v3109
        %v3111 = vand.u32 %v3110, 4294901760
        %3112 = vmatprep.subr.mxu0 %v3111
        %v3113 = vand.u32 %v2040, 4294901760
        %v3114 = vsub.f32 %v2040, %v3113
        %v3115 = vand.u32 %v3114, 4294901760
        %v3116 = vsub.f32 %v3114, %v3115
        %v3117 = vand.u32 %v3116, 4294901760
        %3118 = vmatpush1.msra.mxu0 %v3117
        %v3119 = vand.u32 %v2037, 4294901760
        %v3120 = vsub.f32 %v2037, %v3119
        %v3121 = vand.u32 %v3120, 4294901760
        %v3122 = vsub.f32 %v3120, %v3121
        %v3123 = vand.u32 %v3122, 4294901760
        %3124 = vmatprep.subr.mxu0 %v3123
        %v3125 = vand.u32 %v2036, 4294901760
        %v3126 = vsub.f32 %v2036, %v3125
        %v3127 = vand.u32 %v3126, 4294901760
        %v3128 = vsub.f32 %v3126, %v3127
        %v3129 = vand.u32 %v3128, 4294901760
        %3130 = vmatpush1.msra.mxu0 %v3129
        %v3131 = vand.u32 %v2033, 4294901760
        %v3132 = vsub.f32 %v2033, %v3131
        %v3133 = vand.u32 %v3132, 4294901760
        %v3134 = vsub.f32 %v3132, %v3133
        %v3135 = vand.u32 %v3134, 4294901760
        %3136 = vmatprep.subr.mxu0 %v3135
        %v3137 = vand.u32 %v2032, 4294901760
        %v3138 = vsub.f32 %v2032, %v3137
        %v3139 = vand.u32 %v3138, 4294901760
        %v3140 = vsub.f32 %v3138, %v3139
        %v3141 = vand.u32 %v3140, 4294901760
        %3142 = vmatpush1.msra.mxu0 %v3141
        %v3143 = vand.u32 %v2029, 4294901760
        %v3144 = vsub.f32 %v2029, %v3143
        %v3145 = vand.u32 %v3144, 4294901760
        %v3146 = vsub.f32 %v3144, %v3145
        %v3147 = vand.u32 %v3146, 4294901760
        %3148 = vmatprep.subr.mxu0 %v3147
        %v3149 = vand.u32 %v2028, 4294901760
        %v3150 = vsub.f32 %v2028, %v3149
        %v3151 = vand.u32 %v3150, 4294901760
        %v3152 = vsub.f32 %v3150, %v3151
        %v3153 = vand.u32 %v3152, 4294901760
        %3154 = vmatpush1.msra.mxu0 %v3153
        %v3155 = vand.u32 %v2025, 4294901760
        %v3156 = vsub.f32 %v2025, %v3155
        %v3157 = vand.u32 %v3156, 4294901760
        %v3158 = vsub.f32 %v3156, %v3157
        %v3159 = vand.u32 %v3158, 4294901760
        %3160 = vmatprep.subr.mxu0 %v3159
        %v3161 = vand.u32 %v2024, 4294901760
        %v3162 = vsub.f32 %v2024, %v3161
        %v3163 = vand.u32 %v3162, 4294901760
        %v3164 = vsub.f32 %v3162, %v3163
        %v3165 = vand.u32 %v3164, 4294901760
        %3166 = vmatpush1.msra.mxu0 %v3165
        %3167 = vmatprep.subr.mxu0 0.0
        %3168 = vmatpush2.msra.mxu0 0.0
        %3169 = vmatprep.subr.mxu0 0.0
        %3170 = vmatpush2.msra.mxu0 0.0
        %3171 = vmatprep.subr.mxu0 0.0
        %3172 = vmatpush2.msra.mxu0 0.0
        %3173 = vmatprep.subr.mxu0 0.0
        %3174 = vmatpush2.msra.mxu0 0.0
        %3175 = vmatprep.subr.mxu0 0.0
        %3176 = vmatpush2.msra.mxu0 0.0
        %3177 = vmatprep.subr.mxu0 0.0
        %3178 = vmatpush2.msra.mxu0 0.0
        %3179 = vmatprep.subr.mxu0 0.0
        %3180 = vmatpush2.msra.mxu0 0.0
        %3181 = vmatprep.subr.mxu0 0.0
        %3182 = vmatpush2.msra.mxu0 0.0
        %3183 = vmatprep.subr.mxu0 0.0
        %3184 = vmatpush2.msra.mxu0 0.0
        %3185 = vmatprep.subr.mxu0 0.0
        %3186 = vmatpush2.msra.mxu0 0.0
        %3187 = vmatprep.subr.mxu0 0.0
        %3188 = vmatpush2.msra.mxu0 0.0
        %3189 = vmatprep.subr.mxu0 0.0
        %3190 = vmatpush2.msra.mxu0 0.0
        %3191 = vmatprep.subr.mxu0 0.0
        %3192 = vmatpush2.msra.mxu0 0.0
        %3193 = vmatprep.subr.mxu0 0.0
        %3194 = vmatpush2.msra.mxu0 0.0
        %3195 = vmatprep.subr.mxu0 0.0
        %3196 = vmatpush2.msra.mxu0 0.0
        %3197 = vmatprep.subr.mxu0 0.0
        %3198 = vmatpush2.msra.mxu0 0.0
        %3199 = vmatprep.mubr.f32.mxu0 0.0
        %v3200 = vand.u32 %v2086, 4294901760
        %3201 = vmatmul.mubr.f32.gmra.mxu0 %v3200
        %v3202 = vpop.f32.mrf.mxu0
        %v3203 = vadd.f32 %v2991, %v3202
        %v3204 = vpop.f32.mrf.mxu0
        %v3205 = vadd.f32 %v2993, %v3204
        %3206 = vdwg.mxu0
        %3207 = vmatprep.subr.mxu0 0.0
        %3208 = vmatpush1.msra.mxu0 0.0
        %3209 = vmatprep.subr.mxu0 0.0
        %3210 = vmatpush1.msra.mxu0 0.0
        %v3211 = vand.u32 %v2077, 4294901760
        %v3212 = vsub.f32 %v2077, %v3211
        %3213 = vmatprep.subr.mxu0 %v3212
        %v3214 = vand.u32 %v2076, 4294901760
        %v3215 = vsub.f32 %v2076, %v3214
        %3216 = vmatpush1.msra.mxu0 %v3215
        %v3217 = vand.u32 %v2073, 4294901760
        %v3218 = vsub.f32 %v2073, %v3217
        %3219 = vmatprep.subr.mxu0 %v3218
        %v3220 = vand.u32 %v2072, 4294901760
        %v3221 = vsub.f32 %v2072, %v3220
        %3222 = vmatpush1.msra.mxu0 %v3221
        %v3223 = vand.u32 %v2069, 4294901760
        %v3224 = vsub.f32 %v2069, %v3223
        %3225 = vmatprep.subr.mxu0 %v3224
        %v3226 = vand.u32 %v2068, 4294901760
        %v3227 = vsub.f32 %v2068, %v3226
        %3228 = vmatpush1.msra.mxu0 %v3227
        %v3229 = vand.u32 %v2065, 4294901760
        %v3230 = vsub.f32 %v2065, %v3229
        %3231 = vmatprep.subr.mxu0 %v3230
        %v3232 = vand.u32 %v2064, 4294901760
        %v3233 = vsub.f32 %v2064, %v3232
        %3234 = vmatpush1.msra.mxu0 %v3233
        %v3235 = vand.u32 %v2061, 4294901760
        %v3236 = vsub.f32 %v2061, %v3235
        %3237 = vmatprep.subr.mxu0 %v3236
        %v3238 = vand.u32 %v2060, 4294901760
        %v3239 = vsub.f32 %v2060, %v3238
        %3240 = vmatpush1.msra.mxu0 %v3239
        %v3241 = vand.u32 %v2057, 4294901760
        %v3242 = vsub.f32 %v2057, %v3241
        %3243 = vmatprep.subr.mxu0 %v3242
        %v3244 = vand.u32 %v2056, 4294901760
        %v3245 = vsub.f32 %v2056, %v3244
        %3246 = vmatpush1.msra.mxu0 %v3245
        %v3247 = vand.u32 %v2053, 4294901760
        %v3248 = vsub.f32 %v2053, %v3247
        %3249 = vmatprep.subr.mxu0 %v3248
        %v3250 = vand.u32 %v2052, 4294901760
        %v3251 = vsub.f32 %v2052, %v3250
        %3252 = vmatpush1.msra.mxu0 %v3251
        %v3253 = vand.u32 %v2049, 4294901760
        %v3254 = vsub.f32 %v2049, %v3253
        %3255 = vmatprep.subr.mxu0 %v3254
        %v3256 = vand.u32 %v2048, 4294901760
        %v3257 = vsub.f32 %v2048, %v3256
        %3258 = vmatpush1.msra.mxu0 %v3257
        %v3259 = vand.u32 %v2045, 4294901760
        %v3260 = vsub.f32 %v2045, %v3259
        %3261 = vmatprep.subr.mxu0 %v3260
        %v3262 = vand.u32 %v2044, 4294901760
        %v3263 = vsub.f32 %v2044, %v3262
        %3264 = vmatpush1.msra.mxu0 %v3263
        %v3265 = vand.u32 %v2041, 4294901760
        %v3266 = vsub.f32 %v2041, %v3265
        %3267 = vmatprep.subr.mxu0 %v3266
        %v3268 = vand.u32 %v2040, 4294901760
        %v3269 = vsub.f32 %v2040, %v3268
        %3270 = vmatpush1.msra.mxu0 %v3269
        %v3271 = vand.u32 %v2037, 4294901760
        %v3272 = vsub.f32 %v2037, %v3271
        %3273 = vmatprep.subr.mxu0 %v3272
        %v3274 = vand.u32 %v2036, 4294901760
        %v3275 = vsub.f32 %v2036, %v3274
        %3276 = vmatpush1.msra.mxu0 %v3275
        %v3277 = vand.u32 %v2033, 4294901760
        %v3278 = vsub.f32 %v2033, %v3277
        %3279 = vmatprep.subr.mxu0 %v3278
        %v3280 = vand.u32 %v2032, 4294901760
        %v3281 = vsub.f32 %v2032, %v3280
        %3282 = vmatpush1.msra.mxu0 %v3281
        %v3283 = vand.u32 %v2029, 4294901760
        %v3284 = vsub.f32 %v2029, %v3283
        %3285 = vmatprep.subr.mxu0 %v3284
        %v3286 = vand.u32 %v2028, 4294901760
        %v3287 = vsub.f32 %v2028, %v3286
        %3288 = vmatpush1.msra.mxu0 %v3287
        %v3289 = vand.u32 %v2025, 4294901760
        %v3290 = vsub.f32 %v2025, %v3289
        %3291 = vmatprep.subr.mxu0 %v3290
        %v3292 = vand.u32 %v2024, 4294901760
        %v3293 = vsub.f32 %v2024, %v3292
        %3294 = vmatpush1.msra.mxu0 %v3293
        %3295 = vmatprep.subr.mxu0 0.0
        %3296 = vmatpush2.msra.mxu0 0.0
        %3297 = vmatprep.subr.mxu0 0.0
        %3298 = vmatpush2.msra.mxu0 0.0
        %3299 = vmatprep.subr.mxu0 0.0
        %3300 = vmatpush2.msra.mxu0 0.0
        %3301 = vmatprep.subr.mxu0 0.0
        %3302 = vmatpush2.msra.mxu0 0.0
        %3303 = vmatprep.subr.mxu0 0.0
        %3304 = vmatpush2.msra.mxu0 0.0
        %3305 = vmatprep.subr.mxu0 0.0
        %3306 = vmatpush2.msra.mxu0 0.0
        %3307 = vmatprep.subr.mxu0 0.0
        %3308 = vmatpush2.msra.mxu0 0.0
        %3309 = vmatprep.subr.mxu0 0.0
        %3310 = vmatpush2.msra.mxu0 0.0
        %3311 = vmatprep.subr.mxu0 0.0
        %3312 = vmatpush2.msra.mxu0 0.0
        %3313 = vmatprep.subr.mxu0 0.0
        %3314 = vmatpush2.msra.mxu0 0.0
        %3315 = vmatprep.subr.mxu0 0.0
        %3316 = vmatpush2.msra.mxu0 0.0
        %3317 = vmatprep.subr.mxu0 0.0
        %3318 = vmatpush2.msra.mxu0 0.0
        %3319 = vmatprep.subr.mxu0 0.0
        %3320 = vmatpush2.msra.mxu0 0.0
        %3321 = vmatprep.subr.mxu0 0.0
        %3322 = vmatpush2.msra.mxu0 0.0
        %3323 = vmatprep.subr.mxu0 0.0
        %3324 = vmatpush2.msra.mxu0 0.0
        %3325 = vmatprep.subr.mxu0 0.0
        %3326 = vmatpush2.msra.mxu0 0.0
        %3327 = vmatprep.mubr.f32.mxu0 0.0
        %v3328 = vand.u32 %v2086, 4294901760
        %v3329 = vsub.f32 %v2086, %v3328
        %3330 = vmatmul.mubr.f32.gmra.mxu0 %v3329
        %v3331 = vpop.f32.mrf.mxu0
        %v3332 = vadd.f32 %v3203, %v3331
        %v3333 = vpop.f32.mrf.mxu0
        %v3334 = vadd.f32 %v3205, %v3333
        %3335 = vdwg.mxu0
        %3336 = vmatprep.subr.mxu0 0.0
        %3337 = vmatpush1.msra.mxu0 0.0
        %3338 = vmatprep.subr.mxu0 0.0
        %3339 = vmatpush1.msra.mxu0 0.0
        %v3340 = vand.u32 %v2077, 4294901760
        %3341 = vmatprep.subr.mxu0 %v3340
        %v3342 = vand.u32 %v2076, 4294901760
        %3343 = vmatpush1.msra.mxu0 %v3342
        %v3344 = vand.u32 %v2073, 4294901760
        %3345 = vmatprep.subr.mxu0 %v3344
        %v3346 = vand.u32 %v2072, 4294901760
        %3347 = vmatpush1.msra.mxu0 %v3346
        %v3348 = vand.u32 %v2069, 4294901760
        %3349 = vmatprep.subr.mxu0 %v3348
        %v3350 = vand.u32 %v2068, 4294901760
        %3351 = vmatpush1.msra.mxu0 %v3350
        %v3352 = vand.u32 %v2065, 4294901760
        %3353 = vmatprep.subr.mxu0 %v3352
        %v3354 = vand.u32 %v2064, 4294901760
        %3355 = vmatpush1.msra.mxu0 %v3354
        %v3356 = vand.u32 %v2061, 4294901760
        %3357 = vmatprep.subr.mxu0 %v3356
        %v3358 = vand.u32 %v2060, 4294901760
        %3359 = vmatpush1.msra.mxu0 %v3358
        %v3360 = vand.u32 %v2057, 4294901760
        %3361 = vmatprep.subr.mxu0 %v3360
        %v3362 = vand.u32 %v2056, 4294901760
        %3363 = vmatpush1.msra.mxu0 %v3362
        %v3364 = vand.u32 %v2053, 4294901760
        %3365 = vmatprep.subr.mxu0 %v3364
        %v3366 = vand.u32 %v2052, 4294901760
        %3367 = vmatpush1.msra.mxu0 %v3366
        %v3368 = vand.u32 %v2049, 4294901760
        %3369 = vmatprep.subr.mxu0 %v3368
        %v3370 = vand.u32 %v2048, 4294901760
        %3371 = vmatpush1.msra.mxu0 %v3370
        %v3372 = vand.u32 %v2045, 4294901760
        %3373 = vmatprep.subr.mxu0 %v3372
        %v3374 = vand.u32 %v2044, 4294901760
        %3375 = vmatpush1.msra.mxu0 %v3374
        %v3376 = vand.u32 %v2041, 4294901760
        %3377 = vmatprep.subr.mxu0 %v3376
        %v3378 = vand.u32 %v2040, 4294901760
        %3379 = vmatpush1.msra.mxu0 %v3378
        %v3380 = vand.u32 %v2037, 4294901760
        %3381 = vmatprep.subr.mxu0 %v3380
        %v3382 = vand.u32 %v2036, 4294901760
        %3383 = vmatpush1.msra.mxu0 %v3382
        %v3384 = vand.u32 %v2033, 4294901760
        %3385 = vmatprep.subr.mxu0 %v3384
        %v3386 = vand.u32 %v2032, 4294901760
        %3387 = vmatpush1.msra.mxu0 %v3386
        %v3388 = vand.u32 %v2029, 4294901760
        %3389 = vmatprep.subr.mxu0 %v3388
        %v3390 = vand.u32 %v2028, 4294901760
        %3391 = vmatpush1.msra.mxu0 %v3390
        %v3392 = vand.u32 %v2025, 4294901760
        %3393 = vmatprep.subr.mxu0 %v3392
        %v3394 = vand.u32 %v2024, 4294901760
        %3395 = vmatpush1.msra.mxu0 %v3394
        %3396 = vmatprep.subr.mxu0 0.0
        %3397 = vmatpush2.msra.mxu0 0.0
        %3398 = vmatprep.subr.mxu0 0.0
        %3399 = vmatpush2.msra.mxu0 0.0
        %3400 = vmatprep.subr.mxu0 0.0
        %3401 = vmatpush2.msra.mxu0 0.0
        %3402 = vmatprep.subr.mxu0 0.0
        %3403 = vmatpush2.msra.mxu0 0.0
        %3404 = vmatprep.subr.mxu0 0.0
        %3405 = vmatpush2.msra.mxu0 0.0
        %3406 = vmatprep.subr.mxu0 0.0
        %3407 = vmatpush2.msra.mxu0 0.0
        %3408 = vmatprep.subr.mxu0 0.0
        %3409 = vmatpush2.msra.mxu0 0.0
        %3410 = vmatprep.subr.mxu0 0.0
        %3411 = vmatpush2.msra.mxu0 0.0
        %3412 = vmatprep.subr.mxu0 0.0
        %3413 = vmatpush2.msra.mxu0 0.0
        %3414 = vmatprep.subr.mxu0 0.0
        %3415 = vmatpush2.msra.mxu0 0.0
        %3416 = vmatprep.subr.mxu0 0.0
        %3417 = vmatpush2.msra.mxu0 0.0
        %3418 = vmatprep.subr.mxu0 0.0
        %3419 = vmatpush2.msra.mxu0 0.0
        %3420 = vmatprep.subr.mxu0 0.0
        %3421 = vmatpush2.msra.mxu0 0.0
        %3422 = vmatprep.subr.mxu0 0.0
        %3423 = vmatpush2.msra.mxu0 0.0
        %3424 = vmatprep.subr.mxu0 0.0
        %3425 = vmatpush2.msra.mxu0 0.0
        %3426 = vmatprep.subr.mxu0 0.0
        %3427 = vmatpush2.msra.mxu0 0.0
        %3428 = vmatprep.mubr.f32.mxu0 0.0
        %v3429 = vand.u32 %v2086, 4294901760
        %v3430 = vsub.f32 %v2086, %v3429
        %v3431 = vand.u32 %v3430, 4294901760
        %3432 = vmatmul.mubr.f32.gmra.mxu0 %v3431
        %v3433 = vpop.f32.mrf.mxu0
        %v3434 = vadd.f32 %v3332, %v3433
        %v3435 = vpop.f32.mrf.mxu0
        %v3436 = vadd.f32 %v3334, %v3435
        %3437 = vdwg.mxu0
        %3438 = vmatprep.subr.mxu0 0.0
        %3439 = vmatpush1.msra.mxu0 0.0
        %3440 = vmatprep.subr.mxu0 0.0
        %3441 = vmatpush1.msra.mxu0 0.0
        %v3442 = vand.u32 %v2077, 4294901760
        %v3443 = vsub.f32 %v2077, %v3442
        %v3444 = vand.u32 %v3443, 4294901760
        %3445 = vmatprep.subr.mxu0 %v3444
        %v3446 = vand.u32 %v2076, 4294901760
        %v3447 = vsub.f32 %v2076, %v3446
        %v3448 = vand.u32 %v3447, 4294901760
        %3449 = vmatpush1.msra.mxu0 %v3448
        %v3450 = vand.u32 %v2073, 4294901760
        %v3451 = vsub.f32 %v2073, %v3450
        %v3452 = vand.u32 %v3451, 4294901760
        %3453 = vmatprep.subr.mxu0 %v3452
        %v3454 = vand.u32 %v2072, 4294901760
        %v3455 = vsub.f32 %v2072, %v3454
        %v3456 = vand.u32 %v3455, 4294901760
        %3457 = vmatpush1.msra.mxu0 %v3456
        %v3458 = vand.u32 %v2069, 4294901760
        %v3459 = vsub.f32 %v2069, %v3458
        %v3460 = vand.u32 %v3459, 4294901760
        %3461 = vmatprep.subr.mxu0 %v3460
        %v3462 = vand.u32 %v2068, 4294901760
        %v3463 = vsub.f32 %v2068, %v3462
        %v3464 = vand.u32 %v3463, 4294901760
        %3465 = vmatpush1.msra.mxu0 %v3464
        %v3466 = vand.u32 %v2065, 4294901760
        %v3467 = vsub.f32 %v2065, %v3466
        %v3468 = vand.u32 %v3467, 4294901760
        %3469 = vmatprep.subr.mxu0 %v3468
        %v3470 = vand.u32 %v2064, 4294901760
        %v3471 = vsub.f32 %v2064, %v3470
        %v3472 = vand.u32 %v3471, 4294901760
        %3473 = vmatpush1.msra.mxu0 %v3472
        %v3474 = vand.u32 %v2061, 4294901760
        %v3475 = vsub.f32 %v2061, %v3474
        %v3476 = vand.u32 %v3475, 4294901760
        %3477 = vmatprep.subr.mxu0 %v3476
        %v3478 = vand.u32 %v2060, 4294901760
        %v3479 = vsub.f32 %v2060, %v3478
        %v3480 = vand.u32 %v3479, 4294901760
        %3481 = vmatpush1.msra.mxu0 %v3480
        %v3482 = vand.u32 %v2057, 4294901760
        %v3483 = vsub.f32 %v2057, %v3482
        %v3484 = vand.u32 %v3483, 4294901760
        %3485 = vmatprep.subr.mxu0 %v3484
        %v3486 = vand.u32 %v2056, 4294901760
        %v3487 = vsub.f32 %v2056, %v3486
        %v3488 = vand.u32 %v3487, 4294901760
        %3489 = vmatpush1.msra.mxu0 %v3488
        %v3490 = vand.u32 %v2053, 4294901760
        %v3491 = vsub.f32 %v2053, %v3490
        %v3492 = vand.u32 %v3491, 4294901760
        %3493 = vmatprep.subr.mxu0 %v3492
        %v3494 = vand.u32 %v2052, 4294901760
        %v3495 = vsub.f32 %v2052, %v3494
        %v3496 = vand.u32 %v3495, 4294901760
        %3497 = vmatpush1.msra.mxu0 %v3496
        %v3498 = vand.u32 %v2049, 4294901760
        %v3499 = vsub.f32 %v2049, %v3498
        %v3500 = vand.u32 %v3499, 4294901760
        %3501 = vmatprep.subr.mxu0 %v3500
        %v3502 = vand.u32 %v2048, 4294901760
        %v3503 = vsub.f32 %v2048, %v3502
        %v3504 = vand.u32 %v3503, 4294901760
        %3505 = vmatpush1.msra.mxu0 %v3504
        %v3506 = vand.u32 %v2045, 4294901760
        %v3507 = vsub.f32 %v2045, %v3506
        %v3508 = vand.u32 %v3507, 4294901760
        %3509 = vmatprep.subr.mxu0 %v3508
        %v3510 = vand.u32 %v2044, 4294901760
        %v3511 = vsub.f32 %v2044, %v3510
        %v3512 = vand.u32 %v3511, 4294901760
        %3513 = vmatpush1.msra.mxu0 %v3512
        %v3514 = vand.u32 %v2041, 4294901760
        %v3515 = vsub.f32 %v2041, %v3514
        %v3516 = vand.u32 %v3515, 4294901760
        %3517 = vmatprep.subr.mxu0 %v3516
        %v3518 = vand.u32 %v2040, 4294901760
        %v3519 = vsub.f32 %v2040, %v3518
        %v3520 = vand.u32 %v3519, 4294901760
        %3521 = vmatpush1.msra.mxu0 %v3520
        %v3522 = vand.u32 %v2037, 4294901760
        %v3523 = vsub.f32 %v2037, %v3522
        %v3524 = vand.u32 %v3523, 4294901760
        %3525 = vmatprep.subr.mxu0 %v3524
        %v3526 = vand.u32 %v2036, 4294901760
        %v3527 = vsub.f32 %v2036, %v3526
        %v3528 = vand.u32 %v3527, 4294901760
        %3529 = vmatpush1.msra.mxu0 %v3528
        %v3530 = vand.u32 %v2033, 4294901760
        %v3531 = vsub.f32 %v2033, %v3530
        %v3532 = vand.u32 %v3531, 4294901760
        %3533 = vmatprep.subr.mxu0 %v3532
        %v3534 = vand.u32 %v2032, 4294901760
        %v3535 = vsub.f32 %v2032, %v3534
        %v3536 = vand.u32 %v3535, 4294901760
        %3537 = vmatpush1.msra.mxu0 %v3536
        %v3538 = vand.u32 %v2029, 4294901760
        %v3539 = vsub.f32 %v2029, %v3538
        %v3540 = vand.u32 %v3539, 4294901760
        %3541 = vmatprep.subr.mxu0 %v3540
        %v3542 = vand.u32 %v2028, 4294901760
        %v3543 = vsub.f32 %v2028, %v3542
        %v3544 = vand.u32 %v3543, 4294901760
        %3545 = vmatpush1.msra.mxu0 %v3544
        %v3546 = vand.u32 %v2025, 4294901760
        %v3547 = vsub.f32 %v2025, %v3546
        %v3548 = vand.u32 %v3547, 4294901760
        %3549 = vmatprep.subr.mxu0 %v3548
        %v3550 = vand.u32 %v2024, 4294901760
        %v3551 = vsub.f32 %v2024, %v3550
        %v3552 = vand.u32 %v3551, 4294901760
        %3553 = vmatpush1.msra.mxu0 %v3552
        %3554 = vmatprep.subr.mxu0 0.0
        %3555 = vmatpush2.msra.mxu0 0.0
        %3556 = vmatprep.subr.mxu0 0.0
        %3557 = vmatpush2.msra.mxu0 0.0
        %3558 = vmatprep.subr.mxu0 0.0
        %3559 = vmatpush2.msra.mxu0 0.0
        %3560 = vmatprep.subr.mxu0 0.0
        %3561 = vmatpush2.msra.mxu0 0.0
        %3562 = vmatprep.subr.mxu0 0.0
        %3563 = vmatpush2.msra.mxu0 0.0
        %3564 = vmatprep.subr.mxu0 0.0
        %3565 = vmatpush2.msra.mxu0 0.0
        %3566 = vmatprep.subr.mxu0 0.0
        %3567 = vmatpush2.msra.mxu0 0.0
        %3568 = vmatprep.subr.mxu0 0.0
        %3569 = vmatpush2.msra.mxu0 0.0
        %3570 = vmatprep.subr.mxu0 0.0
        %3571 = vmatpush2.msra.mxu0 0.0
        %3572 = vmatprep.subr.mxu0 0.0
        %3573 = vmatpush2.msra.mxu0 0.0
        %3574 = vmatprep.subr.mxu0 0.0
        %3575 = vmatpush2.msra.mxu0 0.0
        %3576 = vmatprep.subr.mxu0 0.0
        %3577 = vmatpush2.msra.mxu0 0.0
        %3578 = vmatprep.subr.mxu0 0.0
        %3579 = vmatpush2.msra.mxu0 0.0
        %3580 = vmatprep.subr.mxu0 0.0
        %3581 = vmatpush2.msra.mxu0 0.0
        %3582 = vmatprep.subr.mxu0 0.0
        %3583 = vmatpush2.msra.mxu0 0.0
        %3584 = vmatprep.subr.mxu0 0.0
        %3585 = vmatpush2.msra.mxu0 0.0
        %3586 = vmatprep.mubr.f32.mxu0 0.0
        %v3587 = vand.u32 %v2086, 4294901760
        %3588 = vmatmul.mubr.f32.gmra.mxu0 %v3587
        %v3589 = vpop.f32.mrf.mxu0
        %v3590 = vadd.f32 %v3434, %v3589
        %v3591 = vpop.f32.mrf.mxu0
        %v3592 = vadd.f32 %v3436, %v3591
        %3593 = vdwg.mxu0
        %3594 = vmatprep.subr.mxu0 0.0
        %3595 = vmatpush1.msra.mxu0 0.0
        %3596 = vmatprep.subr.mxu0 0.0
        %3597 = vmatpush1.msra.mxu0 0.0
        %v3598 = vand.u32 %v2077, 4294901760
        %3599 = vmatprep.subr.mxu0 %v3598
        %v3600 = vand.u32 %v2076, 4294901760
        %3601 = vmatpush1.msra.mxu0 %v3600
        %v3602 = vand.u32 %v2073, 4294901760
        %3603 = vmatprep.subr.mxu0 %v3602
        %v3604 = vand.u32 %v2072, 4294901760
        %3605 = vmatpush1.msra.mxu0 %v3604
        %v3606 = vand.u32 %v2069, 4294901760
        %3607 = vmatprep.subr.mxu0 %v3606
        %v3608 = vand.u32 %v2068, 4294901760
        %3609 = vmatpush1.msra.mxu0 %v3608
        %v3610 = vand.u32 %v2065, 4294901760
        %3611 = vmatprep.subr.mxu0 %v3610
        %v3612 = vand.u32 %v2064, 4294901760
        %3613 = vmatpush1.msra.mxu0 %v3612
        %v3614 = vand.u32 %v2061, 4294901760
        %3615 = vmatprep.subr.mxu0 %v3614
        %v3616 = vand.u32 %v2060, 4294901760
        %3617 = vmatpush1.msra.mxu0 %v3616
        %v3618 = vand.u32 %v2057, 4294901760
        %3619 = vmatprep.subr.mxu0 %v3618
        %v3620 = vand.u32 %v2056, 4294901760
        %3621 = vmatpush1.msra.mxu0 %v3620
        %v3622 = vand.u32 %v2053, 4294901760
        %3623 = vmatprep.subr.mxu0 %v3622
        %v3624 = vand.u32 %v2052, 4294901760
        %3625 = vmatpush1.msra.mxu0 %v3624
        %v3626 = vand.u32 %v2049, 4294901760
        %3627 = vmatprep.subr.mxu0 %v3626
        %v3628 = vand.u32 %v2048, 4294901760
        %3629 = vmatpush1.msra.mxu0 %v3628
        %v3630 = vand.u32 %v2045, 4294901760
        %3631 = vmatprep.subr.mxu0 %v3630
        %v3632 = vand.u32 %v2044, 4294901760
        %3633 = vmatpush1.msra.mxu0 %v3632
        %v3634 = vand.u32 %v2041, 4294901760
        %3635 = vmatprep.subr.mxu0 %v3634
        %v3636 = vand.u32 %v2040, 4294901760
        %3637 = vmatpush1.msra.mxu0 %v3636
        %v3638 = vand.u32 %v2037, 4294901760
        %3639 = vmatprep.subr.mxu0 %v3638
        %v3640 = vand.u32 %v2036, 4294901760
        %3641 = vmatpush1.msra.mxu0 %v3640
        %v3642 = vand.u32 %v2033, 4294901760
        %3643 = vmatprep.subr.mxu0 %v3642
        %v3644 = vand.u32 %v2032, 4294901760
        %3645 = vmatpush1.msra.mxu0 %v3644
        %v3646 = vand.u32 %v2029, 4294901760
        %3647 = vmatprep.subr.mxu0 %v3646
        %v3648 = vand.u32 %v2028, 4294901760
        %3649 = vmatpush1.msra.mxu0 %v3648
        %v3650 = vand.u32 %v2025, 4294901760
        %3651 = vmatprep.subr.mxu0 %v3650
        %v3652 = vand.u32 %v2024, 4294901760
        %3653 = vmatpush1.msra.mxu0 %v3652
        %3654 = vmatprep.subr.mxu0 0.0
        %3655 = vmatpush2.msra.mxu0 0.0
        %3656 = vmatprep.subr.mxu0 0.0
        %3657 = vmatpush2.msra.mxu0 0.0
        %3658 = vmatprep.subr.mxu0 0.0
        %3659 = vmatpush2.msra.mxu0 0.0
        %3660 = vmatprep.subr.mxu0 0.0
        %3661 = vmatpush2.msra.mxu0 0.0
        %3662 = vmatprep.subr.mxu0 0.0
        %3663 = vmatpush2.msra.mxu0 0.0
        %3664 = vmatprep.subr.mxu0 0.0
        %3665 = vmatpush2.msra.mxu0 0.0
        %3666 = vmatprep.subr.mxu0 0.0
        %3667 = vmatpush2.msra.mxu0 0.0
        %3668 = vmatprep.subr.mxu0 0.0
        %3669 = vmatpush2.msra.mxu0 0.0
        %3670 = vmatprep.subr.mxu0 0.0
        %3671 = vmatpush2.msra.mxu0 0.0
        %3672 = vmatprep.subr.mxu0 0.0
        %3673 = vmatpush2.msra.mxu0 0.0
        %3674 = vmatprep.subr.mxu0 0.0
        %3675 = vmatpush2.msra.mxu0 0.0
        %3676 = vmatprep.subr.mxu0 0.0
        %3677 = vmatpush2.msra.mxu0 0.0
        %3678 = vmatprep.subr.mxu0 0.0
        %3679 = vmatpush2.msra.mxu0 0.0
        %3680 = vmatprep.subr.mxu0 0.0
        %3681 = vmatpush2.msra.mxu0 0.0
        %3682 = vmatprep.subr.mxu0 0.0
        %3683 = vmatpush2.msra.mxu0 0.0
        %3684 = vmatprep.subr.mxu0 0.0
        %3685 = vmatpush2.msra.mxu0 0.0
        %3686 = vmatprep.mubr.f32.mxu0 0.0
        %v3687 = vand.u32 %v2086, 4294901760
        %3688 = vmatmul.mubr.f32.gmra.mxu0 %v3687
        %v3689 = vpop.f32.mrf.mxu0
        %v3690 = vadd.f32 %v3590, %v3689
        %v3691 = vpop.f32.mrf.mxu0
        %v3692 = vadd.f32 %v3592, %v3691
        %3693 = vdwg.mxu0
        %3694 = vst [vmem:[%s228] sm:$0xff] %v2887
        %3695 = vst [vmem:[%s228 + $0x8] sm:$0xff] %v2889
        %3696 = vst [vmem:[%s228 + $0x10] sm:$0xff] %v3690
        %3697 = vst [vmem:[%s228 + $0x18] sm:$0xff] %v3692
        %s3698 = sand.u32 %s119, 1
        %s3699 = scalar_lea.sflag [#allocation6], %s3698
        %s3700 = sand.u32 %s119, 1
        %s3701 = smul.addr %s3700, 32
        %s3702 = scalar_lea.vmem [#allocation9], %s3701
        // Predicated region
        $region45: #{tpu_custom_call.1} parent=35 // pred_check
          %p3703 = pneg %p129
        $region46: #{tpu_custom_call.1} parent=35 // pred_check_branch
          %3705 = sbr.rel (%p3703) target = $region48
        $region47: #{tpu_custom_call.1} parent=35 // pred_region
          %s3707 = ssub.s32 512, 512
          %3708 = vsyncadd %s3699, %s3707
          %s3709 = smul.addr %s22, 4
          %s3710 = smul.addr %s3709, 128
          %s3711 = scalar_lea.hbm %s4, %s3710
          %s3713 = sshll.u32 %s3702, 4
          %s3714 = int_to_ptr.vmem [resolvable:$true] %s3713
          %3716 = dma.vmem_to_hbm [thread:$0]  %s3714, 512, %s3711, %s3699
        $region48: #{tpu_custom_call.1} parent=35 // pred_fallthru
          _
      $region36: #{tpu_custom_call.1} parent=5 // pred_fallthru
        _
      %p3717 = scmp.le.s32.totalorder 2, %s17
      // Predicated region
      $region49: #{tpu_custom_call.1} parent=5 // pred_check
        %p3718 = pneg %p3717
      $region50: #{tpu_custom_call.1} parent=5 // pred_check_branch
        %3720 = sbr.rel (%p3718) target = $region52
      $region51: #{tpu_custom_call.1} parent=5 // pred_region
        %s3721 = ssub.s32 %s17, 2
        // Predicated region
        $region53: #{tpu_custom_call.1} parent=51 // pred_check
          %p3722 = pneg %p135
        $region54: #{tpu_custom_call.1} parent=51 // pred_check_branch
          %3724 = sbr.rel (%p3722) target = $region56
        $region55: #{tpu_custom_call.1} parent=51 // pred_region
          %s3725 = sand.u32 %s120, 1
          %s3726 = scalar_lea.sflag [#allocation6], %s3725
          %s3727 = sand.u32 %s120, 1
          %s3728 = smul.addr %s3727, 32
          %s3729 = scalar_lea.vmem [#allocation9], %s3728
          %3730 = dma.done %s3726, 512
        $region56: #{tpu_custom_call.1} parent=51 // pred_fallthru
          _
      $region52: #{tpu_custom_call.1} parent=5 // pred_fallthru
        _
    $region6: #{tpu_custom_call.1} parent=1 // loop_footer
      %s21 = sadd.s32 1, %s17
    $region7: #{tpu_custom_call.1} parent=1 // loop_footer_branch
      %16 = sbr.rel target = $region3
    $region8: #{tpu_custom_call.1} parent=1 // loop_exit
      _
    %3731 = vsyncpa [#allocation5], 1
    %s3732 = scalar_lea.sflag [#allocation5], 1
    %3733 = vsyncpa %s3732, 1
    %3734 = vsyncpa [#allocation8], 1
    %3735 = vsyncpa [#allocation6], 1
    %s3736 = scalar_lea.sflag [#allocation6], 1
    %3737 = vsyncpa %s3736, 1

</llo_original>
